<compile_context>
chip_gen: v7x
topology: tpu7x:2x2x1
jax: 0.10.0
libtpu: 0.0.40
codegen_flags: <defaults>
</compile_context>

<pallas_src>
import functools

import jax
import jax.numpy as jnp
import numpy as np
from jax import lax
from jax.experimental import pallas as pl
from jax.experimental.pallas import tpu as pltpu

EPS = 1e-5


@functools.lru_cache(maxsize=None)
def _vmem_limit_bytes():
    """Per-generation scoped-VMEM budget with headroom for compiler scratch,
    semaphores and double-buffering (~48 MiB on v7x, ~96 MiB on v5e/v6e)."""
    cap = 64 * 1024 * 1024  # conservative fallback == v7x per-TC physical VMEM
    try:
        cap = int(getattr(pltpu.get_tpu_info(), "vmem_capacity_bytes", cap))
    except Exception:
        pass
    return int(max(32 * 1024 * 1024, min(cap * 3 // 4, 100 * 1024 * 1024)))


# ----------------------------- Pallas kernels ------------------------------


def _conv1_kernel(x_ref, w_ref, scale_ref, bias_ref, o_ref):
    """1x1x1 conv + folded BN + ReLU for Td depth planes.  The output plane is
    H/W-halo padded; only the halo ring is zeroed (no full-plane double write)."""
    Td, H, W, Cin = x_ref.shape
    _, Hp, Wp, C = o_ref.shape
    x = x_ref[...].reshape(Td * H * W, Cin)
    y = jnp.dot(x, w_ref[...], preferred_element_type=jnp.float32)
    y = jnp.maximum(y * scale_ref[...] + bias_ref[...], 0.0)

    zrow = jnp.zeros((Td, 1, Wp, C), o_ref.dtype)
    zcol = jnp.zeros((Td, H, 1, C), o_ref.dtype)
    o_ref[:, 0:1, :, :] = zrow
    o_ref[:, Hp - 1:Hp, :, :] = zrow
    o_ref[:, 1:H + 1, 0:1, :] = zcol
    o_ref[:, 1:H + 1, Wp - 1:Wp, :] = zcol
    o_ref[:, 1:H + 1, 1:W + 1, :] = y.reshape(Td, H, W, C).astype(o_ref.dtype)


def _conv2_kernel(p0_ref, p1_ref, p2_ref, w_ref, scale_ref, bias_ref, o_ref):
    """3x3x3 conv (padding=1, stride=1) + folded BN + ReLU for one output depth
    plane.  The three depth taps are folded into the contraction: planes at
    d-1, d, d+1 are concatenated along channels and matmul'd against the
    host-side-folded (3C, Cout) weight per (kh, kw) tap -> 9 matmuls with K=3C
    instead of 27 with K=C.  Depth-border taps are zeroed via a scalar mask."""
    H, W, Cout = o_ref.shape
    Hp, Wp, C = p1_ref.shape
    d = pl.program_id(1)
    m0 = (d > 0).astype(p0_ref.dtype)                       # zero d-1 tap at d == 0
    m2 = (d < pl.num_programs(1) - 1).astype(p2_ref.dtype)  # zero d+1 tap at d == D-1
    P = jnp.concatenate([p0_ref[...] * m0, p1_ref[...], p2_ref[...] * m2],
                        axis=-1)                             # (Hp, Wp, 3C)

    acc = jnp.zeros((H * W, Cout), jnp.float32)
    for kh in range(3):
        for kw in range(3):
            patch = P[kh:kh + H, kw:kw + W, :].reshape(H * W, 3 * C)
            acc = acc + jnp.dot(patch, w_ref[kh, kw],
                                preferred_element_type=jnp.float32)
    y = jnp.maximum(acc * scale_ref[...] + bias_ref[...], 0.0)
    o_ref[...] = y.reshape(H, W, Cout).astype(o_ref.dtype)


def _conv3_bn_add_relu_kernel(x_ref, w_ref, scale_ref, bias_ref, res_ref, o_ref):
    """1x1x1 conv + folded BN + residual add + final ReLU on a (tile_m, C) slab."""
    y = jnp.dot(x_ref[...], w_ref[...], preferred_element_type=jnp.float32)
    y = y * scale_ref[...] + bias_ref[...] + res_ref[...]
    o_ref[...] = jnp.maximum(y, 0.0).astype(o_ref.dtype)


# ------------------------------ tiling helpers ------------------------------


def _pick_conv1_depth_tile(D, H, W, max_rows=2048):
    """Largest divisor of D keeping the per-step GEMM M = td*H*W near max_rows
    (amortizes per-grid-step overhead without blowing up VMEM)."""
    cap = max(1, max_rows // max(H * W, 1))
    best = 1
    for t in range(1, D + 1):
        if D % t == 0 and t <= cap:
            best = t
    return best


def _pick_tile_m(M, cin, cout, vmem_budget):
    """conv3 row tile: multiple of 128 (MXU / bf16 packing friendly), sized from
    the VMEM budget, and keeping >= 2 grid steps so both v7x cores get work."""
    # Per-row double-buffered footprint: bf16 activation + f32 residual + f32 out.
    per_row = 2 * (2 * cin + 4 * cout + 4 * cout)
    budget = max(vmem_budget * 6 // 10, 128 * per_row)
    tile = 128
    for cand in (1024, 512, 256, 128):
        if cand * per_row <= budget:
            tile = cand
            break

    def _pad(m, t):
        return ((m + t - 1) // t) * t

    Mp = _pad(M, tile)
    while tile > 128 and Mp // tile < 2:
        tile //= 2
        Mp = _pad(M, tile)
    return tile, Mp


# ------------------------------ pallas_call wrappers ------------------------


def conv1_bn_relu_padded(x_bf16, w1, scale, bias):
    """conv1 + BN + ReLU -> (N, D, H+2, W+2, C) bf16 with a zeroed H/W halo."""
    N, D, H, W, Cin = x_bf16.shape
    C = w1.shape[1]
    Hp, Wp = H + 2, W + 2
    td = _pick_conv1_depth_tile(D, H, W)
    return pl.pallas_call(
        _conv1_kernel,
        out_shape=jax.ShapeDtypeStruct((N, D, Hp, Wp, C), jnp.bfloat16),
        grid=(N, D // td),
        in_specs=[
            pl.BlockSpec((None, td, H, W, Cin), lambda n, db: (n, db, 0, 0, 0)),
            pl.BlockSpec((Cin, C), lambda n, db: (0, 0)),
            pl.BlockSpec((1, C), lambda n, db: (0, 0)),
            pl.BlockSpec((1, C), lambda n, db: (0, 0)),
        ],
        out_specs=pl.BlockSpec((None, td, Hp, Wp, C),
                               lambda n, db: (n, db, 0, 0, 0)),
        compiler_params=pltpu.CompilerParams(
            dimension_semantics=("parallel", "parallel"),
            vmem_limit_bytes=_vmem_limit_bytes()),
    )(x_bf16, w1, scale.reshape(1, C), bias.reshape(1, C))


def conv3x3x3_bn_relu(h1, w2_folded, scale, bias):
    """3x3x3 conv + BN + ReLU on the H/W-halo-padded bf16 activation, tiled per
    (batch, output depth plane).  The kd shift is done by the DMA (the
    activation is fetched with depth index maps clamp(d-1), d, clamp(d+1));
    depth borders are masked in-kernel, so no depth padding is ever stored."""
    N, D, Hp, Wp, C = h1.shape
    H, W = Hp - 2, Wp - 2
    Cout = w2_folded.shape[-1]
    plane = (None, None, Hp, Wp, C)
    # TODO(synk): fetch a single overlapping (Td+2)-deep window per step
    # (pl.Element on the depth dim or a manual make_async_copy double buffer)
    # to cut the ~3x HBM read of h1 down to ~(Td+2)/Td.
    return pl.pallas_call(
        _conv2_kernel,
        out_shape=jax.ShapeDtypeStruct((N, D, H, W, Cout), jnp.bfloat16),
        grid=(N, D),
        in_specs=[
            pl.BlockSpec(plane, lambda n, d: (n, jnp.maximum(d - 1, 0), 0, 0, 0)),
            pl.BlockSpec(plane, lambda n, d: (n, d, 0, 0, 0)),
            pl.BlockSpec(plane, lambda n, d: (n, jnp.minimum(d + 1, D - 1), 0, 0, 0)),
            pl.BlockSpec((3, 3, 3 * C, Cout), lambda n, d: (0, 0, 0, 0)),
            pl.BlockSpec((1, Cout), lambda n, d: (0, 0)),
            pl.BlockSpec((1, Cout), lambda n, d: (0, 0)),
        ],
        out_specs=pl.BlockSpec((None, None, H, W, Cout),
                               lambda n, d: (n, d, 0, 0, 0)),
        compiler_params=pltpu.CompilerParams(
            dimension_semantics=("parallel", "parallel"),
            vmem_limit_bytes=_vmem_limit_bytes()),
    )(h1, h1, h1, w2_folded, scale.reshape(1, Cout), bias.reshape(1, Cout))


def pointwise_conv_bn_add_relu(x2d, w, scale, bias, res2d):
    """conv3 (1x1x1) + BN + residual add + ReLU as a tiled GEMM over rows."""
    M, Cin = x2d.shape
    Cout = w.shape[1]
    tile_m, Mp = _pick_tile_m(M, Cin, Cout, _vmem_limit_bytes())
    if Mp != M:
        x2d = jnp.pad(x2d, ((0, Mp - M), (0, 0)))
        res2d = jnp.pad(res2d, ((0, Mp - M), (0, 0)))
    out = pl.pallas_call(
        _conv3_bn_add_relu_kernel,
        out_shape=jax.ShapeDtypeStruct((Mp, Cout), jnp.float32),
        grid=(Mp // tile_m,),
        in_specs=[
            pl.BlockSpec((tile_m, Cin), lambda i: (i, 0)),
            pl.BlockSpec((Cin, Cout), lambda i: (0, 0)),
            pl.BlockSpec((1, Cout), lambda i: (0, 0)),
            pl.BlockSpec((1, Cout), lambda i: (0, 0)),
            pl.BlockSpec((tile_m, Cout), lambda i: (i, 0)),
        ],
        out_specs=pl.BlockSpec((tile_m, Cout), lambda i: (i, 0)),
        compiler_params=pltpu.CompilerParams(
            dimension_semantics=("parallel",),
            vmem_limit_bytes=_vmem_limit_bytes()),
    )(x2d, w, scale.reshape(1, Cout), bias.reshape(1, Cout), res2d)
    return out[:M] if Mp != M else out


# ------------------------------ module forward ------------------------------


def bottleneck_3d_forward(x_ncdhw, params):
    """Pallas implementation of Bottleneck_3d.forward (stride=1, no downsample)."""
    (w1, s1, b1, w2, s2, b2, w3, s3, b3) = params
    # TODO(synk): keep the surrounding model channels-last end-to-end to remove
    # these boundary transposes (each is a full activation HBM round trip).
    x = jnp.transpose(x_ncdhw, (0, 2, 3, 4, 1))   # NCDHW -> NDHWC (f32 residual)
    N, D, H, W, Cin = x.shape
    planes = w1.shape[1]
    Cout = w3.shape[1]

    x_bf = x.astype(jnp.bfloat16)                 # halves conv1's input DMA
    w1b = w1.astype(jnp.bfloat16)
    # Fold the depth taps of w2 into the contraction: (kd,kh,kw,Ci,Co) ->
    # (kh,kw,3*Ci,Co), rows kd-major to match the in-kernel channel concat.
    w2f = jnp.transpose(w2, (1, 2, 0, 3, 4)).reshape(3, 3, 3 * planes, planes)
    w2f = w2f.astype(jnp.bfloat16)
    w3b = w3.astype(jnp.bfloat16)

    # conv1: 1x1x1 conv + BN + ReLU -> bf16, H/W-halo padded, interior planes only.
    h1 = conv1_bn_relu_padded(x_bf, w1b, s1, b1)

    # conv2: 3x3x3 conv (padding=1, stride=1) + BN + ReLU, per depth plane.
    h2 = conv3x3x3_bn_relu(h1, w2f, s2, b2)

    # conv3: 1x1x1 conv + BN, residual add + final ReLU (fused GEMM).
    M = N * D * H * W
    out2d = pointwise_conv_bn_add_relu(
        h2.reshape(M, planes), w3b, s3, b3, x.reshape(M, Cin))
    out = out2d.reshape(N, D, H, W, Cout)
    return jnp.transpose(out, (0, 4, 1, 2, 3))    # NDHWC -> NCDHW


def reference_forward(x_ncdhw, params):
    """Pure-JAX reference with the same folded-BN / bf16-operand semantics."""
    (w1, s1, b1, w2, s2, b2, w3, s3, b3) = params
    f32 = jnp.float32
    x = jnp.transpose(x_ncdhw, (0, 2, 3, 4, 1))
    w1b, w2b, w3b = (w.astype(jnp.bfloat16) for w in (w1, w2, w3))
    h1 = jnp.maximum(
        jnp.einsum("ndhwc,co->ndhwo", x.astype(jnp.bfloat16), w1b,
                   preferred_element_type=f32) * s1 + b1, 0.0)
    h1 = h1.astype(jnp.bfloat16)
    h2 = lax.conv_general_dilated(
        h1, w2b, window_strides=(1, 1, 1), padding="SAME",
        dimension_numbers=("NDHWC", "DHWIO", "NDHWC"),
        preferred_element_type=f32)
    h2 = jnp.maximum(h2 * s2 + b2, 0.0).astype(jnp.bfloat16)
    h3 = jnp.einsum("ndhwc,co->ndhwo", h2, w3b,
                    preferred_element_type=f32) * s3 + b3
    out = jnp.maximum(h3 + x, 0.0)
    return jnp.transpose(out, (0, 4, 1, 2, 3))


def make_params(key, inplanes, planes):
    expansion = 4
    # midplanes only parameterises alternative conv_builders (e.g. Conv2Plus1D);
    # Conv3DSimple ignores it.  Kept for documentation.
    _midplanes = inplanes * planes * 27 // (inplanes * 9 + 3 * planes)

    ks = jax.random.split(key, 12)

    def bn_fold(kg, kb, km, kv, c):
        gamma = 1.0 + 0.1 * jax.random.normal(kg, (c,), jnp.float32)
        beta = 0.1 * jax.random.normal(kb, (c,), jnp.float32)
        mean = 0.1 * jax.random.normal(km, (c,), jnp.float32)
        var = 0.9 + 0.2 * jax.random.uniform(kv, (c,), jnp.float32)
        scale = gamma / jnp.sqrt(var + EPS)
        bias = beta - mean * scale
        return scale, bias

    w1 = 0.1 * jax.random.normal(ks[0], (inplanes, planes), jnp.float32)
    w2 = 0.1 * jax.random.normal(ks[1], (3, 3, 3, planes, planes), jnp.float32)
    w3 = 0.1 * jax.random.normal(ks[2], (planes, planes * expansion), jnp.float32)
    s1, b1 = bn_fold(ks[3], ks[4], ks[5], ks[6], planes)
    s2, b2 = bn_fold(ks[7], ks[8], ks[9], ks[10], planes)
    s3, b3 = bn_fold(ks[11], ks[3], ks[7], ks[0], planes * expansion)
    return (w1, s1, b1, w2, s2, b2, w3, s3, b3)


if __name__ == "__main__":
    key = jax.random.PRNGKey(0)
    kx, kp = jax.random.split(key)

    # Small shapes: batch=2, inplanes=16, planes=4 (expansion 4 -> out=16),
    # depth=4, spatial=8x8.  inplanes == planes*4, so downsample=None is valid.
    N, inplanes, planes, D, H, W = 2, 16, 4, 4, 8, 8
    x = jax.random.normal(kx, (N, inplanes, D, H, W), jnp.float32)  # NCDHW
    params = make_params(kp, inplanes, planes)

    out = jax.jit(bottleneck_3d_forward)(x, params)
    out = jax.block_until_ready(out)

    ref = jax.block_until_ready(reference_forward(x, params))
    np.testing.assert_allclose(np.asarray(out), np.asarray(ref),
                               rtol=5e-3, atol=5e-3)
    assert out.shape == (N, planes * 4, D, H, W)

    print("KERNEL_OK")
</pallas_src>

<mosaic_0001>
module attributes {stable_mosaic.version = 11 : i64} {
  func.func @_conv1_kernel(%arg0: i32, %arg1: i32, %arg2: memref<1x4x8x8x16xbf16, #tpu.memory_space<vmem>>, %arg3: memref<16x4xbf16, #tpu.memory_space<vmem>>, %arg4: memref<1x4xf32, #tpu.memory_space<vmem>>, %arg5: memref<1x4xf32, #tpu.memory_space<vmem>>, %arg6: memref<1x4x10x10x4xbf16, #tpu.memory_space<vmem>>) attributes {dimension_semantics = [#tpu.dimension_semantics<parallel>, #tpu.dimension_semantics<parallel>], iteration_bounds = array<i64: 2, 1>, scalar_prefetch = 0 : i64, scratch_operands = 0 : i64, tpu.core_type = #tpu.core_type<tc>, window_params = [{transform_indices = @transform_0, window_bounds = array<i64: 1, 4, 8, 8, 16>}, {pipeline_mode = #tpu.pipeline_mode<synchronous>, transform_indices = @transform_1, window_bounds = array<i64: 16, 4>}, {pipeline_mode = #tpu.pipeline_mode<synchronous>, transform_indices = @transform_2, window_bounds = array<i64: 1, 4>}, {pipeline_mode = #tpu.pipeline_mode<synchronous>, transform_indices = @transform_3, window_bounds = array<i64: 1, 4>}, {transform_indices = @transform_4, window_bounds = array<i64: 1, 4, 10, 10, 4>}]} {
    %c0 = arith.constant 0 : index
    %c0_0 = arith.constant 0 : index
    %c0_1 = arith.constant 0 : index
    %c0_2 = arith.constant 0 : index
    %c0_3 = arith.constant 0 : index
    %0 = vector.load %arg2[%c0, %c0_0, %c0_1, %c0_2, %c0_3] : memref<1x4x8x8x16xbf16, #tpu.memory_space<vmem>>, vector<1x4x8x8x16xbf16>
    %1 = vector.shape_cast %0 : vector<1x4x8x8x16xbf16> to vector<4x8x8x16xbf16>
    %2 = vector.shape_cast %1 : vector<4x8x8x16xbf16> to vector<256x16xbf16>
    %c0_4 = arith.constant 0 : index
    %c0_5 = arith.constant 0 : index
    %3 = vector.load %arg3[%c0_4, %c0_5] : memref<16x4xbf16, #tpu.memory_space<vmem>>, vector<16x4xbf16>
    %cst = arith.constant dense<0.000000e+00> : vector<256x4xf32>
    %4 = tpu.matmul %2, %3, %cst {dimension_numbers = #tpu.dot_dimension_numbers<[1], [0], [0], [1], [0, 0, 1, 1], [], []>} : vector<256x16xbf16>, vector<16x4xbf16>, vector<256x4xf32> -> vector<256x4xf32>
    %c0_6 = arith.constant 0 : index
    %c0_7 = arith.constant 0 : index
    %5 = vector.load %arg4[%c0_6, %c0_7] : memref<1x4xf32, #tpu.memory_space<vmem>>, vector<1x4xf32>
    %6 = vector.broadcast %5 : vector<1x4xf32> to vector<256x4xf32>
    %7 = arith.mulf %4, %6 : vector<256x4xf32>
    %c0_8 = arith.constant 0 : index
    %c0_9 = arith.constant 0 : index
    %8 = vector.load %arg5[%c0_8, %c0_9] : memref<1x4xf32, #tpu.memory_space<vmem>>, vector<1x4xf32>
    %9 = vector.broadcast %8 : vector<1x4xf32> to vector<256x4xf32>
    %10 = arith.addf %7, %9 : vector<256x4xf32>
    %cst_10 = arith.constant 0.000000e+00 : f32
    %11 = vector.broadcast %cst_10 : f32 to vector<256x4xf32>
    %12 = arith.maximumf %10, %11 : vector<256x4xf32>
    %cst_11 = arith.constant 0.000000e+00 : bf16
    %13 = vector.broadcast %cst_11 : bf16 to vector<4x1x10x4xbf16>
    %cst_12 = arith.constant 0.000000e+00 : bf16
    %14 = vector.broadcast %cst_12 : bf16 to vector<4x8x1x4xbf16>
    %c0_13 = arith.constant 0 : index
    %c0_14 = arith.constant 0 : index
    %c0_15 = arith.constant 0 : index
    %c0_16 = arith.constant 0 : index
    %c0_17 = arith.constant 0 : index
    %15 = vector.load %arg6[%c0_13, %c0_14, %c0_15, %c0_16, %c0_17] : memref<1x4x10x10x4xbf16, #tpu.memory_space<vmem>>, vector<1x4x1x10x4xbf16>
    %16 = vector.shape_cast %15 : vector<1x4x1x10x4xbf16> to vector<4x1x10x4xbf16>
    %17 = vector.shape_cast %13 : vector<4x1x10x4xbf16> to vector<1x4x1x10x4xbf16>
    tpu.vector_store %arg6[%c0_13, %c0_14, %c0_15, %c0_16, %c0_17], %17 {strides = array<i32>} : memref<1x4x10x10x4xbf16, #tpu.memory_space<vmem>>, vector<1x4x1x10x4xbf16>,
    %c0_18 = arith.constant 0 : index
    %c0_19 = arith.constant 0 : index
    %c9 = arith.constant 9 : index
    %c0_20 = arith.constant 0 : index
    %c0_21 = arith.constant 0 : index
    %18 = vector.load %arg6[%c0_18, %c0_19, %c9, %c0_20, %c0_21] : memref<1x4x10x10x4xbf16, #tpu.memory_space<vmem>>, vector<1x4x1x10x4xbf16>
    %19 = vector.shape_cast %18 : vector<1x4x1x10x4xbf16> to vector<4x1x10x4xbf16>
    %20 = vector.shape_cast %13 : vector<4x1x10x4xbf16> to vector<1x4x1x10x4xbf16>
    tpu.vector_store %arg6[%c0_18, %c0_19, %c9, %c0_20, %c0_21], %20 {strides = array<i32>} : memref<1x4x10x10x4xbf16, #tpu.memory_space<vmem>>, vector<1x4x1x10x4xbf16>,
    %c0_22 = arith.constant 0 : index
    %c0_23 = arith.constant 0 : index
    %c1 = arith.constant 1 : index
    %c0_24 = arith.constant 0 : index
    %c0_25 = arith.constant 0 : index
    %21 = vector.load %arg6[%c0_22, %c0_23, %c1, %c0_24, %c0_25] : memref<1x4x10x10x4xbf16, #tpu.memory_space<vmem>>, vector<1x4x8x1x4xbf16>
    %22 = vector.shape_cast %21 : vector<1x4x8x1x4xbf16> to vector<4x8x1x4xbf16>
    %23 = vector.shape_cast %14 : vector<4x8x1x4xbf16> to vector<1x4x8x1x4xbf16>
    tpu.vector_store %arg6[%c0_22, %c0_23, %c1, %c0_24, %c0_25], %23 {strides = array<i32>} : memref<1x4x10x10x4xbf16, #tpu.memory_space<vmem>>, vector<1x4x8x1x4xbf16>,
    %c0_26 = arith.constant 0 : index
    %c0_27 = arith.constant 0 : index
    %c1_28 = arith.constant 1 : index
    %c9_29 = arith.constant 9 : index
    %c0_30 = arith.constant 0 : index
    %24 = vector.load %arg6[%c0_26, %c0_27, %c1_28, %c9_29, %c0_30] : memref<1x4x10x10x4xbf16, #tpu.memory_space<vmem>>, vector<1x4x8x1x4xbf16>
    %25 = vector.shape_cast %24 : vector<1x4x8x1x4xbf16> to vector<4x8x1x4xbf16>
    %26 = vector.shape_cast %14 : vector<4x8x1x4xbf16> to vector<1x4x8x1x4xbf16>
    tpu.vector_store %arg6[%c0_26, %c0_27, %c1_28, %c9_29, %c0_30], %26 {strides = array<i32>} : memref<1x4x10x10x4xbf16, #tpu.memory_space<vmem>>, vector<1x4x8x1x4xbf16>,
    %27 = vector.shape_cast %12 : vector<256x4xf32> to vector<4x8x8x4xf32>
    %28 = arith.truncf %27 : vector<4x8x8x4xf32> to vector<4x8x8x4xbf16>
    %c0_31 = arith.constant 0 : index
    %c0_32 = arith.constant 0 : index
    %c1_33 = arith.constant 1 : index
    %c1_34 = arith.constant 1 : index
    %c0_35 = arith.constant 0 : index
    %29 = vector.load %arg6[%c0_31, %c0_32, %c1_33, %c1_34, %c0_35] : memref<1x4x10x10x4xbf16, #tpu.memory_space<vmem>>, vector<1x4x8x8x4xbf16>
    %30 = vector.shape_cast %29 : vector<1x4x8x8x4xbf16> to vector<4x8x8x4xbf16>
    %31 = vector.shape_cast %28 : vector<4x8x8x4xbf16> to vector<1x4x8x8x4xbf16>
    tpu.vector_store %arg6[%c0_31, %c0_32, %c1_33, %c1_34, %c0_35], %31 {strides = array<i32>} : memref<1x4x10x10x4xbf16, #tpu.memory_space<vmem>>, vector<1x4x8x8x4xbf16>,
    return
  }
  func.func @transform_0(%arg0: i32, %arg1: i32) -> (i32, i32, i32, i32, i32) {
    %c0_i32 = arith.constant 0 : i32
    %c0_i32_0 = arith.constant 0 : i32
    %c0_i32_1 = arith.constant 0 : i32
    %c0_i32_2 = arith.constant 0 : i32
    return %arg0, %arg1, %c0_i32, %c0_i32_0, %c0_i32_1 : i32, i32, i32, i32, i32
  }
  func.func @transform_1(%arg0: i32, %arg1: i32) -> (i32, i32) {
    %c0_i32 = arith.constant 0 : i32
    %c0_i32_0 = arith.constant 0 : i32
    %c0_i32_1 = arith.constant 0 : i32
    return %c0_i32, %c0_i32_0 : i32, i32
  }
  func.func @transform_2(%arg0: i32, %arg1: i32) -> (i32, i32) {
    %c0_i32 = arith.constant 0 : i32
    %c0_i32_0 = arith.constant 0 : i32
    %c0_i32_1 = arith.constant 0 : i32
    return %c0_i32, %c0_i32_0 : i32, i32
  }
  func.func @transform_3(%arg0: i32, %arg1: i32) -> (i32, i32) {
    %c0_i32 = arith.constant 0 : i32
    %c0_i32_0 = arith.constant 0 : i32
    %c0_i32_1 = arith.constant 0 : i32
    return %c0_i32, %c0_i32_0 : i32, i32
  }
  func.func @transform_4(%arg0: i32, %arg1: i32) -> (i32, i32, i32, i32, i32) {
    %c0_i32 = arith.constant 0 : i32
    %c0_i32_0 = arith.constant 0 : i32
    %c0_i32_1 = arith.constant 0 : i32
    %c0_i32_2 = arith.constant 0 : i32
    return %arg0, %arg1, %c0_i32, %c0_i32_0, %c0_i32_1 : i32, i32, i32, i32, i32
  }
}

module attributes {stable_mosaic.version = 11 : i64} {
  func.func @_conv3_bn_add_relu_kernel(%arg0: i32, %arg1: memref<256x4xbf16, #tpu.memory_space<vmem>>, %arg2: memref<4x16xbf16, #tpu.memory_space<vmem>>, %arg3: memref<1x16xf32, #tpu.memory_space<vmem>>, %arg4: memref<1x16xf32, #tpu.memory_space<vmem>>, %arg5: memref<256x16xf32, #tpu.memory_space<vmem>>, %arg6: memref<256x16xf32, #tpu.memory_space<vmem>>) attributes {dimension_semantics = [#tpu.dimension_semantics<parallel>], iteration_bounds = array<i64: 2>, scalar_prefetch = 0 : i64, scratch_operands = 0 : i64, tpu.core_type = #tpu.core_type<tc>, window_params = [{transform_indices = @transform_0, window_bounds = array<i64: 256, 4>}, {pipeline_mode = #tpu.pipeline_mode<synchronous>, transform_indices = @transform_1, window_bounds = array<i64: 4, 16>}, {pipeline_mode = #tpu.pipeline_mode<synchronous>, transform_indices = @transform_2, window_bounds = array<i64: 1, 16>}, {pipeline_mode = #tpu.pipeline_mode<synchronous>, transform_indices = @transform_3, window_bounds = array<i64: 1, 16>}, {transform_indices = @transform_4, window_bounds = array<i64: 256, 16>}, {transform_indices = @transform_5, window_bounds = array<i64: 256, 16>}]} {
    %c0 = arith.constant 0 : index
    %c0_0 = arith.constant 0 : index
    %0 = vector.load %arg1[%c0, %c0_0] : memref<256x4xbf16, #tpu.memory_space<vmem>>, vector<256x4xbf16>
    %c0_1 = arith.constant 0 : index
    %c0_2 = arith.constant 0 : index
    %1 = vector.load %arg2[%c0_1, %c0_2] : memref<4x16xbf16, #tpu.memory_space<vmem>>, vector<4x16xbf16>
    %cst = arith.constant dense<0.000000e+00> : vector<256x16xf32>
    %2 = tpu.matmul %0, %1, %cst {dimension_numbers = #tpu.dot_dimension_numbers<[1], [0], [0], [1], [0, 0, 1, 1], [], []>} : vector<256x4xbf16>, vector<4x16xbf16>, vector<256x16xf32> -> vector<256x16xf32>
    %c0_3 = arith.constant 0 : index
    %c0_4 = arith.constant 0 : index
    %3 = vector.load %arg3[%c0_3, %c0_4] : memref<1x16xf32, #tpu.memory_space<vmem>>, vector<1x16xf32>
    %4 = vector.broadcast %3 : vector<1x16xf32> to vector<256x16xf32>
    %5 = arith.mulf %2, %4 : vector<256x16xf32>
    %c0_5 = arith.constant 0 : index
    %c0_6 = arith.constant 0 : index
    %6 = vector.load %arg4[%c0_5, %c0_6] : memref<1x16xf32, #tpu.memory_space<vmem>>, vector<1x16xf32>
    %7 = vector.broadcast %6 : vector<1x16xf32> to vector<256x16xf32>
    %8 = arith.addf %5, %7 : vector<256x16xf32>
    %c0_7 = arith.constant 0 : index
    %c0_8 = arith.constant 0 : index
    %9 = vector.load %arg5[%c0_7, %c0_8] : memref<256x16xf32, #tpu.memory_space<vmem>>, vector<256x16xf32>
    %10 = arith.addf %8, %9 : vector<256x16xf32>
    %cst_9 = arith.constant 0.000000e+00 : f32
    %11 = vector.broadcast %cst_9 : f32 to vector<256x16xf32>
    %12 = arith.maximumf %10, %11 : vector<256x16xf32>
    %c0_10 = arith.constant 0 : index
    %c0_11 = arith.constant 0 : index
    %13 = vector.load %arg6[%c0_10, %c0_11] : memref<256x16xf32, #tpu.memory_space<vmem>>, vector<256x16xf32>
    tpu.vector_store %arg6[%c0_10, %c0_11], %12 {strides = array<i32>} : memref<256x16xf32, #tpu.memory_space<vmem>>, vector<256x16xf32>,
    return
  }
  func.func @transform_0(%arg0: i32) -> (i32, i32) {
    %c0_i32 = arith.constant 0 : i32
    %c0_i32_0 = arith.constant 0 : i32
    return %arg0, %c0_i32 : i32, i32
  }
  func.func @transform_1(%arg0: i32) -> (i32, i32) {
    %c0_i32 = arith.constant 0 : i32
    %c0_i32_0 = arith.constant 0 : i32
    %c0_i32_1 = arith.constant 0 : i32
    return %c0_i32, %c0_i32_0 : i32, i32
  }
  func.func @transform_2(%arg0: i32) -> (i32, i32) {
    %c0_i32 = arith.constant 0 : i32
    %c0_i32_0 = arith.constant 0 : i32
    %c0_i32_1 = arith.constant 0 : i32
    return %c0_i32, %c0_i32_0 : i32, i32
  }
  func.func @transform_3(%arg0: i32) -> (i32, i32) {
    %c0_i32 = arith.constant 0 : i32
    %c0_i32_0 = arith.constant 0 : i32
    %c0_i32_1 = arith.constant 0 : i32
    return %c0_i32, %c0_i32_0 : i32, i32
  }
  func.func @transform_4(%arg0: i32) -> (i32, i32) {
    %c0_i32 = arith.constant 0 : i32
    %c0_i32_0 = arith.constant 0 : i32
    return %arg0, %c0_i32 : i32, i32
  }
  func.func @transform_5(%arg0: i32) -> (i32, i32) {
    %c0_i32 = arith.constant 0 : i32
    %c0_i32_0 = arith.constant 0 : i32
    return %arg0, %c0_i32 : i32, i32
  }
}

module attributes {stable_mosaic.version = 11 : i64} {
  func.func @_conv2_kernel(%arg0: i32, %arg1: i32, %arg2: memref<1x1x10x10x4xbf16, #tpu.memory_space<vmem>>, %arg3: memref<1x1x10x10x4xbf16, #tpu.memory_space<vmem>>, %arg4: memref<1x1x10x10x4xbf16, #tpu.memory_space<vmem>>, %arg5: memref<3x3x12x4xbf16, #tpu.memory_space<vmem>>, %arg6: memref<1x4xf32, #tpu.memory_space<vmem>>, %arg7: memref<1x4xf32, #tpu.memory_space<vmem>>, %arg8: memref<1x1x8x8x4xbf16, #tpu.memory_space<vmem>>) attributes {dimension_semantics = [#tpu.dimension_semantics<parallel>, #tpu.dimension_semantics<parallel>], iteration_bounds = array<i64: 2, 4>, scalar_prefetch = 0 : i64, scratch_operands = 0 : i64, tpu.core_type = #tpu.core_type<tc>, window_params = [{transform_indices = @transform_0, window_bounds = array<i64: 1, 1, 10, 10, 4>}, {transform_indices = @transform_1, window_bounds = array<i64: 1, 1, 10, 10, 4>}, {transform_indices = @transform_2, window_bounds = array<i64: 1, 1, 10, 10, 4>}, {pipeline_mode = #tpu.pipeline_mode<synchronous>, transform_indices = @transform_3, window_bounds = array<i64: 3, 3, 12, 4>}, {pipeline_mode = #tpu.pipeline_mode<synchronous>, transform_indices = @transform_4, window_bounds = array<i64: 1, 4>}, {pipeline_mode = #tpu.pipeline_mode<synchronous>, transform_indices = @transform_5, window_bounds = array<i64: 1, 4>}, {transform_indices = @transform_6, window_bounds = array<i64: 1, 1, 8, 8, 4>}]} {
    %c0_i32 = arith.constant 0 : i32
    %0 = arith.cmpi sgt, %arg1, %c0_i32 : i32
    %1 = arith.extui %0 : i1 to i32
    %2 = arith.sitofp %1 : i32 to f32
    %3 = arith.truncf %2 : f32 to bf16
    %c3_i32 = arith.constant 3 : i32
    %4 = arith.cmpi slt, %arg1, %c3_i32 : i32
    %5 = arith.extui %4 : i1 to i32
    %6 = arith.sitofp %5 : i32 to f32
    %7 = arith.truncf %6 : f32 to bf16
    %c0 = arith.constant 0 : index
    %c0_0 = arith.constant 0 : index
    %c0_1 = arith.constant 0 : index
    %c0_2 = arith.constant 0 : index
    %c0_3 = arith.constant 0 : index
    %8 = vector.load %arg2[%c0, %c0_0, %c0_1, %c0_2, %c0_3] : memref<1x1x10x10x4xbf16, #tpu.memory_space<vmem>>, vector<1x1x10x10x4xbf16>
    %9 = vector.shape_cast %8 : vector<1x1x10x10x4xbf16> to vector<10x10x4xbf16>
    %10 = vector.broadcast %3 : bf16 to vector<10x10x4xbf16>
    %11 = arith.mulf %9, %10 : vector<10x10x4xbf16>
    %c0_4 = arith.constant 0 : index
    %c0_5 = arith.constant 0 : index
    %c0_6 = arith.constant 0 : index
    %c0_7 = arith.constant 0 : index
    %c0_8 = arith.constant 0 : index
    %12 = vector.load %arg3[%c0_4, %c0_5, %c0_6, %c0_7, %c0_8] : memref<1x1x10x10x4xbf16, #tpu.memory_space<vmem>>, vector<1x1x10x10x4xbf16>
    %13 = vector.shape_cast %12 : vector<1x1x10x10x4xbf16> to vector<10x10x4xbf16>
    %c0_9 = arith.constant 0 : index
    %c0_10 = arith.constant 0 : index
    %c0_11 = arith.constant 0 : index
    %c0_12 = arith.constant 0 : index
    %c0_13 = arith.constant 0 : index
    %14 = vector.load %arg4[%c0_9, %c0_10, %c0_11, %c0_12, %c0_13] : memref<1x1x10x10x4xbf16, #tpu.memory_space<vmem>>, vector<1x1x10x10x4xbf16>
    %15 = vector.shape_cast %14 : vector<1x1x10x10x4xbf16> to vector<10x10x4xbf16>
    %16 = vector.broadcast %7 : bf16 to vector<10x10x4xbf16>
    %17 = arith.mulf %15, %16 : vector<10x10x4xbf16>
    %18 = tpu.concatenate %11, %13, %17 in 2 : vector<10x10x4xbf16>, vector<10x10x4xbf16>, vector<10x10x4xbf16> -> vector<10x10x12xbf16>
    %cst = arith.constant 0.000000e+00 : f32
    %19 = vector.broadcast %cst : f32 to vector<64x4xf32>
    %20 = vector.extract_strided_slice %18 {offsets = [0, 0, 0], sizes = [8, 8, 12], strides = [1, 1, 1]} : vector<10x10x12xbf16> to vector<8x8x12xbf16>
    %21 = vector.shape_cast %20 : vector<8x8x12xbf16> to vector<64x12xbf16>
    %c0_14 = arith.constant 0 : index
    %c0_15 = arith.constant 0 : index
    %c0_16 = arith.constant 0 : index
    %c0_17 = arith.constant 0 : index
    %22 = vector.load %arg5[%c0_14, %c0_15, %c0_16, %c0_17] : memref<3x3x12x4xbf16, #tpu.memory_space<vmem>>, vector<1x1x12x4xbf16>
    %23 = vector.shape_cast %22 : vector<1x1x12x4xbf16> to vector<12x4xbf16>
    %cst_18 = arith.constant dense<0.000000e+00> : vector<64x4xf32>
    %24 = tpu.matmul %21, %23, %cst_18 {dimension_numbers = #tpu.dot_dimension_numbers<[1], [0], [0], [1], [0, 0, 1, 1], [], []>} : vector<64x12xbf16>, vector<12x4xbf16>, vector<64x4xf32> -> vector<64x4xf32>
    %25 = arith.addf %19, %24 : vector<64x4xf32>
    %26 = vector.extract_strided_slice %18 {offsets = [0, 1, 0], sizes = [8, 8, 12], strides = [1, 1, 1]} : vector<10x10x12xbf16> to vector<8x8x12xbf16>
    %27 = vector.shape_cast %26 : vector<8x8x12xbf16> to vector<64x12xbf16>
    %c0_19 = arith.constant 0 : index
    %c1 = arith.constant 1 : index
    %c0_20 = arith.constant 0 : index
    %c0_21 = arith.constant 0 : index
    %28 = vector.load %arg5[%c0_19, %c1, %c0_20, %c0_21] : memref<3x3x12x4xbf16, #tpu.memory_space<vmem>>, vector<1x1x12x4xbf16>
    %29 = vector.shape_cast %28 : vector<1x1x12x4xbf16> to vector<12x4xbf16>
    %cst_22 = arith.constant dense<0.000000e+00> : vector<64x4xf32>
    %30 = tpu.matmul %27, %29, %cst_22 {dimension_numbers = #tpu.dot_dimension_numbers<[1], [0], [0], [1], [0, 0, 1, 1], [], []>} : vector<64x12xbf16>, vector<12x4xbf16>, vector<64x4xf32> -> vector<64x4xf32>
    %31 = arith.addf %25, %30 : vector<64x4xf32>
    %32 = vector.extract_strided_slice %18 {offsets = [0, 2, 0], sizes = [8, 8, 12], strides = [1, 1, 1]} : vector<10x10x12xbf16> to vector<8x8x12xbf16>
    %33 = vector.shape_cast %32 : vector<8x8x12xbf16> to vector<64x12xbf16>
    %c0_23 = arith.constant 0 : index
    %c2 = arith.constant 2 : index
    %c0_24 = arith.constant 0 : index
    %c0_25 = arith.constant 0 : index
    %34 = vector.load %arg5[%c0_23, %c2, %c0_24, %c0_25] : memref<3x3x12x4xbf16, #tpu.memory_space<vmem>>, vector<1x1x12x4xbf16>
    %35 = vector.shape_cast %34 : vector<1x1x12x4xbf16> to vector<12x4xbf16>
    %cst_26 = arith.constant dense<0.000000e+00> : vector<64x4xf32>
    %36 = tpu.matmul %33, %35, %cst_26 {dimension_numbers = #tpu.dot_dimension_numbers<[1], [0], [0], [1], [0, 0, 1, 1], [], []>} : vector<64x12xbf16>, vector<12x4xbf16>, vector<64x4xf32> -> vector<64x4xf32>
    %37 = arith.addf %31, %36 : vector<64x4xf32>
    %38 = vector.extract_strided_slice %18 {offsets = [1, 0, 0], sizes = [8, 8, 12], strides = [1, 1, 1]} : vector<10x10x12xbf16> to vector<8x8x12xbf16>
    %39 = vector.shape_cast %38 : vector<8x8x12xbf16> to vector<64x12xbf16>
    %c1_27 = arith.constant 1 : index
    %c0_28 = arith.constant 0 : index
    %c0_29 = arith.constant 0 : index
    %c0_30 = arith.constant 0 : index
    %40 = vector.load %arg5[%c1_27, %c0_28, %c0_29, %c0_30] : memref<3x3x12x4xbf16, #tpu.memory_space<vmem>>, vector<1x1x12x4xbf16>
    %41 = vector.shape_cast %40 : vector<1x1x12x4xbf16> to vector<12x4xbf16>
    %cst_31 = arith.constant dense<0.000000e+00> : vector<64x4xf32>
    %42 = tpu.matmul %39, %41, %cst_31 {dimension_numbers = #tpu.dot_dimension_numbers<[1], [0], [0], [1], [0, 0, 1, 1], [], []>} : vector<64x12xbf16>, vector<12x4xbf16>, vector<64x4xf32> -> vector<64x4xf32>
    %43 = arith.addf %37, %42 : vector<64x4xf32>
    %44 = vector.extract_strided_slice %18 {offsets = [1, 1, 0], sizes = [8, 8, 12], strides = [1, 1, 1]} : vector<10x10x12xbf16> to vector<8x8x12xbf16>
    %45 = vector.shape_cast %44 : vector<8x8x12xbf16> to vector<64x12xbf16>
    %c1_32 = arith.constant 1 : index
    %c1_33 = arith.constant 1 : index
    %c0_34 = arith.constant 0 : index
    %c0_35 = arith.constant 0 : index
    %46 = vector.load %arg5[%c1_32, %c1_33, %c0_34, %c0_35] : memref<3x3x12x4xbf16, #tpu.memory_space<vmem>>, vector<1x1x12x4xbf16>
    %47 = vector.shape_cast %46 : vector<1x1x12x4xbf16> to vector<12x4xbf16>
    %cst_36 = arith.constant dense<0.000000e+00> : vector<64x4xf32>
    %48 = tpu.matmul %45, %47, %cst_36 {dimension_numbers = #tpu.dot_dimension_numbers<[1], [0], [0], [1], [0, 0, 1, 1], [], []>} : vector<64x12xbf16>, vector<12x4xbf16>, vector<64x4xf32> -> vector<64x4xf32>
    %49 = arith.addf %43, %48 : vector<64x4xf32>
    %50 = vector.extract_strided_slice %18 {offsets = [1, 2, 0], sizes = [8, 8, 12], strides = [1, 1, 1]} : vector<10x10x12xbf16> to vector<8x8x12xbf16>
    %51 = vector.shape_cast %50 : vector<8x8x12xbf16> to vector<64x12xbf16>
    %c1_37 = arith.constant 1 : index
    %c2_38 = arith.constant 2 : index
    %c0_39 = arith.constant 0 : index
    %c0_40 = arith.constant 0 : index
    %52 = vector.load %arg5[%c1_37, %c2_38, %c0_39, %c0_40] : memref<3x3x12x4xbf16, #tpu.memory_space<vmem>>, vector<1x1x12x4xbf16>
    %53 = vector.shape_cast %52 : vector<1x1x12x4xbf16> to vector<12x4xbf16>
    %cst_41 = arith.constant dense<0.000000e+00> : vector<64x4xf32>
    %54 = tpu.matmul %51, %53, %cst_41 {dimension_numbers = #tpu.dot_dimension_numbers<[1], [0], [0], [1], [0, 0, 1, 1], [], []>} : vector<64x12xbf16>, vector<12x4xbf16>, vector<64x4xf32> -> vector<64x4xf32>
    %55 = arith.addf %49, %54 : vector<64x4xf32>
    %56 = vector.extract_strided_slice %18 {offsets = [2, 0, 0], sizes = [8, 8, 12], strides = [1, 1, 1]} : vector<10x10x12xbf16> to vector<8x8x12xbf16>
    %57 = vector.shape_cast %56 : vector<8x8x12xbf16> to vector<64x12xbf16>
    %c2_42 = arith.constant 2 : index
    %c0_43 = arith.constant 0 : index
    %c0_44 = arith.constant 0 : index
    %c0_45 = arith.constant 0 : index
    %58 = vector.load %arg5[%c2_42, %c0_43, %c0_44, %c0_45] : memref<3x3x12x4xbf16, #tpu.memory_space<vmem>>, vector<1x1x12x4xbf16>
    %59 = vector.shape_cast %58 : vector<1x1x12x4xbf16> to vector<12x4xbf16>
    %cst_46 = arith.constant dense<0.000000e+00> : vector<64x4xf32>
    %60 = tpu.matmul %57, %59, %cst_46 {dimension_numbers = #tpu.dot_dimension_numbers<[1], [0], [0], [1], [0, 0, 1, 1], [], []>} : vector<64x12xbf16>, vector<12x4xbf16>, vector<64x4xf32> -> vector<64x4xf32>
    %61 = arith.addf %55, %60 : vector<64x4xf32>
    %62 = vector.extract_strided_slice %18 {offsets = [2, 1, 0], sizes = [8, 8, 12], strides = [1, 1, 1]} : vector<10x10x12xbf16> to vector<8x8x12xbf16>
    %63 = vector.shape_cast %62 : vector<8x8x12xbf16> to vector<64x12xbf16>
    %c2_47 = arith.constant 2 : index
    %c1_48 = arith.constant 1 : index
    %c0_49 = arith.constant 0 : index
    %c0_50 = arith.constant 0 : index
    %64 = vector.load %arg5[%c2_47, %c1_48, %c0_49, %c0_50] : memref<3x3x12x4xbf16, #tpu.memory_space<vmem>>, vector<1x1x12x4xbf16>
    %65 = vector.shape_cast %64 : vector<1x1x12x4xbf16> to vector<12x4xbf16>
    %cst_51 = arith.constant dense<0.000000e+00> : vector<64x4xf32>
    %66 = tpu.matmul %63, %65, %cst_51 {dimension_numbers = #tpu.dot_dimension_numbers<[1], [0], [0], [1], [0, 0, 1, 1], [], []>} : vector<64x12xbf16>, vector<12x4xbf16>, vector<64x4xf32> -> vector<64x4xf32>
    %67 = arith.addf %61, %66 : vector<64x4xf32>
    %68 = vector.extract_strided_slice %18 {offsets = [2, 2, 0], sizes = [8, 8, 12], strides = [1, 1, 1]} : vector<10x10x12xbf16> to vector<8x8x12xbf16>
    %69 = vector.shape_cast %68 : vector<8x8x12xbf16> to vector<64x12xbf16>
    %c2_52 = arith.constant 2 : index
    %c2_53 = arith.constant 2 : index
    %c0_54 = arith.constant 0 : index
    %c0_55 = arith.constant 0 : index
    %70 = vector.load %arg5[%c2_52, %c2_53, %c0_54, %c0_55] : memref<3x3x12x4xbf16, #tpu.memory_space<vmem>>, vector<1x1x12x4xbf16>
    %71 = vector.shape_cast %70 : vector<1x1x12x4xbf16> to vector<12x4xbf16>
    %cst_56 = arith.constant dense<0.000000e+00> : vector<64x4xf32>
    %72 = tpu.matmul %69, %71, %cst_56 {dimension_numbers = #tpu.dot_dimension_numbers<[1], [0], [0], [1], [0, 0, 1, 1], [], []>} : vector<64x12xbf16>, vector<12x4xbf16>, vector<64x4xf32> -> vector<64x4xf32>
    %73 = arith.addf %67, %72 : vector<64x4xf32>
    %c0_57 = arith.constant 0 : index
    %c0_58 = arith.constant 0 : index
    %74 = vector.load %arg6[%c0_57, %c0_58] : memref<1x4xf32, #tpu.memory_space<vmem>>, vector<1x4xf32>
    %75 = vector.broadcast %74 : vector<1x4xf32> to vector<64x4xf32>
    %76 = arith.mulf %73, %75 : vector<64x4xf32>
    %c0_59 = arith.constant 0 : index
    %c0_60 = arith.constant 0 : index
    %77 = vector.load %arg7[%c0_59, %c0_60] : memref<1x4xf32, #tpu.memory_space<vmem>>, vector<1x4xf32>
    %78 = vector.broadcast %77 : vector<1x4xf32> to vector<64x4xf32>
    %79 = arith.addf %76, %78 : vector<64x4xf32>
    %cst_61 = arith.constant 0.000000e+00 : f32
    %80 = vector.broadcast %cst_61 : f32 to vector<64x4xf32>
    %81 = arith.maximumf %79, %80 : vector<64x4xf32>
    %82 = vector.shape_cast %81 : vector<64x4xf32> to vector<8x8x4xf32>
    %83 = arith.truncf %82 : vector<8x8x4xf32> to vector<8x8x4xbf16>
    %c0_62 = arith.constant 0 : index
    %c0_63 = arith.constant 0 : index
    %c0_64 = arith.constant 0 : index
    %c0_65 = arith.constant 0 : index
    %c0_66 = arith.constant 0 : index
    %84 = vector.load %arg8[%c0_62, %c0_63, %c0_64, %c0_65, %c0_66] : memref<1x1x8x8x4xbf16, #tpu.memory_space<vmem>>, vector<1x1x8x8x4xbf16>
    %85 = vector.shape_cast %84 : vector<1x1x8x8x4xbf16> to vector<8x8x4xbf16>
    %86 = vector.shape_cast %83 : vector<8x8x4xbf16> to vector<1x1x8x8x4xbf16>
    tpu.vector_store %arg8[%c0_62, %c0_63, %c0_64, %c0_65, %c0_66], %86 {strides = array<i32>} : memref<1x1x8x8x4xbf16, #tpu.memory_space<vmem>>, vector<1x1x8x8x4xbf16>,
    return
  }
  func.func @transform_0(%arg0: i32, %arg1: i32) -> (i32, i32, i32, i32, i32) {
    %c1_i32 = arith.constant 1 : i32
    %0 = arith.subi %arg1, %c1_i32 : i32
    %c0_i32 = arith.constant 0 : i32
    %1 = arith.maxsi %0, %c0_i32 : i32
    %c0_i32_0 = arith.constant 0 : i32
    %c0_i32_1 = arith.constant 0 : i32
    %c0_i32_2 = arith.constant 0 : i32
    %c0_i32_3 = arith.constant 0 : i32
    return %arg0, %1, %c0_i32_0, %c0_i32_1, %c0_i32_2 : i32, i32, i32, i32, i32
  }
  func.func @transform_1(%arg0: i32, %arg1: i32) -> (i32, i32, i32, i32, i32) {
    %c0_i32 = arith.constant 0 : i32
    %c0_i32_0 = arith.constant 0 : i32
    %c0_i32_1 = arith.constant 0 : i32
    %c0_i32_2 = arith.constant 0 : i32
    return %arg0, %arg1, %c0_i32, %c0_i32_0, %c0_i32_1 : i32, i32, i32, i32, i32
  }
  func.func @transform_2(%arg0: i32, %arg1: i32) -> (i32, i32, i32, i32, i32) {
    %c1_i32 = arith.constant 1 : i32
    %0 = arith.addi %arg1, %c1_i32 : i32
    %c3_i32 = arith.constant 3 : i32
    %1 = arith.minsi %0, %c3_i32 : i32
    %c0_i32 = arith.constant 0 : i32
    %c0_i32_0 = arith.constant 0 : i32
    %c0_i32_1 = arith.constant 0 : i32
    %c0_i32_2 = arith.constant 0 : i32
    return %arg0, %1, %c0_i32, %c0_i32_0, %c0_i32_1 : i32, i32, i32, i32, i32
  }
  func.func @transform_3(%arg0: i32, %arg1: i32) -> (i32, i32, i32, i32) {
    %c0_i32 = arith.constant 0 : i32
    %c0_i32_0 = arith.constant 0 : i32
    %c0_i32_1 = arith.constant 0 : i32
    %c0_i32_2 = arith.constant 0 : i32
    %c0_i32_3 = arith.constant 0 : i32
    return %c0_i32, %c0_i32_0, %c0_i32_1, %c0_i32_2 : i32, i32, i32, i32
  }
  func.func @transform_4(%arg0: i32, %arg1: i32) -> (i32, i32) {
    %c0_i32 = arith.constant 0 : i32
    %c0_i32_0 = arith.constant 0 : i32
    %c0_i32_1 = arith.constant 0 : i32
    return %c0_i32, %c0_i32_0 : i32, i32
  }
  func.func @transform_5(%arg0: i32, %arg1: i32) -> (i32, i32) {
    %c0_i32 = arith.constant 0 : i32
    %c0_i32_0 = arith.constant 0 : i32
    %c0_i32_1 = arith.constant 0 : i32
    return %c0_i32, %c0_i32_0 : i32, i32
  }
  func.func @transform_6(%arg0: i32, %arg1: i32) -> (i32, i32, i32, i32, i32) {
    %c0_i32 = arith.constant 0 : i32
    %c0_i32_0 = arith.constant 0 : i32
    %c0_i32_1 = arith.constant 0 : i32
    %c0_i32_2 = arith.constant 0 : i32
    return %arg0, %arg1, %c0_i32, %c0_i32_0, %c0_i32_1 : i32, i32, i32, i32, i32
  }
}

</mosaic_0001>

<llo_original>
// kernel: bottleneck_3d_forward.5
$region0: #{bottleneck_3d_forward.5}
  #allocation0 [shape = 'u32[]', space=smem, size = 0x4, offset = 0x4, fixed_abs, tag = 'smem constant byte address 0x4 - core index']
  #allocation1 [shape = 'u32[144,128]{1,0:T(1,128)}', space=vmem, size = 0x12000, scoped, tag = 'internal scratch']
  %s0 = inlined_call_operand.vmem [shape: bf16[512,4], index: 0, kind: input, shape index: {}]
  %s1 = inlined_call_operand.vmem [shape: bf16[4,16], index: 1, kind: input, shape index: {}]
  %s2 = inlined_call_operand.vmem [shape: f32[1,16], index: 2, kind: input, shape index: {}]
  %s3 = inlined_call_operand.vmem [shape: f32[1,16], index: 3, kind: input, shape index: {}]
  %s4 = inlined_call_operand.vmem [shape: f32[512,16], index: 4, kind: input, shape index: {}]
  %s5 = inlined_call_operand.hbm [shape: f32[512,16], index: 5, kind: output, shape index: {}]
  %s6 = sld [smem:[#allocation0]]
  $region53: #{bottleneck_3d_forward.5} parent=0
    _
  %s8 = ssub.s32 1, %s6
  %s9 = scalar_select 0, %s8, %s6
  $region1: #{bottleneck_3d_forward.5} parent=0
    #allocation2 [shape = 'u8[262144]{0}', space=vmem, size = 0x40000, scoped, tag = 'output window, operand 0']
    #allocation3 [shape = 's32[2]{0}', space=sflag, size = 0x8, scoped, tag = 'scoped memory for bottleneck_3d_forward.5']
    %10 = vsyncpa [#allocation3], 0
    %s11 = scalar_lea.sflag [#allocation3], 1
    %12 = vsyncpa %s11, 0
    loop: start=0, step=1, limit=4
    $region2: #{bottleneck_3d_forward.5} parent=1 // loop_pre_header
      _
    $region3: #{bottleneck_3d_forward.5} parent=1 // loop_header
      %s14 = sphi 0, %s18
      %p15 = scmp.ge.s32.totalorder %s14, 4
      %s24 = sphi 0, %s26
      %s27 = sphi 0, %s24
      %s28 = sphi 0, %s27
      %s44 = sphi 0, %s28
      %s48 = sphi 0, %s48
      %s50 = sphi 0, %s48
      %s51 = sphi 0, %s50
      %s65 = sphi 0, %s51
      %s69 = sphi 0, %s69
      %s71 = sphi 0, %s69
      %s72 = sphi 0, %s71
      %s86 = sphi 0, %s72
      %s90 = sphi 0, %s90
      %s92 = sphi 0, %s90
      %s93 = sphi 0, %s92
      %s107 = sphi 0, %s93
      %s113 = sphi 0, %s115
      %s116 = sphi 0, %s113
      %s117 = sphi 0, %s116
      %s133 = sphi 0, %s117
      %s139 = sphi 0, %s141
      %s142 = sphi 0, %s139
      %s143 = sphi 0, %s142
      %s159 = sphi 0, %s143
    $region4: #{bottleneck_3d_forward.5} parent=1 // loop_header_branch
      %17 = sbr.rel (%p15) target = $region8
    $region5: #{bottleneck_3d_forward.5} parent=1 // loop_body
      %s19 = ssub.s32 %s14, 1
      %s20 = ssub.s32 %s14, 2
      %s21 = sadd.s32 %s14, 1
      %s22 = ssub.s32 %s14, %s21
      %p23 = scmp.eq.s32.totalorder %s22, 0
      %s25 = sadd.s32 %s24, 1
      %s26 = scalar_select %p23, %s24, %s25
      %p29 = pneg %p23
      %p30 = scmp.eq.s32.totalorder %s14, 1
      %p31 = por %p29, %p30
      %p32 = scmp.ne.s32.totalorder %s24, %s27
      %p33 = scmp.eq.s32.totalorder %s14, 0
      %p34 = por %p32, %p33
      %p35 = scmp.ne.s32.totalorder %s24, %s27
      %p36 = scmp.eq.s32.totalorder %s19, 1
      %p37 = por %p35, %p36
      %p38 = scmp.ne.s32.totalorder %s27, %s28
      %p39 = scmp.eq.s32.totalorder %s19, 0
      %p40 = por %p38, %p39
      %p41 = scmp.ne.s32.totalorder %s27, %s28
      %p42 = scmp.eq.s32.totalorder %s20, 1
      %p43 = por %p41, %p42
      %p45 = scmp.ne.s32.totalorder %s28, %s44
      %p46 = scmp.eq.s32.totalorder %s20, 0
      %p47 = por %p45, %p46
      %s49 = sadd.s32 %s48, 1
      %p52 = scmp.eq.s32.totalorder %s14, 1
      %p53 = scmp.ne.s32.totalorder %s48, %s50
      %p54 = scmp.eq.s32.totalorder %s14, 0
      %p55 = por %p53, %p54
      %p56 = scmp.ne.s32.totalorder %s48, %s50
      %p57 = scmp.eq.s32.totalorder %s19, 1
      %p58 = por %p56, %p57
      %p59 = scmp.ne.s32.totalorder %s50, %s51
      %p60 = scmp.eq.s32.totalorder %s19, 0
      %p61 = por %p59, %p60
      %p62 = scmp.ne.s32.totalorder %s50, %s51
      %p63 = scmp.eq.s32.totalorder %s20, 1
      %p64 = por %p62, %p63
      %p66 = scmp.ne.s32.totalorder %s51, %s65
      %p67 = scmp.eq.s32.totalorder %s20, 0
      %p68 = por %p66, %p67
      %s70 = sadd.s32 %s69, 1
      %p73 = scmp.eq.s32.totalorder %s14, 1
      %p74 = scmp.ne.s32.totalorder %s69, %s71
      %p75 = scmp.eq.s32.totalorder %s14, 0
      %p76 = por %p74, %p75
      %p77 = scmp.ne.s32.totalorder %s69, %s71
      %p78 = scmp.eq.s32.totalorder %s19, 1
      %p79 = por %p77, %p78
      %p80 = scmp.ne.s32.totalorder %s71, %s72
      %p81 = scmp.eq.s32.totalorder %s19, 0
      %p82 = por %p80, %p81
      %p83 = scmp.ne.s32.totalorder %s71, %s72
      %p84 = scmp.eq.s32.totalorder %s20, 1
      %p85 = por %p83, %p84
      %p87 = scmp.ne.s32.totalorder %s72, %s86
      %p88 = scmp.eq.s32.totalorder %s20, 0
      %p89 = por %p87, %p88
      %s91 = sadd.s32 %s90, 1
      %p94 = scmp.eq.s32.totalorder %s14, 1
      %p95 = scmp.ne.s32.totalorder %s90, %s92
      %p96 = scmp.eq.s32.totalorder %s14, 0
      %p97 = por %p95, %p96
      %p98 = scmp.ne.s32.totalorder %s90, %s92
      %p99 = scmp.eq.s32.totalorder %s19, 1
      %p100 = por %p98, %p99
      %p101 = scmp.ne.s32.totalorder %s92, %s93
      %p102 = scmp.eq.s32.totalorder %s19, 0
      %p103 = por %p101, %p102
      %p104 = scmp.ne.s32.totalorder %s92, %s93
      %p105 = scmp.eq.s32.totalorder %s20, 1
      %p106 = por %p104, %p105
      %p108 = scmp.ne.s32.totalorder %s93, %s107
      %p109 = scmp.eq.s32.totalorder %s20, 0
      %p110 = por %p108, %p109
      %s111 = ssub.s32 %s14, %s21
      %p112 = scmp.eq.s32.totalorder %s111, 0
      %s114 = sadd.s32 %s113, 1
      %s115 = scalar_select %p112, %s113, %s114
      %p118 = pneg %p112
      %p119 = scmp.eq.s32.totalorder %s14, 1
      %p120 = por %p118, %p119
      %p121 = scmp.ne.s32.totalorder %s113, %s116
      %p122 = scmp.eq.s32.totalorder %s14, 0
      %p123 = por %p121, %p122
      %p124 = scmp.ne.s32.totalorder %s113, %s116
      %p125 = scmp.eq.s32.totalorder %s19, 1
      %p126 = por %p124, %p125
      %p127 = scmp.ne.s32.totalorder %s116, %s117
      %p128 = scmp.eq.s32.totalorder %s19, 0
      %p129 = por %p127, %p128
      %p130 = scmp.ne.s32.totalorder %s116, %s117
      %p131 = scmp.eq.s32.totalorder %s20, 1
      %p132 = por %p130, %p131
      %p134 = scmp.ne.s32.totalorder %s117, %s133
      %p135 = scmp.eq.s32.totalorder %s20, 0
      %p136 = por %p134, %p135
      %s137 = ssub.s32 %s14, %s21
      %p138 = scmp.eq.s32.totalorder %s137, 0
      %s140 = sadd.s32 %s139, 1
      %s141 = scalar_select %p138, %s139, %s140
      %p144 = pneg %p138
      %p145 = scmp.eq.s32.totalorder %s14, 1
      %p146 = por %p144, %p145
      %p147 = scmp.ne.s32.totalorder %s139, %s142
      %p148 = scmp.eq.s32.totalorder %s14, 0
      %p149 = por %p147, %p148
      %p150 = scmp.ne.s32.totalorder %s139, %s142
      %p151 = scmp.eq.s32.totalorder %s19, 1
      %p152 = por %p150, %p151
      %p153 = scmp.ne.s32.totalorder %s142, %s143
      %p154 = scmp.eq.s32.totalorder %s19, 0
      %p155 = por %p153, %p154
      %p156 = scmp.ne.s32.totalorder %s142, %s143
      %p157 = scmp.eq.s32.totalorder %s20, 1
      %p158 = por %p156, %p157
      %p160 = scmp.ne.s32.totalorder %s143, %s159
      %p161 = scmp.eq.s32.totalorder %s20, 0
      %p162 = por %p160, %p161
      %p163 = scmp.le.s32.totalorder 1, %s14
      %p164 = scmp.lt.s32.totalorder %s14, 3
      %p165 = pnand %p163, %p164
      %p166 = pneg %p165
      // Predicated region
      $region9: #{bottleneck_3d_forward.5} parent=5 // pred_check
        _
      $region10: #{bottleneck_3d_forward.5} parent=5 // pred_check_branch
        %168 = sbr.rel (%p165) target = $region12
      $region11: #{bottleneck_3d_forward.5} parent=5 // pred_region
        %s169 = ssub.s32 %s14, 1
        // Predicated region
        $region13: #{bottleneck_3d_forward.5} parent=11 // pred_check
          %p170 = pneg %p61
        $region14: #{bottleneck_3d_forward.5} parent=11 // pred_check_branch
          %172 = sbr.rel (%p170) target = $region16
        $region15: #{bottleneck_3d_forward.5} parent=11 // pred_region
          _
        $region16: #{bottleneck_3d_forward.5} parent=11 // pred_fallthru
          _
        // Predicated region
        $region17: #{bottleneck_3d_forward.5} parent=11 // pred_check
          %p173 = pneg %p82
        $region18: #{bottleneck_3d_forward.5} parent=11 // pred_check_branch
          %175 = sbr.rel (%p173) target = $region20
        $region19: #{bottleneck_3d_forward.5} parent=11 // pred_region
          _
        $region20: #{bottleneck_3d_forward.5} parent=11 // pred_fallthru
          _
        // Predicated region
        $region21: #{bottleneck_3d_forward.5} parent=11 // pred_check
          %p176 = pneg %p103
        $region22: #{bottleneck_3d_forward.5} parent=11 // pred_check_branch
          %178 = sbr.rel (%p176) target = $region24
        $region23: #{bottleneck_3d_forward.5} parent=11 // pred_region
          _
        $region24: #{bottleneck_3d_forward.5} parent=11 // pred_fallthru
          _
      $region12: #{bottleneck_3d_forward.5} parent=5 // pred_fallthru
        _
      %p179 = scmp.lt.s32.totalorder %s14, 2
      // Predicated region
      $region25: #{bottleneck_3d_forward.5} parent=5 // pred_check
        %p180 = pneg %p179
      $region26: #{bottleneck_3d_forward.5} parent=5 // pred_check_branch
        %182 = sbr.rel (%p180) target = $region28
      $region27: #{bottleneck_3d_forward.5} parent=5 // pred_region
        // Predicated region
        $region29: #{bottleneck_3d_forward.5} parent=27 // pred_check
          %p183 = pneg %p34
        $region30: #{bottleneck_3d_forward.5} parent=27 // pred_check_branch
          %185 = sbr.rel (%p183) target = $region32
        $region31: #{bottleneck_3d_forward.5} parent=27 // pred_region
          %s186 = smul.u32 32, %s14
          %p187 = scmp.lt.s32.totalorder %s186, 63
          %s188 = scalar_select %p187, %s186, 63
          %s189 = smul.addr %s188, 4
          %s190 = scalar_lea.vmem %s0, %s189
          %s191 = smul.u32 32, %s14
        $region32: #{bottleneck_3d_forward.5} parent=27 // pred_fallthru
          _
        // Predicated region
        $region33: #{bottleneck_3d_forward.5} parent=27 // pred_check
          %p192 = pneg %p123
        $region34: #{bottleneck_3d_forward.5} parent=27 // pred_check_branch
          %194 = sbr.rel (%p192) target = $region36
        $region35: #{bottleneck_3d_forward.5} parent=27 // pred_region
          %s195 = smul.u32 32, %s14
          %p196 = scmp.lt.s32.totalorder %s195, 63
          %s197 = scalar_select %p196, %s195, 63
          %s198 = smul.addr %s197, 8
          %s199 = scalar_lea.vmem %s4, %s198
          %s200 = smul.u32 32, %s14
        $region36: #{bottleneck_3d_forward.5} parent=27 // pred_fallthru
          _
      $region28: #{bottleneck_3d_forward.5} parent=5 // pred_fallthru
        _
      %p201 = scmp.le.s32.totalorder 1, %s14
      %p202 = scmp.lt.s32.totalorder %s14, 3
      %p203 = pnand %p201, %p202
      %p204 = pneg %p203
      // Predicated region
      $region37: #{bottleneck_3d_forward.5} parent=5 // pred_check
        _
      $region38: #{bottleneck_3d_forward.5} parent=5 // pred_check_branch
        %206 = sbr.rel (%p203) target = $region40
      $region39: #{bottleneck_3d_forward.5} parent=5 // pred_region
        %s207 = ssub.s32 %s14, 1
        %s208 = smul.u32 32, %s19
        %p209 = scmp.lt.s32.totalorder %s208, 63
        %s210 = scalar_select %p209, %s208, 63
        %s211 = smul.addr %s210, 4
        %s212 = scalar_lea.vmem %s0, %s211
        %p213 = pneg %p40
        %p214 = pneg %p37
        %p215 = pneg %p61
        %p216 = pneg %p58
        %p217 = pneg %p82
        %p218 = pneg %p79
        %p219 = pneg %p103
        %p220 = pneg %p100
        %s221 = smul.u32 32, %s19
        %p222 = scmp.lt.s32.totalorder %s221, 63
        %s223 = scalar_select %p222, %s221, 63
        %s224 = smul.addr %s223, 8
        %s225 = scalar_lea.vmem %s4, %s224
        %p226 = pneg %p129
        %p227 = pneg %p126
        %p228 = pneg %p155
        %p229 = pneg %p152
        %s230 = sand.u32 %s142, 1
        %s231 = scalar_lea.sflag [#allocation3], %s230
        %s232 = sand.u32 %s142, 1
        %s233 = smul.addr %s232, 256
        %s234 = scalar_lea.vmem [#allocation2], %s233
        %s235 = smul.u32 32, %s19
        %p236 = scmp.lt.s32.totalorder %s235, 63
        %s237 = scalar_select %p236, %s235, 63
        %s238 = smul.addr %s237, 4
        %s239 = scalar_lea.vmem %s0, %s238
        %s240 = smul.u32 32, %s19
        %s241 = smul.u32 32, %s19
        %p242 = scmp.lt.s32.totalorder %s241, 63
        %s243 = scalar_select %p242, %s241, 63
        %s244 = smul.addr %s243, 8
        %s245 = scalar_lea.vmem %s4, %s244
        %s246 = smul.u32 32, %s19
        %s247 = smul.u32 32, %s19
        %v249 = vld [vmem:[%s239] sm:$0xf]
        %v250 = vld [vmem:[%s239 + $0x4] sm:$0xf]
        %v251 = vld [vmem:[%s239 + $0x8] sm:$0xf]
        %v252 = vld [vmem:[%s239 + $0xc] sm:$0xf]
        %v253 = vld [vmem:[%s239 + $0x10] sm:$0xf]
        %v254 = vld [vmem:[%s239 + $0x14] sm:$0xf]
        %v255 = vld [vmem:[%s239 + $0x18] sm:$0xf]
        %v256 = vld [vmem:[%s239 + $0x1c] sm:$0xf]
        %v257 = vld [vmem:[%s239 + $0x20] sm:$0xf]
        %v258 = vld [vmem:[%s239 + $0x24] sm:$0xf]
        %v259 = vld [vmem:[%s239 + $0x28] sm:$0xf]
        %v260 = vld [vmem:[%s239 + $0x2c] sm:$0xf]
        %v261 = vld [vmem:[%s239 + $0x30] sm:$0xf]
        %v262 = vld [vmem:[%s239 + $0x34] sm:$0xf]
        %v263 = vld [vmem:[%s239 + $0x38] sm:$0xf]
        %v264 = vld [vmem:[%s239 + $0x3c] sm:$0xf]
        %v265 = vld [vmem:[%s239 + $0x40] sm:$0xf]
        %v266 = vld [vmem:[%s239 + $0x44] sm:$0xf]
        %v267 = vld [vmem:[%s239 + $0x48] sm:$0xf]
        %v268 = vld [vmem:[%s239 + $0x4c] sm:$0xf]
        %v269 = vld [vmem:[%s239 + $0x50] sm:$0xf]
        %v270 = vld [vmem:[%s239 + $0x54] sm:$0xf]
        %v271 = vld [vmem:[%s239 + $0x58] sm:$0xf]
        %v272 = vld [vmem:[%s239 + $0x5c] sm:$0xf]
        %v273 = vld [vmem:[%s239 + $0x60] sm:$0xf]
        %v274 = vld [vmem:[%s239 + $0x64] sm:$0xf]
        %v275 = vld [vmem:[%s239 + $0x68] sm:$0xf]
        %v276 = vld [vmem:[%s239 + $0x6c] sm:$0xf]
        %v277 = vld [vmem:[%s239 + $0x70] sm:$0xf]
        %v278 = vld [vmem:[%s239 + $0x74] sm:$0xf]
        %v279 = vld [vmem:[%s239 + $0x78] sm:$0xf]
        %v280 = vld [vmem:[%s239 + $0x7c] sm:$0xf]
        %v281 = vld [vmem:[%s1] sm:$0x3]
        %v314 = vunpack.c.l.b16 %v249
        %v315 = vunpack.c.l.b16 %v250
        %v316 = vunpack.c.l.b16 %v251
        %v317 = vunpack.c.l.b16 %v252
        %v318 = vunpack.c.l.b16 %v253
        %v319 = vunpack.c.l.b16 %v254
        %v320 = vunpack.c.l.b16 %v255
        %v321 = vunpack.c.l.b16 %v256
        %v322 = vunpack.c.l.b16 %v257
        %v323 = vunpack.c.l.b16 %v258
        %v324 = vunpack.c.l.b16 %v259
        %v325 = vunpack.c.l.b16 %v260
        %v326 = vunpack.c.l.b16 %v261
        %v327 = vunpack.c.l.b16 %v262
        %v328 = vunpack.c.l.b16 %v263
        %v329 = vunpack.c.l.b16 %v264
        %v330 = vunpack.c.l.b16 %v265
        %v331 = vunpack.c.l.b16 %v266
        %v332 = vunpack.c.l.b16 %v267
        %v333 = vunpack.c.l.b16 %v268
        %v334 = vunpack.c.l.b16 %v269
        %v335 = vunpack.c.l.b16 %v270
        %v336 = vunpack.c.l.b16 %v271
        %v337 = vunpack.c.l.b16 %v272
        %v338 = vunpack.c.l.b16 %v273
        %v339 = vunpack.c.l.b16 %v274
        %v340 = vunpack.c.l.b16 %v275
        %v341 = vunpack.c.l.b16 %v276
        %v342 = vunpack.c.l.b16 %v277
        %v343 = vunpack.c.l.b16 %v278
        %v344 = vunpack.c.l.b16 %v279
        %v345 = vunpack.c.l.b16 %v280
        %v346 = vpack.c.b16 %v315, %v314
        %v347 = vpack.c.b16 %v317, %v316
        %v348 = vpack.c.b16 %v319, %v318
        %v349 = vpack.c.b16 %v321, %v320
        %v350 = vpack.c.b16 %v323, %v322
        %v351 = vpack.c.b16 %v325, %v324
        %v352 = vpack.c.b16 %v327, %v326
        %v353 = vpack.c.b16 %v329, %v328
        %v354 = vpack.c.b16 %v331, %v330
        %v355 = vpack.c.b16 %v333, %v332
        %v356 = vpack.c.b16 %v335, %v334
        %v357 = vpack.c.b16 %v337, %v336
        %v358 = vpack.c.b16 %v339, %v338
        %v359 = vpack.c.b16 %v341, %v340
        %v360 = vpack.c.b16 %v343, %v342
        %v361 = vpack.c.b16 %v345, %v344
        %vm362 = vcmask 31744
        %v364 = vsel %vm362, %v346, 0
        %v367 = vsel %vm362, %v347, 0
        %v370 = vsel %vm362, %v348, 0
        %v373 = vsel %vm362, %v349, 0
        %v376 = vsel %vm362, %v350, 0
        %v379 = vsel %vm362, %v351, 0
        %v382 = vsel %vm362, %v352, 0
        %v385 = vsel %vm362, %v353, 0
        %v388 = vsel %vm362, %v354, 0
        %v391 = vsel %vm362, %v355, 0
        %v394 = vsel %vm362, %v356, 0
        %v397 = vsel %vm362, %v357, 0
        %v400 = vsel %vm362, %v358, 0
        %v403 = vsel %vm362, %v359, 0
        %v406 = vsel %vm362, %v360, 0
        %v409 = vsel %vm362, %v361, 0
        %vm411 = vcmask 1041408
        %v413 = vsel %vm411, %v281, 0
        %415 = vmatprep.subr.bf16.mxu0 0
        %416 = vmatpush1.bf16.msra.mxu0 %v413
        %417 = vmatprep.subr.bf16.mxu0 0
        %418 = vmatpush1.bf16.msra.mxu0 0
        %419 = vmatprep.subr.bf16.mxu0 0
        %420 = vmatpush1.bf16.msra.mxu0 0
        %421 = vmatprep.subr.bf16.mxu0 0
        %422 = vmatpush1.bf16.msra.mxu0 0
        %423 = vmatprep.subr.bf16.mxu0 0
        %424 = vmatpush1.bf16.msra.mxu0 0
        %425 = vmatprep.subr.bf16.mxu0 0
        %426 = vmatpush1.bf16.msra.mxu0 0
        %427 = vmatprep.subr.bf16.mxu0 0
        %428 = vmatpush1.bf16.msra.mxu0 0
        %429 = vmatprep.subr.bf16.mxu0 0
        %430 = vmatpush1.bf16.msra.mxu0 0
        %431 = vmatprep.subr.bf16.mxu0 0
        %432 = vmatpush1.bf16.msra.mxu0 0
        %433 = vmatprep.subr.bf16.mxu0 0
        %434 = vmatpush1.bf16.msra.mxu0 0
        %435 = vmatprep.subr.bf16.mxu0 0
        %436 = vmatpush1.bf16.msra.mxu0 0
        %437 = vmatprep.subr.bf16.mxu0 0
        %438 = vmatpush1.bf16.msra.mxu0 0
        %439 = vmatprep.subr.bf16.mxu0 0
        %440 = vmatpush1.bf16.msra.mxu0 0
        %441 = vmatprep.subr.bf16.mxu0 0
        %442 = vmatpush1.bf16.msra.mxu0 0
        %443 = vmatprep.subr.bf16.mxu0 0
        %444 = vmatpush1.bf16.msra.mxu0 0
        %445 = vmatprep.subr.bf16.mxu0 0
        %446 = vmatpush1.bf16.msra.mxu0 0
        %447 = vmatprep.mubr.bf16.mxu0 0
        %448 = vmatmul.mubr.bf16.gmra.mrb[0].mxu0 %v364
        %v449 = vpop.f32.mrb[0].mxu0
        %v450 = vadd.f32 0.0, %v449
        %v451 = vpop.f32.mrb[0].mxu0
        %v452 = vpop.f32.mrb[0].mxu0
        %v453 = vadd.f32 0.0, %v452
        %v454 = vpop.f32.mrb[0].mxu0
        %455 = vmatprep.mubr.bf16.mxu0 0
        %456 = vmatmul.mubr.bf16.gmra.mrb[0].mxu0 %v367
        %v457 = vpop.f32.mrb[0].mxu0
        %v458 = vadd.f32 0.0, %v457
        %v459 = vpop.f32.mrb[0].mxu0
        %v460 = vpop.f32.mrb[0].mxu0
        %v461 = vadd.f32 0.0, %v460
        %v462 = vpop.f32.mrb[0].mxu0
        %463 = vmatprep.mubr.bf16.mxu0 0
        %464 = vmatmul.mubr.bf16.gmra.mrb[0].mxu0 %v370
        %v465 = vpop.f32.mrb[0].mxu0
        %v466 = vadd.f32 0.0, %v465
        %v467 = vpop.f32.mrb[0].mxu0
        %v468 = vpop.f32.mrb[0].mxu0
        %v469 = vadd.f32 0.0, %v468
        %v470 = vpop.f32.mrb[0].mxu0
        %471 = vmatprep.mubr.bf16.mxu0 0
        %472 = vmatmul.mubr.bf16.gmra.mrb[0].mxu0 %v373
        %v473 = vpop.f32.mrb[0].mxu0
        %v474 = vadd.f32 0.0, %v473
        %v475 = vpop.f32.mrb[0].mxu0
        %v476 = vpop.f32.mrb[0].mxu0
        %v477 = vadd.f32 0.0, %v476
        %v478 = vpop.f32.mrb[0].mxu0
        %479 = vmatprep.mubr.bf16.mxu0 0
        %480 = vmatmul.mubr.bf16.gmra.mrb[0].mxu0 %v376
        %v481 = vpop.f32.mrb[0].mxu0
        %v482 = vadd.f32 0.0, %v481
        %v483 = vpop.f32.mrb[0].mxu0
        %v484 = vpop.f32.mrb[0].mxu0
        %v485 = vadd.f32 0.0, %v484
        %v486 = vpop.f32.mrb[0].mxu0
        %487 = vmatprep.mubr.bf16.mxu0 0
        %488 = vmatmul.mubr.bf16.gmra.mrb[0].mxu0 %v379
        %v489 = vpop.f32.mrb[0].mxu0
        %v490 = vadd.f32 0.0, %v489
        %v491 = vpop.f32.mrb[0].mxu0
        %v492 = vpop.f32.mrb[0].mxu0
        %v493 = vadd.f32 0.0, %v492
        %v494 = vpop.f32.mrb[0].mxu0
        %495 = vmatprep.mubr.bf16.mxu0 0
        %496 = vmatmul.mubr.bf16.gmra.mrb[0].mxu0 %v382
        %v497 = vpop.f32.mrb[0].mxu0
        %v498 = vadd.f32 0.0, %v497
        %v499 = vpop.f32.mrb[0].mxu0
        %v500 = vpop.f32.mrb[0].mxu0
        %v501 = vadd.f32 0.0, %v500
        %v502 = vpop.f32.mrb[0].mxu0
        %503 = vmatprep.mubr.bf16.mxu0 0
        %504 = vmatmul.mubr.bf16.gmra.mrb[0].mxu0 %v385
        %v505 = vpop.f32.mrb[0].mxu0
        %v506 = vadd.f32 0.0, %v505
        %v507 = vpop.f32.mrb[0].mxu0
        %v508 = vpop.f32.mrb[0].mxu0
        %v509 = vadd.f32 0.0, %v508
        %v510 = vpop.f32.mrb[0].mxu0
        %511 = vmatprep.mubr.bf16.mxu0 0
        %512 = vmatmul.mubr.bf16.gmra.mrb[0].mxu0 %v388
        %v513 = vpop.f32.mrb[0].mxu0
        %v514 = vadd.f32 0.0, %v513
        %v515 = vpop.f32.mrb[0].mxu0
        %v516 = vpop.f32.mrb[0].mxu0
        %v517 = vadd.f32 0.0, %v516
        %v518 = vpop.f32.mrb[0].mxu0
        %519 = vmatprep.mubr.bf16.mxu0 0
        %520 = vmatmul.mubr.bf16.gmra.mrb[0].mxu0 %v391
        %v521 = vpop.f32.mrb[0].mxu0
        %v522 = vadd.f32 0.0, %v521
        %v523 = vpop.f32.mrb[0].mxu0
        %v524 = vpop.f32.mrb[0].mxu0
        %v525 = vadd.f32 0.0, %v524
        %v526 = vpop.f32.mrb[0].mxu0
        %527 = vmatprep.mubr.bf16.mxu0 0
        %528 = vmatmul.mubr.bf16.gmra.mrb[0].mxu0 %v394
        %v529 = vpop.f32.mrb[0].mxu0
        %v530 = vadd.f32 0.0, %v529
        %v531 = vpop.f32.mrb[0].mxu0
        %v532 = vpop.f32.mrb[0].mxu0
        %v533 = vadd.f32 0.0, %v532
        %v534 = vpop.f32.mrb[0].mxu0
        %535 = vmatprep.mubr.bf16.mxu0 0
        %536 = vmatmul.mubr.bf16.gmra.mrb[0].mxu0 %v397
        %v537 = vpop.f32.mrb[0].mxu0
        %v538 = vadd.f32 0.0, %v537
        %v539 = vpop.f32.mrb[0].mxu0
        %v540 = vpop.f32.mrb[0].mxu0
        %v541 = vadd.f32 0.0, %v540
        %v542 = vpop.f32.mrb[0].mxu0
        %543 = vmatprep.mubr.bf16.mxu0 0
        %544 = vmatmul.mubr.bf16.gmra.mrb[0].mxu0 %v400
        %v545 = vpop.f32.mrb[0].mxu0
        %v546 = vadd.f32 0.0, %v545
        %v547 = vpop.f32.mrb[0].mxu0
        %v548 = vpop.f32.mrb[0].mxu0
        %v549 = vadd.f32 0.0, %v548
        %v550 = vpop.f32.mrb[0].mxu0
        %551 = vmatprep.mubr.bf16.mxu0 0
        %552 = vmatmul.mubr.bf16.gmra.mrb[0].mxu0 %v403
        %v553 = vpop.f32.mrb[0].mxu0
        %v554 = vadd.f32 0.0, %v553
        %v555 = vpop.f32.mrb[0].mxu0
        %v556 = vpop.f32.mrb[0].mxu0
        %v557 = vadd.f32 0.0, %v556
        %v558 = vpop.f32.mrb[0].mxu0
        %559 = vmatprep.mubr.bf16.mxu0 0
        %560 = vmatmul.mubr.bf16.gmra.mrb[0].mxu0 %v406
        %v561 = vpop.f32.mrb[0].mxu0
        %v562 = vadd.f32 0.0, %v561
        %v563 = vpop.f32.mrb[0].mxu0
        %v564 = vpop.f32.mrb[0].mxu0
        %v565 = vadd.f32 0.0, %v564
        %v566 = vpop.f32.mrb[0].mxu0
        %567 = vmatprep.mubr.bf16.mxu0 0
        %568 = vmatmul.mubr.bf16.gmra.mrb[0].mxu0 %v409
        %v569 = vpop.f32.mrb[0].mxu0
        %v570 = vadd.f32 0.0, %v569
        %v571 = vpop.f32.mrb[0].mxu0
        %v572 = vpop.f32.mrb[0].mxu0
        %v573 = vadd.f32 0.0, %v572
        %v574 = vpop.f32.mrb[0].mxu0
        %575 = vdwg.mxu0
        %v576 = vld [vmem:[%s2] sm:$0x1]
        %v578 = vlaneseq
        %v579 = vshrl.u32 %v578, 7
        %v580 = vsub.s32 0, %v579
        %v581 = vrot.slane %v576, %v580
        %v583 = vmul.f32 %v450, %v581
        %v584 = vmul.f32 %v453, %v581
        %v585 = vmul.f32 %v458, %v581
        %v586 = vmul.f32 %v461, %v581
        %v587 = vmul.f32 %v466, %v581
        %v588 = vmul.f32 %v469, %v581
        %v589 = vmul.f32 %v474, %v581
        %v590 = vmul.f32 %v477, %v581
        %v591 = vmul.f32 %v482, %v581
        %v592 = vmul.f32 %v485, %v581
        %v593 = vmul.f32 %v490, %v581
        %v594 = vmul.f32 %v493, %v581
        %v595 = vmul.f32 %v498, %v581
        %v596 = vmul.f32 %v501, %v581
        %v597 = vmul.f32 %v506, %v581
        %v598 = vmul.f32 %v509, %v581
        %v599 = vmul.f32 %v514, %v581
        %v600 = vmul.f32 %v517, %v581
        %v601 = vmul.f32 %v522, %v581
        %v602 = vmul.f32 %v525, %v581
        %v603 = vmul.f32 %v530, %v581
        %v604 = vmul.f32 %v533, %v581
        %v605 = vmul.f32 %v538, %v581
        %v606 = vmul.f32 %v541, %v581
        %v607 = vmul.f32 %v546, %v581
        %v608 = vmul.f32 %v549, %v581
        %v609 = vmul.f32 %v554, %v581
        %v610 = vmul.f32 %v557, %v581
        %v611 = vmul.f32 %v562, %v581
        %v612 = vmul.f32 %v565, %v581
        %v613 = vmul.f32 %v570, %v581
        %v614 = vmul.f32 %v573, %v581
        %v615 = vld [vmem:[%s3] sm:$0x1]
        %v617 = vlaneseq
        %v618 = vshrl.u32 %v617, 7
        %v619 = vsub.s32 0, %v618
        %v620 = vrot.slane %v615, %v619
        %v622 = vadd.f32 %v583, %v620
        %v623 = vadd.f32 %v584, %v620
        %v624 = vadd.f32 %v585, %v620
        %v625 = vadd.f32 %v586, %v620
        %v626 = vadd.f32 %v587, %v620
        %v627 = vadd.f32 %v588, %v620
        %v628 = vadd.f32 %v589, %v620
        %v629 = vadd.f32 %v590, %v620
        %v630 = vadd.f32 %v591, %v620
        %v631 = vadd.f32 %v592, %v620
        %v632 = vadd.f32 %v593, %v620
        %v633 = vadd.f32 %v594, %v620
        %v634 = vadd.f32 %v595, %v620
        %v635 = vadd.f32 %v596, %v620
        %v636 = vadd.f32 %v597, %v620
        %v637 = vadd.f32 %v598, %v620
        %v638 = vadd.f32 %v599, %v620
        %v639 = vadd.f32 %v600, %v620
        %v640 = vadd.f32 %v601, %v620
        %v641 = vadd.f32 %v602, %v620
        %v642 = vadd.f32 %v603, %v620
        %v643 = vadd.f32 %v604, %v620
        %v644 = vadd.f32 %v605, %v620
        %v645 = vadd.f32 %v606, %v620
        %v646 = vadd.f32 %v607, %v620
        %v647 = vadd.f32 %v608, %v620
        %v648 = vadd.f32 %v609, %v620
        %v649 = vadd.f32 %v610, %v620
        %v650 = vadd.f32 %v611, %v620
        %v651 = vadd.f32 %v612, %v620
        %v652 = vadd.f32 %v613, %v620
        %v653 = vadd.f32 %v614, %v620
        %v654 = vld [vmem:[%s245] sm:$0xff]
        %v655 = vld [vmem:[%s245 + $0x8] sm:$0xff]
        %v656 = vld [vmem:[%s245 + $0x10] sm:$0xff]
        %v657 = vld [vmem:[%s245 + $0x18] sm:$0xff]
        %v658 = vld [vmem:[%s245 + $0x20] sm:$0xff]
        %v659 = vld [vmem:[%s245 + $0x28] sm:$0xff]
        %v660 = vld [vmem:[%s245 + $0x30] sm:$0xff]
        %v661 = vld [vmem:[%s245 + $0x38] sm:$0xff]
        %v662 = vld [vmem:[%s245 + $0x40] sm:$0xff]
        %v663 = vld [vmem:[%s245 + $0x48] sm:$0xff]
        %v664 = vld [vmem:[%s245 + $0x50] sm:$0xff]
        %v665 = vld [vmem:[%s245 + $0x58] sm:$0xff]
        %v666 = vld [vmem:[%s245 + $0x60] sm:$0xff]
        %v667 = vld [vmem:[%s245 + $0x68] sm:$0xff]
        %v668 = vld [vmem:[%s245 + $0x70] sm:$0xff]
        %v669 = vld [vmem:[%s245 + $0x78] sm:$0xff]
        %v670 = vld [vmem:[%s245 + $0x80] sm:$0xff]
        %v671 = vld [vmem:[%s245 + $0x88] sm:$0xff]
        %v672 = vld [vmem:[%s245 + $0x90] sm:$0xff]
        %v673 = vld [vmem:[%s245 + $0x98] sm:$0xff]
        %v674 = vld [vmem:[%s245 + $0xa0] sm:$0xff]
        %v675 = vld [vmem:[%s245 + $0xa8] sm:$0xff]
        %v676 = vld [vmem:[%s245 + $0xb0] sm:$0xff]
        %v677 = vld [vmem:[%s245 + $0xb8] sm:$0xff]
        %v678 = vld [vmem:[%s245 + $0xc0] sm:$0xff]
        %v679 = vld [vmem:[%s245 + $0xc8] sm:$0xff]
        %v680 = vld [vmem:[%s245 + $0xd0] sm:$0xff]
        %v681 = vld [vmem:[%s245 + $0xd8] sm:$0xff]
        %v682 = vld [vmem:[%s245 + $0xe0] sm:$0xff]
        %v683 = vld [vmem:[%s245 + $0xe8] sm:$0xff]
        %v684 = vld [vmem:[%s245 + $0xf0] sm:$0xff]
        %v685 = vld [vmem:[%s245 + $0xf8] sm:$0xff]
        %v686 = vadd.f32 %v622, %v654
        %v687 = vadd.f32 %v623, %v655
        %v688 = vadd.f32 %v624, %v656
        %v689 = vadd.f32 %v625, %v657
        %v690 = vadd.f32 %v626, %v658
        %v691 = vadd.f32 %v627, %v659
        %v692 = vadd.f32 %v628, %v660
        %v693 = vadd.f32 %v629, %v661
        %v694 = vadd.f32 %v630, %v662
        %v695 = vadd.f32 %v631, %v663
        %v696 = vadd.f32 %v632, %v664
        %v697 = vadd.f32 %v633, %v665
        %v698 = vadd.f32 %v634, %v666
        %v699 = vadd.f32 %v635, %v667
        %v700 = vadd.f32 %v636, %v668
        %v701 = vadd.f32 %v637, %v669
        %v702 = vadd.f32 %v638, %v670
        %v703 = vadd.f32 %v639, %v671
        %v704 = vadd.f32 %v640, %v672
        %v705 = vadd.f32 %v641, %v673
        %v706 = vadd.f32 %v642, %v674
        %v707 = vadd.f32 %v643, %v675
        %v708 = vadd.f32 %v644, %v676
        %v709 = vadd.f32 %v645, %v677
        %v710 = vadd.f32 %v646, %v678
        %v711 = vadd.f32 %v647, %v679
        %v712 = vadd.f32 %v648, %v680
        %v713 = vadd.f32 %v649, %v681
        %v714 = vadd.f32 %v650, %v682
        %v715 = vadd.f32 %v651, %v683
        %v716 = vadd.f32 %v652, %v684
        %v717 = vadd.f32 %v653, %v685
        %v718 = vmax.f32 %v686, 0.0
        %v719 = vmax.f32 %v687, 0.0
        %v720 = vmax.f32 %v688, 0.0
        %v721 = vmax.f32 %v689, 0.0
        %v722 = vmax.f32 %v690, 0.0
        %v723 = vmax.f32 %v691, 0.0
        %v724 = vmax.f32 %v692, 0.0
        %v725 = vmax.f32 %v693, 0.0
        %v726 = vmax.f32 %v694, 0.0
        %v727 = vmax.f32 %v695, 0.0
        %v728 = vmax.f32 %v696, 0.0
        %v729 = vmax.f32 %v697, 0.0
        %v730 = vmax.f32 %v698, 0.0
        %v731 = vmax.f32 %v699, 0.0
        %v732 = vmax.f32 %v700, 0.0
        %v733 = vmax.f32 %v701, 0.0
        %v734 = vmax.f32 %v702, 0.0
        %v735 = vmax.f32 %v703, 0.0
        %v736 = vmax.f32 %v704, 0.0
        %v737 = vmax.f32 %v705, 0.0
        %v738 = vmax.f32 %v706, 0.0
        %v739 = vmax.f32 %v707, 0.0
        %v740 = vmax.f32 %v708, 0.0
        %v741 = vmax.f32 %v709, 0.0
        %v742 = vmax.f32 %v710, 0.0
        %v743 = vmax.f32 %v711, 0.0
        %v744 = vmax.f32 %v712, 0.0
        %v745 = vmax.f32 %v713, 0.0
        %v746 = vmax.f32 %v714, 0.0
        %v747 = vmax.f32 %v715, 0.0
        %v748 = vmax.f32 %v716, 0.0
        %v749 = vmax.f32 %v717, 0.0
        %vm750 = vcmask 130048
        %751 = vst.msk [vmem:[%s234] sm:$0xff] %vm750, %v718
        %752 = vst.msk [vmem:[%s234 + $0x8] sm:$0xff] %vm750, %v719
        %753 = vst.msk [vmem:[%s234 + $0x10] sm:$0xff] %vm750, %v720
        %754 = vst.msk [vmem:[%s234 + $0x18] sm:$0xff] %vm750, %v721
        %755 = vst.msk [vmem:[%s234 + $0x20] sm:$0xff] %vm750, %v722
        %756 = vst.msk [vmem:[%s234 + $0x28] sm:$0xff] %vm750, %v723
        %757 = vst.msk [vmem:[%s234 + $0x30] sm:$0xff] %vm750, %v724
        %758 = vst.msk [vmem:[%s234 + $0x38] sm:$0xff] %vm750, %v725
        %759 = vst.msk [vmem:[%s234 + $0x40] sm:$0xff] %vm750, %v726
        %760 = vst.msk [vmem:[%s234 + $0x48] sm:$0xff] %vm750, %v727
        %761 = vst.msk [vmem:[%s234 + $0x50] sm:$0xff] %vm750, %v728
        %762 = vst.msk [vmem:[%s234 + $0x58] sm:$0xff] %vm750, %v729
        %763 = vst.msk [vmem:[%s234 + $0x60] sm:$0xff] %vm750, %v730
        %764 = vst.msk [vmem:[%s234 + $0x68] sm:$0xff] %vm750, %v731
        %765 = vst.msk [vmem:[%s234 + $0x70] sm:$0xff] %vm750, %v732
        %766 = vst.msk [vmem:[%s234 + $0x78] sm:$0xff] %vm750, %v733
        %767 = vst.msk [vmem:[%s234 + $0x80] sm:$0xff] %vm750, %v734
        %768 = vst.msk [vmem:[%s234 + $0x88] sm:$0xff] %vm750, %v735
        %769 = vst.msk [vmem:[%s234 + $0x90] sm:$0xff] %vm750, %v736
        %770 = vst.msk [vmem:[%s234 + $0x98] sm:$0xff] %vm750, %v737
        %771 = vst.msk [vmem:[%s234 + $0xa0] sm:$0xff] %vm750, %v738
        %772 = vst.msk [vmem:[%s234 + $0xa8] sm:$0xff] %vm750, %v739
        %773 = vst.msk [vmem:[%s234 + $0xb0] sm:$0xff] %vm750, %v740
        %774 = vst.msk [vmem:[%s234 + $0xb8] sm:$0xff] %vm750, %v741
        %775 = vst.msk [vmem:[%s234 + $0xc0] sm:$0xff] %vm750, %v742
        %776 = vst.msk [vmem:[%s234 + $0xc8] sm:$0xff] %vm750, %v743
        %777 = vst.msk [vmem:[%s234 + $0xd0] sm:$0xff] %vm750, %v744
        %778 = vst.msk [vmem:[%s234 + $0xd8] sm:$0xff] %vm750, %v745
        %779 = vst.msk [vmem:[%s234 + $0xe0] sm:$0xff] %vm750, %v746
        %780 = vst.msk [vmem:[%s234 + $0xe8] sm:$0xff] %vm750, %v747
        %781 = vst.msk [vmem:[%s234 + $0xf0] sm:$0xff] %vm750, %v748
        %782 = vst.msk [vmem:[%s234 + $0xf8] sm:$0xff] %vm750, %v749
        %s783 = sand.u32 %s142, 1
        %s784 = scalar_lea.sflag [#allocation3], %s783
        %s785 = sand.u32 %s142, 1
        %s786 = smul.addr %s785, 256
        %s787 = scalar_lea.vmem [#allocation2], %s786
        // Predicated region
        $region41: #{bottleneck_3d_forward.5} parent=39 // pred_check
          %p788 = pneg %p152
        $region42: #{bottleneck_3d_forward.5} parent=39 // pred_check_branch
          %790 = sbr.rel (%p788) target = $region44
        $region43: #{bottleneck_3d_forward.5} parent=39 // pred_region
          %s791 = smul.u32 32, %s19
          %s793 = ssub.s32 4096, 4096
          %794 = vsyncadd %s784, %s793
          %s795 = smul.addr %s791, 128
          %s796 = scalar_lea.hbm %s5, %s795
          %s797 = sshll.u32 %s787, 4
          %s798 = int_to_ptr.vmem [resolvable:$true] %s797
          %803 = dma.vmem_to_hbm [thread:$0]  %s798, 4096, %s796, %s784, 128, 128, 8
        $region44: #{bottleneck_3d_forward.5} parent=39 // pred_fallthru
          _
      $region40: #{bottleneck_3d_forward.5} parent=5 // pred_fallthru
        _
      %p804 = scmp.le.s32.totalorder 2, %s14
      // Predicated region
      $region45: #{bottleneck_3d_forward.5} parent=5 // pred_check
        %p805 = pneg %p804
      $region46: #{bottleneck_3d_forward.5} parent=5 // pred_check_branch
        %807 = sbr.rel (%p805) target = $region48
      $region47: #{bottleneck_3d_forward.5} parent=5 // pred_region
        %s808 = ssub.s32 %s14, 2
        // Predicated region
        $region49: #{bottleneck_3d_forward.5} parent=47 // pred_check
          %p809 = pneg %p158
        $region50: #{bottleneck_3d_forward.5} parent=47 // pred_check_branch
          %811 = sbr.rel (%p809) target = $region52
        $region51: #{bottleneck_3d_forward.5} parent=47 // pred_region
          %s812 = sand.u32 %s143, 1
          %s813 = scalar_lea.sflag [#allocation3], %s812
          %s814 = sand.u32 %s143, 1
          %s815 = smul.addr %s814, 256
          %s816 = scalar_lea.vmem [#allocation2], %s815
          %817 = dma.done %s813, 4096
        $region52: #{bottleneck_3d_forward.5} parent=47 // pred_fallthru
          _
      $region48: #{bottleneck_3d_forward.5} parent=5 // pred_fallthru
        _
    $region6: #{bottleneck_3d_forward.5} parent=1 // loop_footer
      %s18 = sadd.s32 1, %s14
    $region7: #{bottleneck_3d_forward.5} parent=1 // loop_footer_branch
      %13 = sbr.rel target = $region3
    $region8: #{bottleneck_3d_forward.5} parent=1 // loop_exit
      _
    %818 = vsyncpa [#allocation3], 1
    %s819 = scalar_lea.sflag [#allocation3], 1
    %820 = vsyncpa %s819, 1

// kernel: bottleneck_3d_forward.3
$region0: #{bottleneck_3d_forward.3}
  #allocation0 [shape = 'u32[]', space=smem, size = 0x4, offset = 0x4, fixed_abs, tag = 'smem constant byte address 0x4 - core index']
  #allocation1 [shape = 'u32[144,128]{1,0:T(1,128)}', space=vmem, size = 0x12000, scoped, tag = 'internal scratch']
  %s0 = inlined_call_operand.vmem [shape: bf16[2,4,8,8,16], index: 0, kind: input, shape index: {}]
  %s1 = inlined_call_operand.vmem [shape: bf16[16,4], index: 1, kind: input, shape index: {}]
  %s2 = inlined_call_operand.vmem [shape: f32[1,4], index: 2, kind: input, shape index: {}]
  %s3 = inlined_call_operand.vmem [shape: f32[1,4], index: 3, kind: input, shape index: {}]
  %s4 = inlined_call_operand.vmem [shape: bf16[2,4,10,10,4], index: 4, kind: output, shape index: {}]
  %s5 = sld [smem:[#allocation0]]
  $region49: #{bottleneck_3d_forward.3} parent=0
    _
  %s7 = ssub.s32 1, %s5
  %s8 = scalar_select 0, %s7, %s5
  loop: start=0, step=1, limit=4
  $region2: #{bottleneck_3d_forward.3} parent=0 // loop_pre_header
    _
  $region3: #{bottleneck_3d_forward.3} parent=0 // loop_header
    %s10 = sphi 0, %s14
    %p11 = scmp.ge.s32.totalorder %s10, 4
    %s17 = sphi 0, %s29
    %s18 = sphi 0, %s25
    %s19 = sphi 0, %s17
    %s20 = sphi 0, %s18
    %s21 = sphi 0, %s19
    %s22 = sphi 0, %s20
    %s34 = sphi 0, %s36
    %s37 = sphi 0, %s34
    %s38 = sphi 0, %s37
    %s54 = sphi 0, %s38
    %s58 = sphi 0, %s58
    %s60 = sphi 0, %s58
    %s61 = sphi 0, %s60
    %s75 = sphi 0, %s61
    %s79 = sphi 0, %s79
    %s81 = sphi 0, %s79
    %s82 = sphi 0, %s81
    %s96 = sphi 0, %s82
    %s100 = sphi 0, %s100
    %s102 = sphi 0, %s100
    %s103 = sphi 0, %s102
    %s117 = sphi 0, %s103
    %s125 = sphi 0, %s127
    %s128 = sphi 0, %s125
    %s129 = sphi 0, %s128
    %s145 = sphi 0, %s129
  $region4: #{bottleneck_3d_forward.3} parent=0 // loop_header_branch
    %13 = sbr.rel (%p11) target = $region8
  $region5: #{bottleneck_3d_forward.3} parent=0 // loop_body
    %s15 = ssub.s32 %s10, 1
    %s16 = ssub.s32 %s10, 2
    %s23 = sadd.s32 1, %s18
    %p24 = scmp.ge.s32.totalorder %s23, 1
    %s25 = scalar_select %p24, 0, %s23
    %s26 = sadd.s32 1, %s17
    %s27 = scalar_select %p24, %s26, %s17
    %p28 = scmp.ge.s32.totalorder %s27, 2
    %s29 = scalar_select %p28, 0, %s27
    %s30 = ssub.s32 %s17, %s29
    %s31 = ssub.s32 %s18, %s25
    %s32 = sor.u32 %s30, %s31
    %p33 = scmp.eq.s32.totalorder %s32, 0
    %s35 = sadd.s32 %s34, 1
    %s36 = scalar_select %p33, %s34, %s35
    %p39 = pneg %p33
    %p40 = scmp.eq.s32.totalorder %s10, 1
    %p41 = por %p39, %p40
    %p42 = scmp.ne.s32.totalorder %s34, %s37
    %p43 = scmp.eq.s32.totalorder %s10, 0
    %p44 = por %p42, %p43
    %p45 = scmp.ne.s32.totalorder %s34, %s37
    %p46 = scmp.eq.s32.totalorder %s15, 1
    %p47 = por %p45, %p46
    %p48 = scmp.ne.s32.totalorder %s37, %s38
    %p49 = scmp.eq.s32.totalorder %s15, 0
    %p50 = por %p48, %p49
    %p51 = scmp.ne.s32.totalorder %s37, %s38
    %p52 = scmp.eq.s32.totalorder %s16, 1
    %p53 = por %p51, %p52
    %p55 = scmp.ne.s32.totalorder %s38, %s54
    %p56 = scmp.eq.s32.totalorder %s16, 0
    %p57 = por %p55, %p56
    %s59 = sadd.s32 %s58, 1
    %p62 = scmp.eq.s32.totalorder %s10, 1
    %p63 = scmp.ne.s32.totalorder %s58, %s60
    %p64 = scmp.eq.s32.totalorder %s10, 0
    %p65 = por %p63, %p64
    %p66 = scmp.ne.s32.totalorder %s58, %s60
    %p67 = scmp.eq.s32.totalorder %s15, 1
    %p68 = por %p66, %p67
    %p69 = scmp.ne.s32.totalorder %s60, %s61
    %p70 = scmp.eq.s32.totalorder %s15, 0
    %p71 = por %p69, %p70
    %p72 = scmp.ne.s32.totalorder %s60, %s61
    %p73 = scmp.eq.s32.totalorder %s16, 1
    %p74 = por %p72, %p73
    %p76 = scmp.ne.s32.totalorder %s61, %s75
    %p77 = scmp.eq.s32.totalorder %s16, 0
    %p78 = por %p76, %p77
    %s80 = sadd.s32 %s79, 1
    %p83 = scmp.eq.s32.totalorder %s10, 1
    %p84 = scmp.ne.s32.totalorder %s79, %s81
    %p85 = scmp.eq.s32.totalorder %s10, 0
    %p86 = por %p84, %p85
    %p87 = scmp.ne.s32.totalorder %s79, %s81
    %p88 = scmp.eq.s32.totalorder %s15, 1
    %p89 = por %p87, %p88
    %p90 = scmp.ne.s32.totalorder %s81, %s82
    %p91 = scmp.eq.s32.totalorder %s15, 0
    %p92 = por %p90, %p91
    %p93 = scmp.ne.s32.totalorder %s81, %s82
    %p94 = scmp.eq.s32.totalorder %s16, 1
    %p95 = por %p93, %p94
    %p97 = scmp.ne.s32.totalorder %s82, %s96
    %p98 = scmp.eq.s32.totalorder %s16, 0
    %p99 = por %p97, %p98
    %s101 = sadd.s32 %s100, 1
    %p104 = scmp.eq.s32.totalorder %s10, 1
    %p105 = scmp.ne.s32.totalorder %s100, %s102
    %p106 = scmp.eq.s32.totalorder %s10, 0
    %p107 = por %p105, %p106
    %p108 = scmp.ne.s32.totalorder %s100, %s102
    %p109 = scmp.eq.s32.totalorder %s15, 1
    %p110 = por %p108, %p109
    %p111 = scmp.ne.s32.totalorder %s102, %s103
    %p112 = scmp.eq.s32.totalorder %s15, 0
    %p113 = por %p111, %p112
    %p114 = scmp.ne.s32.totalorder %s102, %s103
    %p115 = scmp.eq.s32.totalorder %s16, 1
    %p116 = por %p114, %p115
    %p118 = scmp.ne.s32.totalorder %s103, %s117
    %p119 = scmp.eq.s32.totalorder %s16, 0
    %p120 = por %p118, %p119
    %s121 = ssub.s32 %s17, %s29
    %s122 = ssub.s32 %s18, %s25
    %s123 = sor.u32 %s121, %s122
    %p124 = scmp.eq.s32.totalorder %s123, 0
    %s126 = sadd.s32 %s125, 1
    %s127 = scalar_select %p124, %s125, %s126
    %p130 = pneg %p124
    %p131 = scmp.eq.s32.totalorder %s10, 1
    %p132 = por %p130, %p131
    %p133 = scmp.ne.s32.totalorder %s125, %s128
    %p134 = scmp.eq.s32.totalorder %s10, 0
    %p135 = por %p133, %p134
    %p136 = scmp.ne.s32.totalorder %s125, %s128
    %p137 = scmp.eq.s32.totalorder %s15, 1
    %p138 = por %p136, %p137
    %p139 = scmp.ne.s32.totalorder %s128, %s129
    %p140 = scmp.eq.s32.totalorder %s15, 0
    %p141 = por %p139, %p140
    %p142 = scmp.ne.s32.totalorder %s128, %s129
    %p143 = scmp.eq.s32.totalorder %s16, 1
    %p144 = por %p142, %p143
    %p146 = scmp.ne.s32.totalorder %s129, %s145
    %p147 = scmp.eq.s32.totalorder %s16, 0
    %p148 = por %p146, %p147
    %p149 = scmp.le.s32.totalorder 1, %s10
    %p150 = scmp.lt.s32.totalorder %s10, 3
    %p151 = pnand %p149, %p150
    %p152 = pneg %p151
    // Predicated region
    $region9: #{bottleneck_3d_forward.3} parent=5 // pred_check
      _
    $region10: #{bottleneck_3d_forward.3} parent=5 // pred_check_branch
      %154 = sbr.rel (%p151) target = $region12
    $region11: #{bottleneck_3d_forward.3} parent=5 // pred_region
      %s155 = ssub.s32 %s10, 1
      // Predicated region
      $region13: #{bottleneck_3d_forward.3} parent=11 // pred_check
        %p156 = pneg %p71
      $region14: #{bottleneck_3d_forward.3} parent=11 // pred_check_branch
        %158 = sbr.rel (%p156) target = $region16
      $region15: #{bottleneck_3d_forward.3} parent=11 // pred_region
        _
      $region16: #{bottleneck_3d_forward.3} parent=11 // pred_fallthru
        _
      // Predicated region
      $region17: #{bottleneck_3d_forward.3} parent=11 // pred_check
        %p159 = pneg %p92
      $region18: #{bottleneck_3d_forward.3} parent=11 // pred_check_branch
        %161 = sbr.rel (%p159) target = $region20
      $region19: #{bottleneck_3d_forward.3} parent=11 // pred_region
        _
      $region20: #{bottleneck_3d_forward.3} parent=11 // pred_fallthru
        _
      // Predicated region
      $region21: #{bottleneck_3d_forward.3} parent=11 // pred_check
        %p162 = pneg %p113
      $region22: #{bottleneck_3d_forward.3} parent=11 // pred_check_branch
        %164 = sbr.rel (%p162) target = $region24
      $region23: #{bottleneck_3d_forward.3} parent=11 // pred_region
        _
      $region24: #{bottleneck_3d_forward.3} parent=11 // pred_fallthru
        _
    $region12: #{bottleneck_3d_forward.3} parent=5 // pred_fallthru
      _
    %p165 = scmp.lt.s32.totalorder %s10, 2
    // Predicated region
    $region25: #{bottleneck_3d_forward.3} parent=5 // pred_check
      %p166 = pneg %p165
    $region26: #{bottleneck_3d_forward.3} parent=5 // pred_check_branch
      %168 = sbr.rel (%p166) target = $region28
    $region27: #{bottleneck_3d_forward.3} parent=5 // pred_region
      // Predicated region
      $region29: #{bottleneck_3d_forward.3} parent=27 // pred_check
        %p169 = pneg %p44
      $region30: #{bottleneck_3d_forward.3} parent=27 // pred_check_branch
        %171 = sbr.rel (%p169) target = $region32
      $region31: #{bottleneck_3d_forward.3} parent=27 // pred_region
        %s172 = smul.u32 4, %s18
        %p173 = scmp.lt.s32.totalorder %s17, 1
        %s174 = scalar_select %p173, %s17, 1
        %p175 = scmp.lt.s32.totalorder %s172, 3
        %s176 = scalar_select %p175, %s172, 3
        %s177 = smul.addr %s176, 8
        %s178 = smul.addr %s174, 32
        %s179 = sadd.s32 %s177, %s178
        %s180 = smul.addr %s179, 4
        %s181 = scalar_lea.vmem %s0, %s180
        %s182 = smul.u32 4, %s18
      $region32: #{bottleneck_3d_forward.3} parent=27 // pred_fallthru
        _
    $region28: #{bottleneck_3d_forward.3} parent=5 // pred_fallthru
      _
    %p183 = scmp.le.s32.totalorder 1, %s10
    %p184 = scmp.lt.s32.totalorder %s10, 3
    %p185 = pnand %p183, %p184
    %p186 = pneg %p185
    // Predicated region
    $region33: #{bottleneck_3d_forward.3} parent=5 // pred_check
      _
    $region34: #{bottleneck_3d_forward.3} parent=5 // pred_check_branch
      %188 = sbr.rel (%p185) target = $region36
    $region35: #{bottleneck_3d_forward.3} parent=5 // pred_region
      %s189 = ssub.s32 %s10, 1
      %s190 = smul.u32 4, %s20
      %p191 = scmp.lt.s32.totalorder %s19, 1
      %s192 = scalar_select %p191, %s19, 1
      %p193 = scmp.lt.s32.totalorder %s190, 3
      %s194 = scalar_select %p193, %s190, 3
      %s195 = smul.addr %s194, 8
      %s196 = smul.addr %s192, 32
      %s197 = sadd.s32 %s195, %s196
      %s198 = smul.addr %s197, 4
      %s199 = scalar_lea.vmem %s0, %s198
      %p200 = pneg %p50
      %p201 = pneg %p47
      %p202 = pneg %p71
      %p203 = pneg %p68
      %p204 = pneg %p92
      %p205 = pneg %p89
      %p206 = pneg %p113
      %p207 = pneg %p110
      %p208 = pneg %p141
      %p209 = pneg %p138
      %s210 = smul.u32 4, %s20
      %p211 = scmp.lt.s32.totalorder %s19, 1
      %s212 = scalar_select %p211, %s19, 1
      %p213 = scmp.lt.s32.totalorder %s210, 3
      %s214 = scalar_select %p213, %s210, 3
      %s215 = smul.addr %s214, 20
      %s216 = smul.addr %s212, 80
      %s217 = sadd.s32 %s215, %s216
      %s218 = smul.addr %s217, 4
      %s219 = scalar_lea.vmem %s4, %s218
      %s220 = smul.u32 4, %s20
      %p221 = scmp.lt.s32.totalorder %s19, 1
      %s222 = scalar_select %p221, %s19, 1
      %p223 = scmp.lt.s32.totalorder %s220, 3
      %s224 = scalar_select %p223, %s220, 3
      %s225 = smul.addr %s224, 8
      %s226 = smul.addr %s222, 32
      %s227 = sadd.s32 %s225, %s226
      %s228 = smul.addr %s227, 4
      %s229 = scalar_lea.vmem %s0, %s228
      %s230 = smul.u32 4, %s20
      %s231 = smul.u32 4, %s20
      %p232 = scmp.lt.s32.totalorder %s19, 1
      %s233 = scalar_select %p232, %s19, 1
      %p234 = scmp.lt.s32.totalorder %s231, 3
      %s235 = scalar_select %p234, %s231, 3
      %s236 = smul.addr %s235, 20
      %s237 = smul.addr %s233, 80
      %s238 = sadd.s32 %s236, %s237
      %s239 = smul.addr %s238, 4
      %s240 = scalar_lea.vmem %s4, %s239
      %s241 = smul.u32 4, %s20
      %v243 = vld [vmem:[%s229] sm:$0xf]
      %v244 = vld [vmem:[%s229 + $0x4] sm:$0xf]
      %v245 = vld [vmem:[%s229 + $0x8] sm:$0xf]
      %v246 = vld [vmem:[%s229 + $0xc] sm:$0xf]
      %v247 = vld [vmem:[%s229 + $0x10] sm:$0xf]
      %v248 = vld [vmem:[%s229 + $0x14] sm:$0xf]
      %v249 = vld [vmem:[%s229 + $0x18] sm:$0xf]
      %v250 = vld [vmem:[%s229 + $0x1c] sm:$0xf]
      %v251 = vld [vmem:[%s229 + $0x20] sm:$0xf]
      %v252 = vld [vmem:[%s229 + $0x24] sm:$0xf]
      %v253 = vld [vmem:[%s229 + $0x28] sm:$0xf]
      %v254 = vld [vmem:[%s229 + $0x2c] sm:$0xf]
      %v255 = vld [vmem:[%s229 + $0x30] sm:$0xf]
      %v256 = vld [vmem:[%s229 + $0x34] sm:$0xf]
      %v257 = vld [vmem:[%s229 + $0x38] sm:$0xf]
      %v258 = vld [vmem:[%s229 + $0x3c] sm:$0xf]
      %v259 = vld [vmem:[%s229 + $0x40] sm:$0xf]
      %v260 = vld [vmem:[%s229 + $0x44] sm:$0xf]
      %v261 = vld [vmem:[%s229 + $0x48] sm:$0xf]
      %v262 = vld [vmem:[%s229 + $0x4c] sm:$0xf]
      %v263 = vld [vmem:[%s229 + $0x50] sm:$0xf]
      %v264 = vld [vmem:[%s229 + $0x54] sm:$0xf]
      %v265 = vld [vmem:[%s229 + $0x58] sm:$0xf]
      %v266 = vld [vmem:[%s229 + $0x5c] sm:$0xf]
      %v267 = vld [vmem:[%s229 + $0x60] sm:$0xf]
      %v268 = vld [vmem:[%s229 + $0x64] sm:$0xf]
      %v269 = vld [vmem:[%s229 + $0x68] sm:$0xf]
      %v270 = vld [vmem:[%s229 + $0x6c] sm:$0xf]
      %v271 = vld [vmem:[%s229 + $0x70] sm:$0xf]
      %v272 = vld [vmem:[%s229 + $0x74] sm:$0xf]
      %v273 = vld [vmem:[%s229 + $0x78] sm:$0xf]
      %v274 = vld [vmem:[%s229 + $0x7c] sm:$0xf]
      %v275 = vld [vmem:[%s1] sm:$0xf]
      %v276 = vld [vmem:[%s1 + $0x4] sm:$0xf]
      %v309 = vunpack.c.l.b16 %v243
      %v310 = vunpack.c.l.b16 %v244
      %v311 = vunpack.c.l.b16 %v245
      %v312 = vunpack.c.l.b16 %v246
      %v313 = vunpack.c.l.b16 %v247
      %v314 = vunpack.c.l.b16 %v248
      %v315 = vunpack.c.l.b16 %v249
      %v316 = vunpack.c.l.b16 %v250
      %v317 = vunpack.c.l.b16 %v251
      %v318 = vunpack.c.l.b16 %v252
      %v319 = vunpack.c.l.b16 %v253
      %v320 = vunpack.c.l.b16 %v254
      %v321 = vunpack.c.l.b16 %v255
      %v322 = vunpack.c.l.b16 %v256
      %v323 = vunpack.c.l.b16 %v257
      %v324 = vunpack.c.l.b16 %v258
      %v325 = vunpack.c.l.b16 %v259
      %v326 = vunpack.c.l.b16 %v260
      %v327 = vunpack.c.l.b16 %v261
      %v328 = vunpack.c.l.b16 %v262
      %v329 = vunpack.c.l.b16 %v263
      %v330 = vunpack.c.l.b16 %v264
      %v331 = vunpack.c.l.b16 %v265
      %v332 = vunpack.c.l.b16 %v266
      %v333 = vunpack.c.l.b16 %v267
      %v334 = vunpack.c.l.b16 %v268
      %v335 = vunpack.c.l.b16 %v269
      %v336 = vunpack.c.l.b16 %v270
      %v337 = vunpack.c.l.b16 %v271
      %v338 = vunpack.c.l.b16 %v272
      %v339 = vunpack.c.l.b16 %v273
      %v340 = vunpack.c.l.b16 %v274
      %v341 = vpack.c.b16 %v310, %v309
      %v342 = vpack.c.b16 %v312, %v311
      %v343 = vpack.c.b16 %v314, %v313
      %v344 = vpack.c.b16 %v316, %v315
      %v345 = vpack.c.b16 %v318, %v317
      %v346 = vpack.c.b16 %v320, %v319
      %v347 = vpack.c.b16 %v322, %v321
      %v348 = vpack.c.b16 %v324, %v323
      %v349 = vpack.c.b16 %v326, %v325
      %v350 = vpack.c.b16 %v328, %v327
      %v351 = vpack.c.b16 %v330, %v329
      %v352 = vpack.c.b16 %v332, %v331
      %v353 = vpack.c.b16 %v334, %v333
      %v354 = vpack.c.b16 %v336, %v335
      %v355 = vpack.c.b16 %v338, %v337
      %v356 = vpack.c.b16 %v340, %v339
      %v359 = vunpack.c.l.b16 %v275
      %v360 = vunpack.c.l.b16 %v276
      %v361 = vpack.c.b16 %v360, %v359
      %vm363 = vcmask 130048
      %v365 = vsel %vm363, %v341, 0
      %v368 = vsel %vm363, %v342, 0
      %v371 = vsel %vm363, %v343, 0
      %v374 = vsel %vm363, %v344, 0
      %v377 = vsel %vm363, %v345, 0
      %v380 = vsel %vm363, %v346, 0
      %v383 = vsel %vm363, %v347, 0
      %v386 = vsel %vm363, %v348, 0
      %v389 = vsel %vm363, %v349, 0
      %v392 = vsel %vm363, %v350, 0
      %v395 = vsel %vm363, %v351, 0
      %v398 = vsel %vm363, %v352, 0
      %v401 = vsel %vm363, %v353, 0
      %v404 = vsel %vm363, %v354, 0
      %v407 = vsel %vm363, %v355, 0
      %v410 = vsel %vm363, %v356, 0
      %412 = vmatprep.subr.bf16.mxu0 0
      %413 = vmatpush1.bf16.msra.mxu0 %v361
      %414 = vmatprep.subr.bf16.mxu0 0
      %415 = vmatpush1.bf16.msra.mxu0 0
      %416 = vmatprep.subr.bf16.mxu0 0
      %417 = vmatpush1.bf16.msra.mxu0 0
      %418 = vmatprep.subr.bf16.mxu0 0
      %419 = vmatpush1.bf16.msra.mxu0 0
      %420 = vmatprep.subr.bf16.mxu0 0
      %421 = vmatpush1.bf16.msra.mxu0 0
      %422 = vmatprep.subr.bf16.mxu0 0
      %423 = vmatpush1.bf16.msra.mxu0 0
      %424 = vmatprep.subr.bf16.mxu0 0
      %425 = vmatpush1.bf16.msra.mxu0 0
      %426 = vmatprep.subr.bf16.mxu0 0
      %427 = vmatpush1.bf16.msra.mxu0 0
      %428 = vmatprep.subr.bf16.mxu0 0
      %429 = vmatpush1.bf16.msra.mxu0 0
      %430 = vmatprep.subr.bf16.mxu0 0
      %431 = vmatpush1.bf16.msra.mxu0 0
      %432 = vmatprep.subr.bf16.mxu0 0
      %433 = vmatpush1.bf16.msra.mxu0 0
      %434 = vmatprep.subr.bf16.mxu0 0
      %435 = vmatpush1.bf16.msra.mxu0 0
      %436 = vmatprep.subr.bf16.mxu0 0
      %437 = vmatpush1.bf16.msra.mxu0 0
      %438 = vmatprep.subr.bf16.mxu0 0
      %439 = vmatpush1.bf16.msra.mxu0 0
      %440 = vmatprep.subr.bf16.mxu0 0
      %441 = vmatpush1.bf16.msra.mxu0 0
      %442 = vmatprep.subr.bf16.mxu0 0
      %443 = vmatpush1.bf16.msra.mxu0 0
      %444 = vmatprep.mubr.bf16.mxu0 0
      %445 = vmatmul.mubr.bf16.gmra.mrb[0].mxu0 %v365
      %v446 = vpop.f32.mrb[0].mxu0
      %v447 = vadd.f32 0.0, %v446
      %v448 = vpop.f32.mrb[0].mxu0
      %v449 = vpop.f32.mrb[0].mxu0
      %v450 = vadd.f32 0.0, %v449
      %v451 = vpop.f32.mrb[0].mxu0
      %452 = vmatprep.mubr.bf16.mxu0 0
      %453 = vmatmul.mubr.bf16.gmra.mrb[0].mxu0 %v368
      %v454 = vpop.f32.mrb[0].mxu0
      %v455 = vadd.f32 0.0, %v454
      %v456 = vpop.f32.mrb[0].mxu0
      %v457 = vpop.f32.mrb[0].mxu0
      %v458 = vadd.f32 0.0, %v457
      %v459 = vpop.f32.mrb[0].mxu0
      %460 = vmatprep.mubr.bf16.mxu0 0
      %461 = vmatmul.mubr.bf16.gmra.mrb[0].mxu0 %v371
      %v462 = vpop.f32.mrb[0].mxu0
      %v463 = vadd.f32 0.0, %v462
      %v464 = vpop.f32.mrb[0].mxu0
      %v465 = vpop.f32.mrb[0].mxu0
      %v466 = vadd.f32 0.0, %v465
      %v467 = vpop.f32.mrb[0].mxu0
      %468 = vmatprep.mubr.bf16.mxu0 0
      %469 = vmatmul.mubr.bf16.gmra.mrb[0].mxu0 %v374
      %v470 = vpop.f32.mrb[0].mxu0
      %v471 = vadd.f32 0.0, %v470
      %v472 = vpop.f32.mrb[0].mxu0
      %v473 = vpop.f32.mrb[0].mxu0
      %v474 = vadd.f32 0.0, %v473
      %v475 = vpop.f32.mrb[0].mxu0
      %476 = vmatprep.mubr.bf16.mxu0 0
      %477 = vmatmul.mubr.bf16.gmra.mrb[0].mxu0 %v377
      %v478 = vpop.f32.mrb[0].mxu0
      %v479 = vadd.f32 0.0, %v478
      %v480 = vpop.f32.mrb[0].mxu0
      %v481 = vpop.f32.mrb[0].mxu0
      %v482 = vadd.f32 0.0, %v481
      %v483 = vpop.f32.mrb[0].mxu0
      %484 = vmatprep.mubr.bf16.mxu0 0
      %485 = vmatmul.mubr.bf16.gmra.mrb[0].mxu0 %v380
      %v486 = vpop.f32.mrb[0].mxu0
      %v487 = vadd.f32 0.0, %v486
      %v488 = vpop.f32.mrb[0].mxu0
      %v489 = vpop.f32.mrb[0].mxu0
      %v490 = vadd.f32 0.0, %v489
      %v491 = vpop.f32.mrb[0].mxu0
      %492 = vmatprep.mubr.bf16.mxu0 0
      %493 = vmatmul.mubr.bf16.gmra.mrb[0].mxu0 %v383
      %v494 = vpop.f32.mrb[0].mxu0
      %v495 = vadd.f32 0.0, %v494
      %v496 = vpop.f32.mrb[0].mxu0
      %v497 = vpop.f32.mrb[0].mxu0
      %v498 = vadd.f32 0.0, %v497
      %v499 = vpop.f32.mrb[0].mxu0
      %500 = vmatprep.mubr.bf16.mxu0 0
      %501 = vmatmul.mubr.bf16.gmra.mrb[0].mxu0 %v386
      %v502 = vpop.f32.mrb[0].mxu0
      %v503 = vadd.f32 0.0, %v502
      %v504 = vpop.f32.mrb[0].mxu0
      %v505 = vpop.f32.mrb[0].mxu0
      %v506 = vadd.f32 0.0, %v505
      %v507 = vpop.f32.mrb[0].mxu0
      %508 = vmatprep.mubr.bf16.mxu0 0
      %509 = vmatmul.mubr.bf16.gmra.mrb[0].mxu0 %v389
      %v510 = vpop.f32.mrb[0].mxu0
      %v511 = vadd.f32 0.0, %v510
      %v512 = vpop.f32.mrb[0].mxu0
      %v513 = vpop.f32.mrb[0].mxu0
      %v514 = vadd.f32 0.0, %v513
      %v515 = vpop.f32.mrb[0].mxu0
      %516 = vmatprep.mubr.bf16.mxu0 0
      %517 = vmatmul.mubr.bf16.gmra.mrb[0].mxu0 %v392
      %v518 = vpop.f32.mrb[0].mxu0
      %v519 = vadd.f32 0.0, %v518
      %v520 = vpop.f32.mrb[0].mxu0
      %v521 = vpop.f32.mrb[0].mxu0
      %v522 = vadd.f32 0.0, %v521
      %v523 = vpop.f32.mrb[0].mxu0
      %524 = vmatprep.mubr.bf16.mxu0 0
      %525 = vmatmul.mubr.bf16.gmra.mrb[0].mxu0 %v395
      %v526 = vpop.f32.mrb[0].mxu0
      %v527 = vadd.f32 0.0, %v526
      %v528 = vpop.f32.mrb[0].mxu0
      %v529 = vpop.f32.mrb[0].mxu0
      %v530 = vadd.f32 0.0, %v529
      %v531 = vpop.f32.mrb[0].mxu0
      %532 = vmatprep.mubr.bf16.mxu0 0
      %533 = vmatmul.mubr.bf16.gmra.mrb[0].mxu0 %v398
      %v534 = vpop.f32.mrb[0].mxu0
      %v535 = vadd.f32 0.0, %v534
      %v536 = vpop.f32.mrb[0].mxu0
      %v537 = vpop.f32.mrb[0].mxu0
      %v538 = vadd.f32 0.0, %v537
      %v539 = vpop.f32.mrb[0].mxu0
      %540 = vmatprep.mubr.bf16.mxu0 0
      %541 = vmatmul.mubr.bf16.gmra.mrb[0].mxu0 %v401
      %v542 = vpop.f32.mrb[0].mxu0
      %v543 = vadd.f32 0.0, %v542
      %v544 = vpop.f32.mrb[0].mxu0
      %v545 = vpop.f32.mrb[0].mxu0
      %v546 = vadd.f32 0.0, %v545
      %v547 = vpop.f32.mrb[0].mxu0
      %548 = vmatprep.mubr.bf16.mxu0 0
      %549 = vmatmul.mubr.bf16.gmra.mrb[0].mxu0 %v404
      %v550 = vpop.f32.mrb[0].mxu0
      %v551 = vadd.f32 0.0, %v550
      %v552 = vpop.f32.mrb[0].mxu0
      %v553 = vpop.f32.mrb[0].mxu0
      %v554 = vadd.f32 0.0, %v553
      %v555 = vpop.f32.mrb[0].mxu0
      %556 = vmatprep.mubr.bf16.mxu0 0
      %557 = vmatmul.mubr.bf16.gmra.mrb[0].mxu0 %v407
      %v558 = vpop.f32.mrb[0].mxu0
      %v559 = vadd.f32 0.0, %v558
      %v560 = vpop.f32.mrb[0].mxu0
      %v561 = vpop.f32.mrb[0].mxu0
      %v562 = vadd.f32 0.0, %v561
      %v563 = vpop.f32.mrb[0].mxu0
      %564 = vmatprep.mubr.bf16.mxu0 0
      %565 = vmatmul.mubr.bf16.gmra.mrb[0].mxu0 %v410
      %v566 = vpop.f32.mrb[0].mxu0
      %v567 = vadd.f32 0.0, %v566
      %v568 = vpop.f32.mrb[0].mxu0
      %v569 = vpop.f32.mrb[0].mxu0
      %v570 = vadd.f32 0.0, %v569
      %v571 = vpop.f32.mrb[0].mxu0
      %572 = vdwg.mxu0
      %v573 = vld [vmem:[%s2] sm:$0x1]
      %v575 = vlaneseq
      %v576 = vshrl.u32 %v575, 7
      %v577 = vsub.s32 0, %v576
      %v578 = vrot.slane %v573, %v577
      %v580 = vmul.f32 %v447, %v578
      %v581 = vmul.f32 %v450, %v578
      %v582 = vmul.f32 %v455, %v578
      %v583 = vmul.f32 %v458, %v578
      %v584 = vmul.f32 %v463, %v578
      %v585 = vmul.f32 %v466, %v578
      %v586 = vmul.f32 %v471, %v578
      %v587 = vmul.f32 %v474, %v578
      %v588 = vmul.f32 %v479, %v578
      %v589 = vmul.f32 %v482, %v578
      %v590 = vmul.f32 %v487, %v578
      %v591 = vmul.f32 %v490, %v578
      %v592 = vmul.f32 %v495, %v578
      %v593 = vmul.f32 %v498, %v578
      %v594 = vmul.f32 %v503, %v578
      %v595 = vmul.f32 %v506, %v578
      %v596 = vmul.f32 %v511, %v578
      %v597 = vmul.f32 %v514, %v578
      %v598 = vmul.f32 %v519, %v578
      %v599 = vmul.f32 %v522, %v578
      %v600 = vmul.f32 %v527, %v578
      %v601 = vmul.f32 %v530, %v578
      %v602 = vmul.f32 %v535, %v578
      %v603 = vmul.f32 %v538, %v578
      %v604 = vmul.f32 %v543, %v578
      %v605 = vmul.f32 %v546, %v578
      %v606 = vmul.f32 %v551, %v578
      %v607 = vmul.f32 %v554, %v578
      %v608 = vmul.f32 %v559, %v578
      %v609 = vmul.f32 %v562, %v578
      %v610 = vmul.f32 %v567, %v578
      %v611 = vmul.f32 %v570, %v578
      %v612 = vld [vmem:[%s3] sm:$0x1]
      %v614 = vlaneseq
      %v615 = vshrl.u32 %v614, 7
      %v616 = vsub.s32 0, %v615
      %v617 = vrot.slane %v612, %v616
      %v619 = vadd.f32 %v580, %v617
      %v620 = vadd.f32 %v581, %v617
      %v621 = vadd.f32 %v582, %v617
      %v622 = vadd.f32 %v583, %v617
      %v623 = vadd.f32 %v584, %v617
      %v624 = vadd.f32 %v585, %v617
      %v625 = vadd.f32 %v586, %v617
      %v626 = vadd.f32 %v587, %v617
      %v627 = vadd.f32 %v588, %v617
      %v628 = vadd.f32 %v589, %v617
      %v629 = vadd.f32 %v590, %v617
      %v630 = vadd.f32 %v591, %v617
      %v631 = vadd.f32 %v592, %v617
      %v632 = vadd.f32 %v593, %v617
      %v633 = vadd.f32 %v594, %v617
      %v634 = vadd.f32 %v595, %v617
      %v635 = vadd.f32 %v596, %v617
      %v636 = vadd.f32 %v597, %v617
      %v637 = vadd.f32 %v598, %v617
      %v638 = vadd.f32 %v599, %v617
      %v639 = vadd.f32 %v600, %v617
      %v640 = vadd.f32 %v601, %v617
      %v641 = vadd.f32 %v602, %v617
      %v642 = vadd.f32 %v603, %v617
      %v643 = vadd.f32 %v604, %v617
      %v644 = vadd.f32 %v605, %v617
      %v645 = vadd.f32 %v606, %v617
      %v646 = vadd.f32 %v607, %v617
      %v647 = vadd.f32 %v608, %v617
      %v648 = vadd.f32 %v609, %v617
      %v649 = vadd.f32 %v610, %v617
      %v650 = vadd.f32 %v611, %v617
      %v651 = vmax.f32 %v619, 0.0
      %v652 = vmax.f32 %v620, 0.0
      %v653 = vmax.f32 %v621, 0.0
      %v654 = vmax.f32 %v622, 0.0
      %v655 = vmax.f32 %v623, 0.0
      %v656 = vmax.f32 %v624, 0.0
      %v657 = vmax.f32 %v625, 0.0
      %v658 = vmax.f32 %v626, 0.0
      %v659 = vmax.f32 %v627, 0.0
      %v660 = vmax.f32 %v628, 0.0
      %v661 = vmax.f32 %v629, 0.0
      %v662 = vmax.f32 %v630, 0.0
      %v663 = vmax.f32 %v631, 0.0
      %v664 = vmax.f32 %v632, 0.0
      %v665 = vmax.f32 %v633, 0.0
      %v666 = vmax.f32 %v634, 0.0
      %v667 = vmax.f32 %v635, 0.0
      %v668 = vmax.f32 %v636, 0.0
      %v669 = vmax.f32 %v637, 0.0
      %v670 = vmax.f32 %v638, 0.0
      %v671 = vmax.f32 %v639, 0.0
      %v672 = vmax.f32 %v640, 0.0
      %v673 = vmax.f32 %v641, 0.0
      %v674 = vmax.f32 %v642, 0.0
      %v675 = vmax.f32 %v643, 0.0
      %v676 = vmax.f32 %v644, 0.0
      %v677 = vmax.f32 %v645, 0.0
      %v678 = vmax.f32 %v646, 0.0
      %v679 = vmax.f32 %v647, 0.0
      %v680 = vmax.f32 %v648, 0.0
      %v681 = vmax.f32 %v649, 0.0
      %v682 = vmax.f32 %v650, 0.0
      %vm683 = vcmask 27648
      %684 = vst.msk [vmem:[%s240] sm:$0xf] %vm683, 0
      %vm685 = vcmask 24576
      %686 = vst.msk [vmem:[%s240 + $0x4] sm:$0x1] %vm685, 0
      %687 = vst.msk [vmem:[%s240 + $0x50] sm:$0xf] %vm683, 0
      %688 = vst.msk [vmem:[%s240 + $0x54] sm:$0x1] %vm685, 0
      %689 = vst.msk [vmem:[%s240 + $0xa0] sm:$0xf] %vm683, 0
      %690 = vst.msk [vmem:[%s240 + $0xa4] sm:$0x1] %vm685, 0
      %691 = vst.msk [vmem:[%s240 + $0xf0] sm:$0xf] %vm683, 0
      %692 = vst.msk [vmem:[%s240 + $0xf4] sm:$0x1] %vm685, 0
      %s693 = scalar_lea.vmem %s240, 72
      %694 = vst.msk [vmem:[%s693] sm:$0xf] %vm683, 0
      %695 = vst.msk [vmem:[%s693 + $0x4] sm:$0x1] %vm685, 0
      %696 = vst.msk [vmem:[%s693 + $0x50] sm:$0xf] %vm683, 0
      %697 = vst.msk [vmem:[%s693 + $0x54] sm:$0x1] %vm685, 0
      %698 = vst.msk [vmem:[%s693 + $0xa0] sm:$0xf] %vm683, 0
      %699 = vst.msk [vmem:[%s693 + $0xa4] sm:$0x1] %vm685, 0
      %700 = vst.msk [vmem:[%s693 + $0xf0] sm:$0xf] %vm683, 0
      %701 = vst.msk [vmem:[%s693 + $0xf4] sm:$0x1] %vm685, 0
      %s702 = scalar_lea.vmem %s240, 8
      %vm703 = vcmask 24576
      %vm704 = vsmask.f32 256
      %vm705 = vmand %vm703, %vm704
      %v706 = vld [vmem:[%s702] sm:$0x1]
      %v707 = vsel %vm705, 0, %v706
      %708 = vst [vmem:[%s702] sm:$0x1] %v707
      %v709 = vld [vmem:[%s702 + $0x8] sm:$0x1]
      %v710 = vsel %vm705, 0, %v709
      %711 = vst [vmem:[%s702 + $0x8] sm:$0x1] %v710
      %v712 = vld [vmem:[%s702 + $0x10] sm:$0x1]
      %v713 = vsel %vm705, 0, %v712
      %714 = vst [vmem:[%s702 + $0x10] sm:$0x1] %v713
      %v715 = vld [vmem:[%s702 + $0x18] sm:$0x1]
      %v716 = vsel %vm705, 0, %v715
      %717 = vst [vmem:[%s702 + $0x18] sm:$0x1] %v716
      %v718 = vld [vmem:[%s702 + $0x20] sm:$0x1]
      %v719 = vsel %vm705, 0, %v718
      %720 = vst [vmem:[%s702 + $0x20] sm:$0x1] %v719
      %v721 = vld [vmem:[%s702 + $0x28] sm:$0x1]
      %v722 = vsel %vm705, 0, %v721
      %723 = vst [vmem:[%s702 + $0x28] sm:$0x1] %v722
      %v724 = vld [vmem:[%s702 + $0x30] sm:$0x1]
      %v725 = vsel %vm705, 0, %v724
      %726 = vst [vmem:[%s702 + $0x30] sm:$0x1] %v725
      %v727 = vld [vmem:[%s702 + $0x38] sm:$0x1]
      %v728 = vsel %vm705, 0, %v727
      %729 = vst [vmem:[%s702 + $0x38] sm:$0x1] %v728
      %v730 = vld [vmem:[%s702 + $0x50] sm:$0x1]
      %v731 = vsel %vm705, 0, %v730
      %732 = vst [vmem:[%s702 + $0x50] sm:$0x1] %v731
      %v733 = vld [vmem:[%s702 + $0x58] sm:$0x1]
      %v734 = vsel %vm705, 0, %v733
      %735 = vst [vmem:[%s702 + $0x58] sm:$0x1] %v734
      %v736 = vld [vmem:[%s702 + $0x60] sm:$0x1]
      %v737 = vsel %vm705, 0, %v736
      %738 = vst [vmem:[%s702 + $0x60] sm:$0x1] %v737
      %v739 = vld [vmem:[%s702 + $0x68] sm:$0x1]
      %v740 = vsel %vm705, 0, %v739
      %741 = vst [vmem:[%s702 + $0x68] sm:$0x1] %v740
      %v742 = vld [vmem:[%s702 + $0x70] sm:$0x1]
      %v743 = vsel %vm705, 0, %v742
      %744 = vst [vmem:[%s702 + $0x70] sm:$0x1] %v743
      %v745 = vld [vmem:[%s702 + $0x78] sm:$0x1]
      %v746 = vsel %vm705, 0, %v745
      %747 = vst [vmem:[%s702 + $0x78] sm:$0x1] %v746
      %v748 = vld [vmem:[%s702 + $0x80] sm:$0x1]
      %v749 = vsel %vm705, 0, %v748
      %750 = vst [vmem:[%s702 + $0x80] sm:$0x1] %v749
      %v751 = vld [vmem:[%s702 + $0x88] sm:$0x1]
      %v752 = vsel %vm705, 0, %v751
      %753 = vst [vmem:[%s702 + $0x88] sm:$0x1] %v752
      %v754 = vld [vmem:[%s702 + $0xa0] sm:$0x1]
      %v755 = vsel %vm705, 0, %v754
      %756 = vst [vmem:[%s702 + $0xa0] sm:$0x1] %v755
      %v757 = vld [vmem:[%s702 + $0xa8] sm:$0x1]
      %v758 = vsel %vm705, 0, %v757
      %759 = vst [vmem:[%s702 + $0xa8] sm:$0x1] %v758
      %v760 = vld [vmem:[%s702 + $0xb0] sm:$0x1]
      %v761 = vsel %vm705, 0, %v760
      %762 = vst [vmem:[%s702 + $0xb0] sm:$0x1] %v761
      %v763 = vld [vmem:[%s702 + $0xb8] sm:$0x1]
      %v764 = vsel %vm705, 0, %v763
      %765 = vst [vmem:[%s702 + $0xb8] sm:$0x1] %v764
      %v766 = vld [vmem:[%s702 + $0xc0] sm:$0x1]
      %v767 = vsel %vm705, 0, %v766
      %768 = vst [vmem:[%s702 + $0xc0] sm:$0x1] %v767
      %v769 = vld [vmem:[%s702 + $0xc8] sm:$0x1]
      %v770 = vsel %vm705, 0, %v769
      %771 = vst [vmem:[%s702 + $0xc8] sm:$0x1] %v770
      %v772 = vld [vmem:[%s702 + $0xd0] sm:$0x1]
      %v773 = vsel %vm705, 0, %v772
      %774 = vst [vmem:[%s702 + $0xd0] sm:$0x1] %v773
      %v775 = vld [vmem:[%s702 + $0xd8] sm:$0x1]
      %v776 = vsel %vm705, 0, %v775
      %777 = vst [vmem:[%s702 + $0xd8] sm:$0x1] %v776
      %v778 = vld [vmem:[%s702 + $0xf0] sm:$0x1]
      %v779 = vsel %vm705, 0, %v778
      %780 = vst [vmem:[%s702 + $0xf0] sm:$0x1] %v779
      %v781 = vld [vmem:[%s702 + $0xf8] sm:$0x1]
      %v782 = vsel %vm705, 0, %v781
      %783 = vst [vmem:[%s702 + $0xf8] sm:$0x1] %v782
      %v784 = vld [vmem:[%s702 + $0x100] sm:$0x1]
      %v785 = vsel %vm705, 0, %v784
      %786 = vst [vmem:[%s702 + $0x100] sm:$0x1] %v785
      %v787 = vld [vmem:[%s702 + $0x108] sm:$0x1]
      %v788 = vsel %vm705, 0, %v787
      %789 = vst [vmem:[%s702 + $0x108] sm:$0x1] %v788
      %v790 = vld [vmem:[%s702 + $0x110] sm:$0x1]
      %v791 = vsel %vm705, 0, %v790
      %792 = vst [vmem:[%s702 + $0x110] sm:$0x1] %v791
      %v793 = vld [vmem:[%s702 + $0x118] sm:$0x1]
      %v794 = vsel %vm705, 0, %v793
      %795 = vst [vmem:[%s702 + $0x118] sm:$0x1] %v794
      %v796 = vld [vmem:[%s702 + $0x120] sm:$0x1]
      %v797 = vsel %vm705, 0, %v796
      %798 = vst [vmem:[%s702 + $0x120] sm:$0x1] %v797
      %v799 = vld [vmem:[%s702 + $0x128] sm:$0x1]
      %v800 = vsel %vm705, 0, %v799
      %801 = vst [vmem:[%s702 + $0x128] sm:$0x1] %v800
      %vm802 = vsmask.f32 7938
      %vm803 = vmand %vm703, %vm802
      %v804 = vld [vmem:[%s702 + $0x4] sm:$0x1]
      %v805 = vsel %vm803, 0, %v804
      %806 = vst [vmem:[%s702 + $0x4] sm:$0x1] %v805
      %v807 = vld [vmem:[%s702 + $0xc] sm:$0x1]
      %v808 = vsel %vm803, 0, %v807
      %809 = vst [vmem:[%s702 + $0xc] sm:$0x1] %v808
      %v810 = vld [vmem:[%s702 + $0x14] sm:$0x1]
      %v811 = vsel %vm803, 0, %v810
      %812 = vst [vmem:[%s702 + $0x14] sm:$0x1] %v811
      %v813 = vld [vmem:[%s702 + $0x1c] sm:$0x1]
      %v814 = vsel %vm803, 0, %v813
      %815 = vst [vmem:[%s702 + $0x1c] sm:$0x1] %v814
      %v816 = vld [vmem:[%s702 + $0x24] sm:$0x1]
      %v817 = vsel %vm803, 0, %v816
      %818 = vst [vmem:[%s702 + $0x24] sm:$0x1] %v817
      %v819 = vld [vmem:[%s702 + $0x2c] sm:$0x1]
      %v820 = vsel %vm803, 0, %v819
      %821 = vst [vmem:[%s702 + $0x2c] sm:$0x1] %v820
      %v822 = vld [vmem:[%s702 + $0x34] sm:$0x1]
      %v823 = vsel %vm803, 0, %v822
      %824 = vst [vmem:[%s702 + $0x34] sm:$0x1] %v823
      %v825 = vld [vmem:[%s702 + $0x3c] sm:$0x1]
      %v826 = vsel %vm803, 0, %v825
      %827 = vst [vmem:[%s702 + $0x3c] sm:$0x1] %v826
      %v828 = vld [vmem:[%s702 + $0x54] sm:$0x1]
      %v829 = vsel %vm803, 0, %v828
      %830 = vst [vmem:[%s702 + $0x54] sm:$0x1] %v829
      %v831 = vld [vmem:[%s702 + $0x5c] sm:$0x1]
      %v832 = vsel %vm803, 0, %v831
      %833 = vst [vmem:[%s702 + $0x5c] sm:$0x1] %v832
      %v834 = vld [vmem:[%s702 + $0x64] sm:$0x1]
      %v835 = vsel %vm803, 0, %v834
      %836 = vst [vmem:[%s702 + $0x64] sm:$0x1] %v835
      %v837 = vld [vmem:[%s702 + $0x6c] sm:$0x1]
      %v838 = vsel %vm803, 0, %v837
      %839 = vst [vmem:[%s702 + $0x6c] sm:$0x1] %v838
      %v840 = vld [vmem:[%s702 + $0x74] sm:$0x1]
      %v841 = vsel %vm803, 0, %v840
      %842 = vst [vmem:[%s702 + $0x74] sm:$0x1] %v841
      %v843 = vld [vmem:[%s702 + $0x7c] sm:$0x1]
      %v844 = vsel %vm803, 0, %v843
      %845 = vst [vmem:[%s702 + $0x7c] sm:$0x1] %v844
      %v846 = vld [vmem:[%s702 + $0x84] sm:$0x1]
      %v847 = vsel %vm803, 0, %v846
      %848 = vst [vmem:[%s702 + $0x84] sm:$0x1] %v847
      %v849 = vld [vmem:[%s702 + $0x8c] sm:$0x1]
      %v850 = vsel %vm803, 0, %v849
      %851 = vst [vmem:[%s702 + $0x8c] sm:$0x1] %v850
      %v852 = vld [vmem:[%s702 + $0xa4] sm:$0x1]
      %v853 = vsel %vm803, 0, %v852
      %854 = vst [vmem:[%s702 + $0xa4] sm:$0x1] %v853
      %v855 = vld [vmem:[%s702 + $0xac] sm:$0x1]
      %v856 = vsel %vm803, 0, %v855
      %857 = vst [vmem:[%s702 + $0xac] sm:$0x1] %v856
      %v858 = vld [vmem:[%s702 + $0xb4] sm:$0x1]
      %v859 = vsel %vm803, 0, %v858
      %860 = vst [vmem:[%s702 + $0xb4] sm:$0x1] %v859
      %v861 = vld [vmem:[%s702 + $0xbc] sm:$0x1]
      %v862 = vsel %vm803, 0, %v861
      %863 = vst [vmem:[%s702 + $0xbc] sm:$0x1] %v862
      %v864 = vld [vmem:[%s702 + $0xc4] sm:$0x1]
      %v865 = vsel %vm803, 0, %v864
      %866 = vst [vmem:[%s702 + $0xc4] sm:$0x1] %v865
      %v867 = vld [vmem:[%s702 + $0xcc] sm:$0x1]
      %v868 = vsel %vm803, 0, %v867
      %869 = vst [vmem:[%s702 + $0xcc] sm:$0x1] %v868
      %v870 = vld [vmem:[%s702 + $0xd4] sm:$0x1]
      %v871 = vsel %vm803, 0, %v870
      %872 = vst [vmem:[%s702 + $0xd4] sm:$0x1] %v871
      %v873 = vld [vmem:[%s702 + $0xdc] sm:$0x1]
      %v874 = vsel %vm803, 0, %v873
      %875 = vst [vmem:[%s702 + $0xdc] sm:$0x1] %v874
      %v876 = vld [vmem:[%s702 + $0xf4] sm:$0x1]
      %v877 = vsel %vm803, 0, %v876
      %878 = vst [vmem:[%s702 + $0xf4] sm:$0x1] %v877
      %v879 = vld [vmem:[%s702 + $0xfc] sm:$0x1]
      %v880 = vsel %vm803, 0, %v879
      %881 = vst [vmem:[%s702 + $0xfc] sm:$0x1] %v880
      %v882 = vld [vmem:[%s702 + $0x104] sm:$0x1]
      %v883 = vsel %vm803, 0, %v882
      %884 = vst [vmem:[%s702 + $0x104] sm:$0x1] %v883
      %v885 = vld [vmem:[%s702 + $0x10c] sm:$0x1]
      %v886 = vsel %vm803, 0, %v885
      %887 = vst [vmem:[%s702 + $0x10c] sm:$0x1] %v886
      %v888 = vld [vmem:[%s702 + $0x114] sm:$0x1]
      %v889 = vsel %vm803, 0, %v888
      %890 = vst [vmem:[%s702 + $0x114] sm:$0x1] %v889
      %v891 = vld [vmem:[%s702 + $0x11c] sm:$0x1]
      %v892 = vsel %vm803, 0, %v891
      %893 = vst [vmem:[%s702 + $0x11c] sm:$0x1] %v892
      %v894 = vld [vmem:[%s702 + $0x124] sm:$0x1]
      %v895 = vsel %vm803, 0, %v894
      %896 = vst [vmem:[%s702 + $0x124] sm:$0x1] %v895
      %v897 = vld [vmem:[%s702 + $0x12c] sm:$0x1]
      %v898 = vsel %vm803, 0, %v897
      %899 = vst [vmem:[%s702 + $0x12c] sm:$0x1] %v898
      %v900 = vpack.c.bf16 %v651, %v651
      %v901 = vpack.c.bf16 %v652, %v652
      %v902 = vpack.c.bf16 %v653, %v653
      %v903 = vpack.c.bf16 %v654, %v654
      %v904 = vpack.c.bf16 %v655, %v655
      %v905 = vpack.c.bf16 %v656, %v656
      %v906 = vpack.c.bf16 %v657, %v657
      %v907 = vpack.c.bf16 %v658, %v658
      %v908 = vpack.c.bf16 %v659, %v659
      %v909 = vpack.c.bf16 %v660, %v660
      %v910 = vpack.c.bf16 %v661, %v661
      %v911 = vpack.c.bf16 %v662, %v662
      %v912 = vpack.c.bf16 %v663, %v663
      %v913 = vpack.c.bf16 %v664, %v664
      %v914 = vpack.c.bf16 %v665, %v665
      %v915 = vpack.c.bf16 %v666, %v666
      %v916 = vpack.c.bf16 %v667, %v667
      %v917 = vpack.c.bf16 %v668, %v668
      %v918 = vpack.c.bf16 %v669, %v669
      %v919 = vpack.c.bf16 %v670, %v670
      %v920 = vpack.c.bf16 %v671, %v671
      %v921 = vpack.c.bf16 %v672, %v672
      %v922 = vpack.c.bf16 %v673, %v673
      %v923 = vpack.c.bf16 %v674, %v674
      %v924 = vpack.c.bf16 %v675, %v675
      %v925 = vpack.c.bf16 %v676, %v676
      %v926 = vpack.c.bf16 %v677, %v677
      %v927 = vpack.c.bf16 %v678, %v678
      %v928 = vpack.c.bf16 %v679, %v679
      %v929 = vpack.c.bf16 %v680, %v680
      %v930 = vpack.c.bf16 %v681, %v681
      %v931 = vpack.c.bf16 %v682, %v682
      %v964 = vunpack.c.l.b16 %v900
      %v965 = vunpack.c.l.b16 %v901
      %v966 = vunpack.c.l.b16 %v902
      %v967 = vunpack.c.l.b16 %v903
      %v968 = vunpack.c.l.b16 %v904
      %v969 = vunpack.c.l.b16 %v905
      %v970 = vunpack.c.l.b16 %v906
      %v971 = vunpack.c.l.b16 %v907
      %v972 = vunpack.c.l.b16 %v908
      %v973 = vunpack.c.l.b16 %v909
      %v974 = vunpack.c.l.b16 %v910
      %v975 = vunpack.c.l.b16 %v911
      %v976 = vunpack.c.l.b16 %v912
      %v977 = vunpack.c.l.b16 %v913
      %v978 = vunpack.c.l.b16 %v914
      %v979 = vunpack.c.l.b16 %v915
      %v980 = vunpack.c.l.b16 %v916
      %v981 = vunpack.c.l.b16 %v917
      %v982 = vunpack.c.l.b16 %v918
      %v983 = vunpack.c.l.b16 %v919
      %v984 = vunpack.c.l.b16 %v920
      %v985 = vunpack.c.l.b16 %v921
      %v986 = vunpack.c.l.b16 %v922
      %v987 = vunpack.c.l.b16 %v923
      %v988 = vunpack.c.l.b16 %v924
      %v989 = vunpack.c.l.b16 %v925
      %v990 = vunpack.c.l.b16 %v926
      %v991 = vunpack.c.l.b16 %v927
      %v992 = vunpack.c.l.b16 %v928
      %v993 = vunpack.c.l.b16 %v929
      %v994 = vunpack.c.l.b16 %v930
      %v995 = vunpack.c.l.b16 %v931
      %v996 = vpack.c.b16 %v964, %v964
      %v997 = vpack.c.b16 %v965, %v965
      %v998 = vpack.c.b16 %v966, %v966
      %v999 = vpack.c.b16 %v967, %v967
      %v1000 = vpack.c.b16 %v968, %v968
      %v1001 = vpack.c.b16 %v969, %v969
      %v1002 = vpack.c.b16 %v970, %v970
      %v1003 = vpack.c.b16 %v971, %v971
      %v1004 = vpack.c.b16 %v972, %v972
      %v1005 = vpack.c.b16 %v973, %v973
      %v1006 = vpack.c.b16 %v974, %v974
      %v1007 = vpack.c.b16 %v975, %v975
      %v1008 = vpack.c.b16 %v976, %v976
      %v1009 = vpack.c.b16 %v977, %v977
      %v1010 = vpack.c.b16 %v978, %v978
      %v1011 = vpack.c.b16 %v979, %v979
      %v1012 = vpack.c.b16 %v980, %v980
      %v1013 = vpack.c.b16 %v981, %v981
      %v1014 = vpack.c.b16 %v982, %v982
      %v1015 = vpack.c.b16 %v983, %v983
      %v1016 = vpack.c.b16 %v984, %v984
      %v1017 = vpack.c.b16 %v985, %v985
      %v1018 = vpack.c.b16 %v986, %v986
      %v1019 = vpack.c.b16 %v987, %v987
      %v1020 = vpack.c.b16 %v988, %v988
      %v1021 = vpack.c.b16 %v989, %v989
      %v1022 = vpack.c.b16 %v990, %v990
      %v1023 = vpack.c.b16 %v991, %v991
      %v1024 = vpack.c.b16 %v992, %v992
      %v1025 = vpack.c.b16 %v993, %v993
      %v1026 = vpack.c.b16 %v994, %v994
      %v1027 = vpack.c.b16 %v995, %v995
      %v1029 = vshrl.u32 %v996, 16
      %v1031 = vrot.slane %v1029, 7
      %v1032 = vshll.u32 %v996, 16
      %v1034 = vor.u32 %v1031, %v1032
      %v1035 = vrot.slane %v1031, 4
      %v1037 = vshrl.u32 %v997, 16
      %v1039 = vrot.slane %v1037, 7
      %v1040 = vshll.u32 %v997, 16
      %v1042 = vor.u32 %v1039, %v1040
      %v1043 = vrot.slane %v1039, 4
      %v1045 = vshrl.u32 %v998, 16
      %v1047 = vrot.slane %v1045, 7
      %v1048 = vshll.u32 %v998, 16
      %v1050 = vor.u32 %v1047, %v1048
      %v1051 = vrot.slane %v1047, 4
      %v1053 = vshrl.u32 %v999, 16
      %v1055 = vrot.slane %v1053, 7
      %v1056 = vshll.u32 %v999, 16
      %v1058 = vor.u32 %v1055, %v1056
      %v1059 = vrot.slane %v1055, 4
      %v1061 = vshrl.u32 %v1000, 16
      %v1063 = vrot.slane %v1061, 7
      %v1064 = vshll.u32 %v1000, 16
      %v1066 = vor.u32 %v1063, %v1064
      %v1067 = vrot.slane %v1063, 4
      %v1069 = vshrl.u32 %v1001, 16
      %v1071 = vrot.slane %v1069, 7
      %v1072 = vshll.u32 %v1001, 16
      %v1074 = vor.u32 %v1071, %v1072
      %v1075 = vrot.slane %v1071, 4
      %v1077 = vshrl.u32 %v1002, 16
      %v1079 = vrot.slane %v1077, 7
      %v1080 = vshll.u32 %v1002, 16
      %v1082 = vor.u32 %v1079, %v1080
      %v1083 = vrot.slane %v1079, 4
      %v1085 = vshrl.u32 %v1003, 16
      %v1087 = vrot.slane %v1085, 7
      %v1088 = vshll.u32 %v1003, 16
      %v1090 = vor.u32 %v1087, %v1088
      %v1091 = vrot.slane %v1087, 4
      %v1093 = vshrl.u32 %v1004, 16
      %v1095 = vrot.slane %v1093, 7
      %v1096 = vshll.u32 %v1004, 16
      %v1098 = vor.u32 %v1095, %v1096
      %v1099 = vrot.slane %v1095, 4
      %v1101 = vshrl.u32 %v1005, 16
      %v1103 = vrot.slane %v1101, 7
      %v1104 = vshll.u32 %v1005, 16
      %v1106 = vor.u32 %v1103, %v1104
      %v1107 = vrot.slane %v1103, 4
      %v1109 = vshrl.u32 %v1006, 16
      %v1111 = vrot.slane %v1109, 7
      %v1112 = vshll.u32 %v1006, 16
      %v1114 = vor.u32 %v1111, %v1112
      %v1115 = vrot.slane %v1111, 4
      %v1117 = vshrl.u32 %v1007, 16
      %v1119 = vrot.slane %v1117, 7
      %v1120 = vshll.u32 %v1007, 16
      %v1122 = vor.u32 %v1119, %v1120
      %v1123 = vrot.slane %v1119, 4
      %v1125 = vshrl.u32 %v1008, 16
      %v1127 = vrot.slane %v1125, 7
      %v1128 = vshll.u32 %v1008, 16
      %v1130 = vor.u32 %v1127, %v1128
      %v1131 = vrot.slane %v1127, 4
      %v1133 = vshrl.u32 %v1009, 16
      %v1135 = vrot.slane %v1133, 7
      %v1136 = vshll.u32 %v1009, 16
      %v1138 = vor.u32 %v1135, %v1136
      %v1139 = vrot.slane %v1135, 4
      %v1141 = vshrl.u32 %v1010, 16
      %v1143 = vrot.slane %v1141, 7
      %v1144 = vshll.u32 %v1010, 16
      %v1146 = vor.u32 %v1143, %v1144
      %v1147 = vrot.slane %v1143, 4
      %v1149 = vshrl.u32 %v1011, 16
      %v1151 = vrot.slane %v1149, 7
      %v1152 = vshll.u32 %v1011, 16
      %v1154 = vor.u32 %v1151, %v1152
      %v1155 = vrot.slane %v1151, 4
      %v1157 = vshrl.u32 %v1012, 16
      %v1159 = vrot.slane %v1157, 7
      %v1160 = vshll.u32 %v1012, 16
      %v1162 = vor.u32 %v1159, %v1160
      %v1163 = vrot.slane %v1159, 4
      %v1165 = vshrl.u32 %v1013, 16
      %v1167 = vrot.slane %v1165, 7
      %v1168 = vshll.u32 %v1013, 16
      %v1170 = vor.u32 %v1167, %v1168
      %v1171 = vrot.slane %v1167, 4
      %v1173 = vshrl.u32 %v1014, 16
      %v1175 = vrot.slane %v1173, 7
      %v1176 = vshll.u32 %v1014, 16
      %v1178 = vor.u32 %v1175, %v1176
      %v1179 = vrot.slane %v1175, 4
      %v1181 = vshrl.u32 %v1015, 16
      %v1183 = vrot.slane %v1181, 7
      %v1184 = vshll.u32 %v1015, 16
      %v1186 = vor.u32 %v1183, %v1184
      %v1187 = vrot.slane %v1183, 4
      %v1189 = vshrl.u32 %v1016, 16
      %v1191 = vrot.slane %v1189, 7
      %v1192 = vshll.u32 %v1016, 16
      %v1194 = vor.u32 %v1191, %v1192
      %v1195 = vrot.slane %v1191, 4
      %v1197 = vshrl.u32 %v1017, 16
      %v1199 = vrot.slane %v1197, 7
      %v1200 = vshll.u32 %v1017, 16
      %v1202 = vor.u32 %v1199, %v1200
      %v1203 = vrot.slane %v1199, 4
      %v1205 = vshrl.u32 %v1018, 16
      %v1207 = vrot.slane %v1205, 7
      %v1208 = vshll.u32 %v1018, 16
      %v1210 = vor.u32 %v1207, %v1208
      %v1211 = vrot.slane %v1207, 4
      %v1213 = vshrl.u32 %v1019, 16
      %v1215 = vrot.slane %v1213, 7
      %v1216 = vshll.u32 %v1019, 16
      %v1218 = vor.u32 %v1215, %v1216
      %v1219 = vrot.slane %v1215, 4
      %v1221 = vshrl.u32 %v1020, 16
      %v1223 = vrot.slane %v1221, 7
      %v1224 = vshll.u32 %v1020, 16
      %v1226 = vor.u32 %v1223, %v1224
      %v1227 = vrot.slane %v1223, 4
      %v1229 = vshrl.u32 %v1021, 16
      %v1231 = vrot.slane %v1229, 7
      %v1232 = vshll.u32 %v1021, 16
      %v1234 = vor.u32 %v1231, %v1232
      %v1235 = vrot.slane %v1231, 4
      %v1237 = vshrl.u32 %v1022, 16
      %v1239 = vrot.slane %v1237, 7
      %v1240 = vshll.u32 %v1022, 16
      %v1242 = vor.u32 %v1239, %v1240
      %v1243 = vrot.slane %v1239, 4
      %v1245 = vshrl.u32 %v1023, 16
      %v1247 = vrot.slane %v1245, 7
      %v1248 = vshll.u32 %v1023, 16
      %v1250 = vor.u32 %v1247, %v1248
      %v1251 = vrot.slane %v1247, 4
      %v1253 = vshrl.u32 %v1024, 16
      %v1255 = vrot.slane %v1253, 7
      %v1256 = vshll.u32 %v1024, 16
      %v1258 = vor.u32 %v1255, %v1256
      %v1259 = vrot.slane %v1255, 4
      %v1261 = vshrl.u32 %v1025, 16
      %v1263 = vrot.slane %v1261, 7
      %v1264 = vshll.u32 %v1025, 16
      %v1266 = vor.u32 %v1263, %v1264
      %v1267 = vrot.slane %v1263, 4
      %v1269 = vshrl.u32 %v1026, 16
      %v1271 = vrot.slane %v1269, 7
      %v1272 = vshll.u32 %v1026, 16
      %v1274 = vor.u32 %v1271, %v1272
      %v1275 = vrot.slane %v1271, 4
      %v1277 = vshrl.u32 %v1027, 16
      %v1279 = vrot.slane %v1277, 7
      %v1280 = vshll.u32 %v1027, 16
      %v1282 = vor.u32 %v1279, %v1280
      %v1283 = vrot.slane %v1279, 4
      %vm1348 = vcmask 27648
      %vm1349 = vmand %vm1348, %vm802
      %v1350 = vld [vmem:[%s702] sm:$0xf]
      %v1351 = vsel %vm1349, %v1034, %v1350
      %1352 = vst [vmem:[%s702] sm:$0xf] %v1351
      %v1353 = vld [vmem:[%s702 + $0x4] sm:$0x1]
      %v1354 = vsel %vm705, %v1035, %v1353
      %1355 = vst [vmem:[%s702 + $0x4] sm:$0x1] %v1354
      %v1356 = vld [vmem:[%s702 + $0x8] sm:$0xf]
      %v1357 = vsel %vm1349, %v1042, %v1356
      %1358 = vst [vmem:[%s702 + $0x8] sm:$0xf] %v1357
      %v1359 = vld [vmem:[%s702 + $0xc] sm:$0x1]
      %v1360 = vsel %vm705, %v1043, %v1359
      %1361 = vst [vmem:[%s702 + $0xc] sm:$0x1] %v1360
      %v1362 = vld [vmem:[%s702 + $0x10] sm:$0xf]
      %v1363 = vsel %vm1349, %v1050, %v1362
      %1364 = vst [vmem:[%s702 + $0x10] sm:$0xf] %v1363
      %v1365 = vld [vmem:[%s702 + $0x14] sm:$0x1]
      %v1366 = vsel %vm705, %v1051, %v1365
      %1367 = vst [vmem:[%s702 + $0x14] sm:$0x1] %v1366
      %v1368 = vld [vmem:[%s702 + $0x18] sm:$0xf]
      %v1369 = vsel %vm1349, %v1058, %v1368
      %1370 = vst [vmem:[%s702 + $0x18] sm:$0xf] %v1369
      %v1371 = vld [vmem:[%s702 + $0x1c] sm:$0x1]
      %v1372 = vsel %vm705, %v1059, %v1371
      %1373 = vst [vmem:[%s702 + $0x1c] sm:$0x1] %v1372
      %v1374 = vld [vmem:[%s702 + $0x20] sm:$0xf]
      %v1375 = vsel %vm1349, %v1066, %v1374
      %1376 = vst [vmem:[%s702 + $0x20] sm:$0xf] %v1375
      %v1377 = vld [vmem:[%s702 + $0x24] sm:$0x1]
      %v1378 = vsel %vm705, %v1067, %v1377
      %1379 = vst [vmem:[%s702 + $0x24] sm:$0x1] %v1378
      %v1380 = vld [vmem:[%s702 + $0x28] sm:$0xf]
      %v1381 = vsel %vm1349, %v1074, %v1380
      %1382 = vst [vmem:[%s702 + $0x28] sm:$0xf] %v1381
      %v1383 = vld [vmem:[%s702 + $0x2c] sm:$0x1]
      %v1384 = vsel %vm705, %v1075, %v1383
      %1385 = vst [vmem:[%s702 + $0x2c] sm:$0x1] %v1384
      %v1386 = vld [vmem:[%s702 + $0x30] sm:$0xf]
      %v1387 = vsel %vm1349, %v1082, %v1386
      %1388 = vst [vmem:[%s702 + $0x30] sm:$0xf] %v1387
      %v1389 = vld [vmem:[%s702 + $0x34] sm:$0x1]
      %v1390 = vsel %vm705, %v1083, %v1389
      %1391 = vst [vmem:[%s702 + $0x34] sm:$0x1] %v1390
      %v1392 = vld [vmem:[%s702 + $0x38] sm:$0xf]
      %v1393 = vsel %vm1349, %v1090, %v1392
      %1394 = vst [vmem:[%s702 + $0x38] sm:$0xf] %v1393
      %v1395 = vld [vmem:[%s702 + $0x3c] sm:$0x1]
      %v1396 = vsel %vm705, %v1091, %v1395
      %1397 = vst [vmem:[%s702 + $0x3c] sm:$0x1] %v1396
      %v1398 = vld [vmem:[%s702 + $0x50] sm:$0xf]
      %v1399 = vsel %vm1349, %v1098, %v1398
      %1400 = vst [vmem:[%s702 + $0x50] sm:$0xf] %v1399
      %v1401 = vld [vmem:[%s702 + $0x54] sm:$0x1]
      %v1402 = vsel %vm705, %v1099, %v1401
      %1403 = vst [vmem:[%s702 + $0x54] sm:$0x1] %v1402
      %v1404 = vld [vmem:[%s702 + $0x58] sm:$0xf]
      %v1405 = vsel %vm1349, %v1106, %v1404
      %1406 = vst [vmem:[%s702 + $0x58] sm:$0xf] %v1405
      %v1407 = vld [vmem:[%s702 + $0x5c] sm:$0x1]
      %v1408 = vsel %vm705, %v1107, %v1407
      %1409 = vst [vmem:[%s702 + $0x5c] sm:$0x1] %v1408
      %v1410 = vld [vmem:[%s702 + $0x60] sm:$0xf]
      %v1411 = vsel %vm1349, %v1114, %v1410
      %1412 = vst [vmem:[%s702 + $0x60] sm:$0xf] %v1411
      %v1413 = vld [vmem:[%s702 + $0x64] sm:$0x1]
      %v1414 = vsel %vm705, %v1115, %v1413
      %1415 = vst [vmem:[%s702 + $0x64] sm:$0x1] %v1414
      %v1416 = vld [vmem:[%s702 + $0x68] sm:$0xf]
      %v1417 = vsel %vm1349, %v1122, %v1416
      %1418 = vst [vmem:[%s702 + $0x68] sm:$0xf] %v1417
      %v1419 = vld [vmem:[%s702 + $0x6c] sm:$0x1]
      %v1420 = vsel %vm705, %v1123, %v1419
      %1421 = vst [vmem:[%s702 + $0x6c] sm:$0x1] %v1420
      %v1422 = vld [vmem:[%s702 + $0x70] sm:$0xf]
      %v1423 = vsel %vm1349, %v1130, %v1422
      %1424 = vst [vmem:[%s702 + $0x70] sm:$0xf] %v1423
      %v1425 = vld [vmem:[%s702 + $0x74] sm:$0x1]
      %v1426 = vsel %vm705, %v1131, %v1425
      %1427 = vst [vmem:[%s702 + $0x74] sm:$0x1] %v1426
      %v1428 = vld [vmem:[%s702 + $0x78] sm:$0xf]
      %v1429 = vsel %vm1349, %v1138, %v1428
      %1430 = vst [vmem:[%s702 + $0x78] sm:$0xf] %v1429
      %v1431 = vld [vmem:[%s702 + $0x7c] sm:$0x1]
      %v1432 = vsel %vm705, %v1139, %v1431
      %1433 = vst [vmem:[%s702 + $0x7c] sm:$0x1] %v1432
      %v1434 = vld [vmem:[%s702 + $0x80] sm:$0xf]
      %v1435 = vsel %vm1349, %v1146, %v1434
      %1436 = vst [vmem:[%s702 + $0x80] sm:$0xf] %v1435
      %v1437 = vld [vmem:[%s702 + $0x84] sm:$0x1]
      %v1438 = vsel %vm705, %v1147, %v1437
      %1439 = vst [vmem:[%s702 + $0x84] sm:$0x1] %v1438
      %v1440 = vld [vmem:[%s702 + $0x88] sm:$0xf]
      %v1441 = vsel %vm1349, %v1154, %v1440
      %1442 = vst [vmem:[%s702 + $0x88] sm:$0xf] %v1441
      %v1443 = vld [vmem:[%s702 + $0x8c] sm:$0x1]
      %v1444 = vsel %vm705, %v1155, %v1443
      %1445 = vst [vmem:[%s702 + $0x8c] sm:$0x1] %v1444
      %v1446 = vld [vmem:[%s702 + $0xa0] sm:$0xf]
      %v1447 = vsel %vm1349, %v1162, %v1446
      %1448 = vst [vmem:[%s702 + $0xa0] sm:$0xf] %v1447
      %v1449 = vld [vmem:[%s702 + $0xa4] sm:$0x1]
      %v1450 = vsel %vm705, %v1163, %v1449
      %1451 = vst [vmem:[%s702 + $0xa4] sm:$0x1] %v1450
      %v1452 = vld [vmem:[%s702 + $0xa8] sm:$0xf]
      %v1453 = vsel %vm1349, %v1170, %v1452
      %1454 = vst [vmem:[%s702 + $0xa8] sm:$0xf] %v1453
      %v1455 = vld [vmem:[%s702 + $0xac] sm:$0x1]
      %v1456 = vsel %vm705, %v1171, %v1455
      %1457 = vst [vmem:[%s702 + $0xac] sm:$0x1] %v1456
      %v1458 = vld [vmem:[%s702 + $0xb0] sm:$0xf]
      %v1459 = vsel %vm1349, %v1178, %v1458
      %1460 = vst [vmem:[%s702 + $0xb0] sm:$0xf] %v1459
      %v1461 = vld [vmem:[%s702 + $0xb4] sm:$0x1]
      %v1462 = vsel %vm705, %v1179, %v1461
      %1463 = vst [vmem:[%s702 + $0xb4] sm:$0x1] %v1462
      %v1464 = vld [vmem:[%s702 + $0xb8] sm:$0xf]
      %v1465 = vsel %vm1349, %v1186, %v1464
      %1466 = vst [vmem:[%s702 + $0xb8] sm:$0xf] %v1465
      %v1467 = vld [vmem:[%s702 + $0xbc] sm:$0x1]
      %v1468 = vsel %vm705, %v1187, %v1467
      %1469 = vst [vmem:[%s702 + $0xbc] sm:$0x1] %v1468
      %v1470 = vld [vmem:[%s702 + $0xc0] sm:$0xf]
      %v1471 = vsel %vm1349, %v1194, %v1470
      %1472 = vst [vmem:[%s702 + $0xc0] sm:$0xf] %v1471
      %v1473 = vld [vmem:[%s702 + $0xc4] sm:$0x1]
      %v1474 = vsel %vm705, %v1195, %v1473
      %1475 = vst [vmem:[%s702 + $0xc4] sm:$0x1] %v1474
      %v1476 = vld [vmem:[%s702 + $0xc8] sm:$0xf]
      %v1477 = vsel %vm1349, %v1202, %v1476
      %1478 = vst [vmem:[%s702 + $0xc8] sm:$0xf] %v1477
      %v1479 = vld [vmem:[%s702 + $0xcc] sm:$0x1]
      %v1480 = vsel %vm705, %v1203, %v1479
      %1481 = vst [vmem:[%s702 + $0xcc] sm:$0x1] %v1480
      %v1482 = vld [vmem:[%s702 + $0xd0] sm:$0xf]
      %v1483 = vsel %vm1349, %v1210, %v1482
      %1484 = vst [vmem:[%s702 + $0xd0] sm:$0xf] %v1483
      %v1485 = vld [vmem:[%s702 + $0xd4] sm:$0x1]
      %v1486 = vsel %vm705, %v1211, %v1485
      %1487 = vst [vmem:[%s702 + $0xd4] sm:$0x1] %v1486
      %v1488 = vld [vmem:[%s702 + $0xd8] sm:$0xf]
      %v1489 = vsel %vm1349, %v1218, %v1488
      %1490 = vst [vmem:[%s702 + $0xd8] sm:$0xf] %v1489
      %v1491 = vld [vmem:[%s702 + $0xdc] sm:$0x1]
      %v1492 = vsel %vm705, %v1219, %v1491
      %1493 = vst [vmem:[%s702 + $0xdc] sm:$0x1] %v1492
      %v1494 = vld [vmem:[%s702 + $0xf0] sm:$0xf]
      %v1495 = vsel %vm1349, %v1226, %v1494
      %1496 = vst [vmem:[%s702 + $0xf0] sm:$0xf] %v1495
      %v1497 = vld [vmem:[%s702 + $0xf4] sm:$0x1]
      %v1498 = vsel %vm705, %v1227, %v1497
      %1499 = vst [vmem:[%s702 + $0xf4] sm:$0x1] %v1498
      %v1500 = vld [vmem:[%s702 + $0xf8] sm:$0xf]
      %v1501 = vsel %vm1349, %v1234, %v1500
      %1502 = vst [vmem:[%s702 + $0xf8] sm:$0xf] %v1501
      %v1503 = vld [vmem:[%s702 + $0xfc] sm:$0x1]
      %v1504 = vsel %vm705, %v1235, %v1503
      %1505 = vst [vmem:[%s702 + $0xfc] sm:$0x1] %v1504
      %v1506 = vld [vmem:[%s702 + $0x100] sm:$0xf]
      %v1507 = vsel %vm1349, %v1242, %v1506
      %1508 = vst [vmem:[%s702 + $0x100] sm:$0xf] %v1507
      %v1509 = vld [vmem:[%s702 + $0x104] sm:$0x1]
      %v1510 = vsel %vm705, %v1243, %v1509
      %1511 = vst [vmem:[%s702 + $0x104] sm:$0x1] %v1510
      %v1512 = vld [vmem:[%s702 + $0x108] sm:$0xf]
      %v1513 = vsel %vm1349, %v1250, %v1512
      %1514 = vst [vmem:[%s702 + $0x108] sm:$0xf] %v1513
      %v1515 = vld [vmem:[%s702 + $0x10c] sm:$0x1]
      %v1516 = vsel %vm705, %v1251, %v1515
      %1517 = vst [vmem:[%s702 + $0x10c] sm:$0x1] %v1516
      %v1518 = vld [vmem:[%s702 + $0x110] sm:$0xf]
      %v1519 = vsel %vm1349, %v1258, %v1518
      %1520 = vst [vmem:[%s702 + $0x110] sm:$0xf] %v1519
      %v1521 = vld [vmem:[%s702 + $0x114] sm:$0x1]
      %v1522 = vsel %vm705, %v1259, %v1521
      %1523 = vst [vmem:[%s702 + $0x114] sm:$0x1] %v1522
      %v1524 = vld [vmem:[%s702 + $0x118] sm:$0xf]
      %v1525 = vsel %vm1349, %v1266, %v1524
      %1526 = vst [vmem:[%s702 + $0x118] sm:$0xf] %v1525
      %v1527 = vld [vmem:[%s702 + $0x11c] sm:$0x1]
      %v1528 = vsel %vm705, %v1267, %v1527
      %1529 = vst [vmem:[%s702 + $0x11c] sm:$0x1] %v1528
      %v1530 = vld [vmem:[%s702 + $0x120] sm:$0xf]
      %v1531 = vsel %vm1349, %v1274, %v1530
      %1532 = vst [vmem:[%s702 + $0x120] sm:$0xf] %v1531
      %v1533 = vld [vmem:[%s702 + $0x124] sm:$0x1]
      %v1534 = vsel %vm705, %v1275, %v1533
      %1535 = vst [vmem:[%s702 + $0x124] sm:$0x1] %v1534
      %v1536 = vld [vmem:[%s702 + $0x128] sm:$0xf]
      %v1537 = vsel %vm1349, %v1282, %v1536
      %1538 = vst [vmem:[%s702 + $0x128] sm:$0xf] %v1537
      %v1539 = vld [vmem:[%s702 + $0x12c] sm:$0x1]
      %v1540 = vsel %vm705, %v1283, %v1539
      %1541 = vst [vmem:[%s702 + $0x12c] sm:$0x1] %v1540
      %s1542 = smul.u32 4, %s20
      %p1543 = scmp.lt.s32.totalorder %s19, 1
      %s1544 = scalar_select %p1543, %s19, 1
      %p1545 = scmp.lt.s32.totalorder %s1542, 3
      %s1546 = scalar_select %p1545, %s1542, 3
      %s1547 = smul.addr %s1546, 20
      %s1548 = smul.addr %s1544, 80
      %s1549 = sadd.s32 %s1547, %s1548
      %s1550 = smul.addr %s1549, 4
      %s1551 = scalar_lea.vmem %s4, %s1550
      // Predicated region
      $region37: #{bottleneck_3d_forward.3} parent=35 // pred_check
        %p1552 = pneg %p138
      $region38: #{bottleneck_3d_forward.3} parent=35 // pred_check_branch
        %1554 = sbr.rel (%p1552) target = $region40
      $region39: #{bottleneck_3d_forward.3} parent=35 // pred_region
        %s1555 = smul.u32 4, %s20
      $region40: #{bottleneck_3d_forward.3} parent=35 // pred_fallthru
        _
    $region36: #{bottleneck_3d_forward.3} parent=5 // pred_fallthru
      _
    %p1556 = scmp.le.s32.totalorder 2, %s10
    // Predicated region
    $region41: #{bottleneck_3d_forward.3} parent=5 // pred_check
      %p1557 = pneg %p1556
    $region42: #{bottleneck_3d_forward.3} parent=5 // pred_check_branch
      %1559 = sbr.rel (%p1557) target = $region44
    $region43: #{bottleneck_3d_forward.3} parent=5 // pred_region
      %s1560 = ssub.s32 %s10, 2
      // Predicated region
      $region45: #{bottleneck_3d_forward.3} parent=43 // pred_check
        %p1561 = pneg %p144
      $region46: #{bottleneck_3d_forward.3} parent=43 // pred_check_branch
        %1563 = sbr.rel (%p1561) target = $region48
      $region47: #{bottleneck_3d_forward.3} parent=43 // pred_region
        %s1564 = smul.u32 4, %s22
        %p1565 = scmp.lt.s32.totalorder %s21, 1
        %s1566 = scalar_select %p1565, %s21, 1
        %p1567 = scmp.lt.s32.totalorder %s1564, 3
        %s1568 = scalar_select %p1567, %s1564, 3
        %s1569 = smul.addr %s1568, 20
        %s1570 = smul.addr %s1566, 80
        %s1571 = sadd.s32 %s1569, %s1570
        %s1572 = smul.addr %s1571, 4
        %s1573 = scalar_lea.vmem %s4, %s1572
      $region48: #{bottleneck_3d_forward.3} parent=43 // pred_fallthru
        _
    $region44: #{bottleneck_3d_forward.3} parent=5 // pred_fallthru
      _
  $region6: #{bottleneck_3d_forward.3} parent=0 // loop_footer
    %s14 = sadd.s32 1, %s10
  $region7: #{bottleneck_3d_forward.3} parent=0 // loop_footer_branch
    %9 = sbr.rel target = $region3
  $region8: #{bottleneck_3d_forward.3} parent=0 // loop_exit
    _

// kernel: bottleneck_3d_forward.4
$region0: #{bottleneck_3d_forward.4}
  #allocation0 [shape = 'u32[]', space=smem, size = 0x4, offset = 0x4, fixed_abs, tag = 'smem constant byte address 0x4 - core index']
  #allocation1 [shape = 'u32[144,128]{1,0:T(1,128)}', space=vmem, size = 0x12000, scoped, tag = 'internal scratch']
  %s0 = inlined_call_operand.vmem [shape: bf16[2,4,10,10,4], index: 0, kind: input, shape index: {}, may-alias: {0,1,2}]
  %s1 = inlined_call_operand.vmem [shape: bf16[2,4,10,10,4], index: 1, kind: input, shape index: {}, may-alias: {0,1,2}]
  %s2 = inlined_call_operand.vmem [shape: bf16[2,4,10,10,4], index: 2, kind: input, shape index: {}, may-alias: {0,1,2}]
  %s3 = inlined_call_operand.vmem [shape: bf16[3,3,12,4], index: 3, kind: input, shape index: {}]
  %s4 = inlined_call_operand.vmem [shape: f32[1,4], index: 4, kind: input, shape index: {}]
  %s5 = inlined_call_operand.vmem [shape: f32[1,4], index: 5, kind: input, shape index: {}]
  %s6 = inlined_call_operand.vmem [shape: bf16[2,4,8,8,4], index: 6, kind: output, shape index: {}]
  %s7 = sld [smem:[#allocation0]]
  $region57: #{bottleneck_3d_forward.4} parent=0
    _
  %s9 = ssub.s32 1, %s7
  %s10 = scalar_select 0, %s9, %s7
  loop: start=0, step=1, limit=10
  $region2: #{bottleneck_3d_forward.4} parent=0 // loop_pre_header
    _
  $region3: #{bottleneck_3d_forward.4} parent=0 // loop_header
    %s12 = sphi 0, %s16
    %p13 = scmp.ge.s32.totalorder %s12, 10
    %s19 = sphi 0, %s31
    %s20 = sphi 0, %s27
    %s21 = sphi 0, %s19
    %s22 = sphi 0, %s20
    %s23 = sphi 0, %s21
    %s24 = sphi 0, %s22
    %s42 = sphi 0, %s44
    %s45 = sphi 0, %s42
    %s46 = sphi 0, %s45
    %s62 = sphi 0, %s46
    %s70 = sphi 0, %s72
    %s73 = sphi 0, %s70
    %s74 = sphi 0, %s73
    %s90 = sphi 0, %s74
    %s104 = sphi 0, %s106
    %s107 = sphi 0, %s104
    %s108 = sphi 0, %s107
    %s124 = sphi 0, %s108
    %s128 = sphi 0, %s128
    %s130 = sphi 0, %s128
    %s131 = sphi 0, %s130
    %s145 = sphi 0, %s131
    %s149 = sphi 0, %s149
    %s151 = sphi 0, %s149
    %s152 = sphi 0, %s151
    %s166 = sphi 0, %s152
    %s170 = sphi 0, %s170
    %s172 = sphi 0, %s170
    %s173 = sphi 0, %s172
    %s187 = sphi 0, %s173
    %s195 = sphi 0, %s197
    %s198 = sphi 0, %s195
    %s199 = sphi 0, %s198
    %s215 = sphi 0, %s199
  $region4: #{bottleneck_3d_forward.4} parent=0 // loop_header_branch
    %15 = sbr.rel (%p13) target = $region8
  $region5: #{bottleneck_3d_forward.4} parent=0 // loop_body
    %s17 = ssub.s32 %s12, 1
    %s18 = ssub.s32 %s12, 2
    %s25 = sadd.s32 1, %s20
    %p26 = scmp.ge.s32.totalorder %s25, 4
    %s27 = scalar_select %p26, 0, %s25
    %s28 = sadd.s32 1, %s19
    %s29 = scalar_select %p26, %s28, %s19
    %p30 = scmp.ge.s32.totalorder %s29, 2
    %s31 = scalar_select %p30, 0, %s29
    %s32 = ssub.s32 %s20, 1
    %p33 = scmp.gt.s32.totalorder %s32, 0
    %s34 = scalar_select %p33, %s32, 0
    %s35 = ssub.s32 %s27, 1
    %p36 = scmp.gt.s32.totalorder %s35, 0
    %s37 = scalar_select %p36, %s35, 0
    %s38 = ssub.s32 %s19, %s31
    %s39 = ssub.s32 %s34, %s37
    %s40 = sor.u32 %s38, %s39
    %p41 = scmp.eq.s32.totalorder %s40, 0
    %s43 = sadd.s32 %s42, 1
    %s44 = scalar_select %p41, %s42, %s43
    %p47 = pneg %p41
    %p48 = scmp.eq.s32.totalorder %s12, 7
    %p49 = por %p47, %p48
    %p50 = scmp.ne.s32.totalorder %s42, %s45
    %p51 = scmp.eq.s32.totalorder %s12, 0
    %p52 = por %p50, %p51
    %p53 = scmp.ne.s32.totalorder %s42, %s45
    %p54 = scmp.eq.s32.totalorder %s17, 7
    %p55 = por %p53, %p54
    %p56 = scmp.ne.s32.totalorder %s45, %s46
    %p57 = scmp.eq.s32.totalorder %s17, 0
    %p58 = por %p56, %p57
    %p59 = scmp.ne.s32.totalorder %s45, %s46
    %p60 = scmp.eq.s32.totalorder %s18, 7
    %p61 = por %p59, %p60
    %p63 = scmp.ne.s32.totalorder %s46, %s62
    %p64 = scmp.eq.s32.totalorder %s18, 0
    %p65 = por %p63, %p64
    %s66 = ssub.s32 %s19, %s31
    %s67 = ssub.s32 %s20, %s27
    %s68 = sor.u32 %s66, %s67
    %p69 = scmp.eq.s32.totalorder %s68, 0
    %s71 = sadd.s32 %s70, 1
    %s72 = scalar_select %p69, %s70, %s71
    %p75 = pneg %p69
    %p76 = scmp.eq.s32.totalorder %s12, 7
    %p77 = por %p75, %p76
    %p78 = scmp.ne.s32.totalorder %s70, %s73
    %p79 = scmp.eq.s32.totalorder %s12, 0
    %p80 = por %p78, %p79
    %p81 = scmp.ne.s32.totalorder %s70, %s73
    %p82 = scmp.eq.s32.totalorder %s17, 7
    %p83 = por %p81, %p82
    %p84 = scmp.ne.s32.totalorder %s73, %s74
    %p85 = scmp.eq.s32.totalorder %s17, 0
    %p86 = por %p84, %p85
    %p87 = scmp.ne.s32.totalorder %s73, %s74
    %p88 = scmp.eq.s32.totalorder %s18, 7
    %p89 = por %p87, %p88
    %p91 = scmp.ne.s32.totalorder %s74, %s90
    %p92 = scmp.eq.s32.totalorder %s18, 0
    %p93 = por %p91, %p92
    %s94 = sadd.s32 %s20, 1
    %p95 = scmp.lt.s32.totalorder %s94, 3
    %s96 = scalar_select %p95, %s94, 3
    %s97 = sadd.s32 %s27, 1
    %p98 = scmp.lt.s32.totalorder %s97, 3
    %s99 = scalar_select %p98, %s97, 3
    %s100 = ssub.s32 %s19, %s31
    %s101 = ssub.s32 %s96, %s99
    %s102 = sor.u32 %s100, %s101
    %p103 = scmp.eq.s32.totalorder %s102, 0
    %s105 = sadd.s32 %s104, 1
    %s106 = scalar_select %p103, %s104, %s105
    %p109 = pneg %p103
    %p110 = scmp.eq.s32.totalorder %s12, 7
    %p111 = por %p109, %p110
    %p112 = scmp.ne.s32.totalorder %s104, %s107
    %p113 = scmp.eq.s32.totalorder %s12, 0
    %p114 = por %p112, %p113
    %p115 = scmp.ne.s32.totalorder %s104, %s107
    %p116 = scmp.eq.s32.totalorder %s17, 7
    %p117 = por %p115, %p116
    %p118 = scmp.ne.s32.totalorder %s107, %s108
    %p119 = scmp.eq.s32.totalorder %s17, 0
    %p120 = por %p118, %p119
    %p121 = scmp.ne.s32.totalorder %s107, %s108
    %p122 = scmp.eq.s32.totalorder %s18, 7
    %p123 = por %p121, %p122
    %p125 = scmp.ne.s32.totalorder %s108, %s124
    %p126 = scmp.eq.s32.totalorder %s18, 0
    %p127 = por %p125, %p126
    %s129 = sadd.s32 %s128, 1
    %p132 = scmp.eq.s32.totalorder %s12, 7
    %p133 = scmp.ne.s32.totalorder %s128, %s130
    %p134 = scmp.eq.s32.totalorder %s12, 0
    %p135 = por %p133, %p134
    %p136 = scmp.ne.s32.totalorder %s128, %s130
    %p137 = scmp.eq.s32.totalorder %s17, 7
    %p138 = por %p136, %p137
    %p139 = scmp.ne.s32.totalorder %s130, %s131
    %p140 = scmp.eq.s32.totalorder %s17, 0
    %p141 = por %p139, %p140
    %p142 = scmp.ne.s32.totalorder %s130, %s131
    %p143 = scmp.eq.s32.totalorder %s18, 7
    %p144 = por %p142, %p143
    %p146 = scmp.ne.s32.totalorder %s131, %s145
    %p147 = scmp.eq.s32.totalorder %s18, 0
    %p148 = por %p146, %p147
    %s150 = sadd.s32 %s149, 1
    %p153 = scmp.eq.s32.totalorder %s12, 7
    %p154 = scmp.ne.s32.totalorder %s149, %s151
    %p155 = scmp.eq.s32.totalorder %s12, 0
    %p156 = por %p154, %p155
    %p157 = scmp.ne.s32.totalorder %s149, %s151
    %p158 = scmp.eq.s32.totalorder %s17, 7
    %p159 = por %p157, %p158
    %p160 = scmp.ne.s32.totalorder %s151, %s152
    %p161 = scmp.eq.s32.totalorder %s17, 0
    %p162 = por %p160, %p161
    %p163 = scmp.ne.s32.totalorder %s151, %s152
    %p164 = scmp.eq.s32.totalorder %s18, 7
    %p165 = por %p163, %p164
    %p167 = scmp.ne.s32.totalorder %s152, %s166
    %p168 = scmp.eq.s32.totalorder %s18, 0
    %p169 = por %p167, %p168
    %s171 = sadd.s32 %s170, 1
    %p174 = scmp.eq.s32.totalorder %s12, 7
    %p175 = scmp.ne.s32.totalorder %s170, %s172
    %p176 = scmp.eq.s32.totalorder %s12, 0
    %p177 = por %p175, %p176
    %p178 = scmp.ne.s32.totalorder %s170, %s172
    %p179 = scmp.eq.s32.totalorder %s17, 7
    %p180 = por %p178, %p179
    %p181 = scmp.ne.s32.totalorder %s172, %s173
    %p182 = scmp.eq.s32.totalorder %s17, 0
    %p183 = por %p181, %p182
    %p184 = scmp.ne.s32.totalorder %s172, %s173
    %p185 = scmp.eq.s32.totalorder %s18, 7
    %p186 = por %p184, %p185
    %p188 = scmp.ne.s32.totalorder %s173, %s187
    %p189 = scmp.eq.s32.totalorder %s18, 0
    %p190 = por %p188, %p189
    %s191 = ssub.s32 %s19, %s31
    %s192 = ssub.s32 %s20, %s27
    %s193 = sor.u32 %s191, %s192
    %p194 = scmp.eq.s32.totalorder %s193, 0
    %s196 = sadd.s32 %s195, 1
    %s197 = scalar_select %p194, %s195, %s196
    %p200 = pneg %p194
    %p201 = scmp.eq.s32.totalorder %s12, 7
    %p202 = por %p200, %p201
    %p203 = scmp.ne.s32.totalorder %s195, %s198
    %p204 = scmp.eq.s32.totalorder %s12, 0
    %p205 = por %p203, %p204
    %p206 = scmp.ne.s32.totalorder %s195, %s198
    %p207 = scmp.eq.s32.totalorder %s17, 7
    %p208 = por %p206, %p207
    %p209 = scmp.ne.s32.totalorder %s198, %s199
    %p210 = scmp.eq.s32.totalorder %s17, 0
    %p211 = por %p209, %p210
    %p212 = scmp.ne.s32.totalorder %s198, %s199
    %p213 = scmp.eq.s32.totalorder %s18, 7
    %p214 = por %p212, %p213
    %p216 = scmp.ne.s32.totalorder %s199, %s215
    %p217 = scmp.eq.s32.totalorder %s18, 0
    %p218 = por %p216, %p217
    %p219 = scmp.le.s32.totalorder 1, %s12
    %p220 = scmp.lt.s32.totalorder %s12, 9
    %p221 = pnand %p219, %p220
    %p222 = pneg %p221
    // Predicated region
    $region9: #{bottleneck_3d_forward.4} parent=5 // pred_check
      _
    $region10: #{bottleneck_3d_forward.4} parent=5 // pred_check_branch
      %224 = sbr.rel (%p221) target = $region12
    $region11: #{bottleneck_3d_forward.4} parent=5 // pred_region
      %s225 = ssub.s32 %s12, 1
      // Predicated region
      $region13: #{bottleneck_3d_forward.4} parent=11 // pred_check
        %p226 = pneg %p141
      $region14: #{bottleneck_3d_forward.4} parent=11 // pred_check_branch
        %228 = sbr.rel (%p226) target = $region16
      $region15: #{bottleneck_3d_forward.4} parent=11 // pred_region
        _
      $region16: #{bottleneck_3d_forward.4} parent=11 // pred_fallthru
        _
      // Predicated region
      $region17: #{bottleneck_3d_forward.4} parent=11 // pred_check
        %p229 = pneg %p162
      $region18: #{bottleneck_3d_forward.4} parent=11 // pred_check_branch
        %231 = sbr.rel (%p229) target = $region20
      $region19: #{bottleneck_3d_forward.4} parent=11 // pred_region
        _
      $region20: #{bottleneck_3d_forward.4} parent=11 // pred_fallthru
        _
      // Predicated region
      $region21: #{bottleneck_3d_forward.4} parent=11 // pred_check
        %p232 = pneg %p183
      $region22: #{bottleneck_3d_forward.4} parent=11 // pred_check_branch
        %234 = sbr.rel (%p232) target = $region24
      $region23: #{bottleneck_3d_forward.4} parent=11 // pred_region
        _
      $region24: #{bottleneck_3d_forward.4} parent=11 // pred_fallthru
        _
    $region12: #{bottleneck_3d_forward.4} parent=5 // pred_fallthru
      _
    %p235 = scmp.lt.s32.totalorder %s12, 8
    // Predicated region
    $region25: #{bottleneck_3d_forward.4} parent=5 // pred_check
      %p236 = pneg %p235
    $region26: #{bottleneck_3d_forward.4} parent=5 // pred_check_branch
      %238 = sbr.rel (%p236) target = $region28
    $region27: #{bottleneck_3d_forward.4} parent=5 // pred_region
      // Predicated region
      $region29: #{bottleneck_3d_forward.4} parent=27 // pred_check
        %p239 = pneg %p52
      $region30: #{bottleneck_3d_forward.4} parent=27 // pred_check_branch
        %241 = sbr.rel (%p239) target = $region32
      $region31: #{bottleneck_3d_forward.4} parent=27 // pred_region
        %s242 = ssub.s32 %s20, 1
        %p243 = scmp.gt.s32.totalorder %s242, 0
        %s244 = scalar_select %p243, %s242, 0
        %p245 = scmp.lt.s32.totalorder %s19, 1
        %s246 = scalar_select %p245, %s19, 1
        %p247 = scmp.lt.s32.totalorder %s244, 3
        %s248 = scalar_select %p247, %s244, 3
        %s249 = smul.addr %s248, 20
        %s250 = smul.addr %s246, 80
        %s251 = sadd.s32 %s249, %s250
        %s252 = smul.addr %s251, 4
        %s253 = scalar_lea.vmem %s0, %s252
        %s254 = ssub.s32 %s20, 1
        %p255 = scmp.gt.s32.totalorder %s254, 0
        %s256 = scalar_select %p255, %s254, 0
      $region32: #{bottleneck_3d_forward.4} parent=27 // pred_fallthru
        _
      // Predicated region
      $region33: #{bottleneck_3d_forward.4} parent=27 // pred_check
        %p257 = pneg %p80
      $region34: #{bottleneck_3d_forward.4} parent=27 // pred_check_branch
        %259 = sbr.rel (%p257) target = $region36
      $region35: #{bottleneck_3d_forward.4} parent=27 // pred_region
        %p260 = scmp.lt.s32.totalorder %s19, 1
        %s261 = scalar_select %p260, %s19, 1
        %p262 = scmp.lt.s32.totalorder %s20, 3
        %s263 = scalar_select %p262, %s20, 3
        %s264 = smul.addr %s263, 20
        %s265 = smul.addr %s261, 80
        %s266 = sadd.s32 %s264, %s265
        %s267 = smul.addr %s266, 4
        %s268 = scalar_lea.vmem %s1, %s267
      $region36: #{bottleneck_3d_forward.4} parent=27 // pred_fallthru
        _
      // Predicated region
      $region37: #{bottleneck_3d_forward.4} parent=27 // pred_check
        %p269 = pneg %p114
      $region38: #{bottleneck_3d_forward.4} parent=27 // pred_check_branch
        %271 = sbr.rel (%p269) target = $region40
      $region39: #{bottleneck_3d_forward.4} parent=27 // pred_region
        %s272 = sadd.s32 %s20, 1
        %p273 = scmp.lt.s32.totalorder %s272, 3
        %s274 = scalar_select %p273, %s272, 3
        %p275 = scmp.lt.s32.totalorder %s19, 1
        %s276 = scalar_select %p275, %s19, 1
        %p277 = scmp.lt.s32.totalorder %s274, 3
        %s278 = scalar_select %p277, %s274, 3
        %s279 = smul.addr %s278, 20
        %s280 = smul.addr %s276, 80
        %s281 = sadd.s32 %s279, %s280
        %s282 = smul.addr %s281, 4
        %s283 = scalar_lea.vmem %s2, %s282
        %s284 = sadd.s32 %s20, 1
        %p285 = scmp.lt.s32.totalorder %s284, 3
        %s286 = scalar_select %p285, %s284, 3
      $region40: #{bottleneck_3d_forward.4} parent=27 // pred_fallthru
        _
    $region28: #{bottleneck_3d_forward.4} parent=5 // pred_fallthru
      _
    %p287 = scmp.le.s32.totalorder 1, %s12
    %p288 = scmp.lt.s32.totalorder %s12, 9
    %p289 = pnand %p287, %p288
    %p290 = pneg %p289
    // Predicated region
    $region41: #{bottleneck_3d_forward.4} parent=5 // pred_check
      _
    $region42: #{bottleneck_3d_forward.4} parent=5 // pred_check_branch
      %292 = sbr.rel (%p289) target = $region44
    $region43: #{bottleneck_3d_forward.4} parent=5 // pred_region
      %s293 = ssub.s32 %s12, 1
      %s294 = ssub.s32 %s22, 1
      %p295 = scmp.gt.s32.totalorder %s294, 0
      %s296 = scalar_select %p295, %s294, 0
      %p297 = scmp.lt.s32.totalorder %s21, 1
      %s298 = scalar_select %p297, %s21, 1
      %p299 = scmp.lt.s32.totalorder %s296, 3
      %s300 = scalar_select %p299, %s296, 3
      %s301 = smul.addr %s300, 20
      %s302 = smul.addr %s298, 80
      %s303 = sadd.s32 %s301, %s302
      %s304 = smul.addr %s303, 4
      %s305 = scalar_lea.vmem %s0, %s304
      %p306 = pneg %p58
      %p307 = pneg %p55
      %p308 = scmp.lt.s32.totalorder %s21, 1
      %s309 = scalar_select %p308, %s21, 1
      %p310 = scmp.lt.s32.totalorder %s22, 3
      %s311 = scalar_select %p310, %s22, 3
      %s312 = smul.addr %s311, 20
      %s313 = smul.addr %s309, 80
      %s314 = sadd.s32 %s312, %s313
      %s315 = smul.addr %s314, 4
      %s316 = scalar_lea.vmem %s1, %s315
      %p317 = pneg %p86
      %p318 = pneg %p83
      %s319 = sadd.s32 %s22, 1
      %p320 = scmp.lt.s32.totalorder %s319, 3
      %s321 = scalar_select %p320, %s319, 3
      %p322 = scmp.lt.s32.totalorder %s21, 1
      %s323 = scalar_select %p322, %s21, 1
      %p324 = scmp.lt.s32.totalorder %s321, 3
      %s325 = scalar_select %p324, %s321, 3
      %s326 = smul.addr %s325, 20
      %s327 = smul.addr %s323, 80
      %s328 = sadd.s32 %s326, %s327
      %s329 = smul.addr %s328, 4
      %s330 = scalar_lea.vmem %s2, %s329
      %p331 = pneg %p120
      %p332 = pneg %p117
      %p333 = pneg %p141
      %p334 = pneg %p138
      %p335 = pneg %p162
      %p336 = pneg %p159
      %p337 = pneg %p183
      %p338 = pneg %p180
      %p339 = pneg %p211
      %p340 = pneg %p208
      %p341 = scmp.lt.s32.totalorder %s21, 1
      %s342 = scalar_select %p341, %s21, 1
      %p343 = scmp.lt.s32.totalorder %s22, 3
      %s344 = scalar_select %p343, %s22, 3
      %s345 = smul.addr %s344, 8
      %s346 = smul.addr %s342, 32
      %s347 = sadd.s32 %s345, %s346
      %s348 = smul.addr %s347, 4
      %s349 = scalar_lea.vmem %s6, %s348
      %s350 = ssub.s32 %s22, 1
      %p351 = scmp.gt.s32.totalorder %s350, 0
      %s352 = scalar_select %p351, %s350, 0
      %p353 = scmp.lt.s32.totalorder %s21, 1
      %s354 = scalar_select %p353, %s21, 1
      %p355 = scmp.lt.s32.totalorder %s352, 3
      %s356 = scalar_select %p355, %s352, 3
      %s357 = smul.addr %s356, 20
      %s358 = smul.addr %s354, 80
      %s359 = sadd.s32 %s357, %s358
      %s360 = smul.addr %s359, 4
      %s361 = scalar_lea.vmem %s0, %s360
      %s362 = ssub.s32 %s22, 1
      %p363 = scmp.gt.s32.totalorder %s362, 0
      %s364 = scalar_select %p363, %s362, 0
      %p365 = scmp.lt.s32.totalorder %s21, 1
      %s366 = scalar_select %p365, %s21, 1
      %p367 = scmp.lt.s32.totalorder %s22, 3
      %s368 = scalar_select %p367, %s22, 3
      %s369 = smul.addr %s368, 20
      %s370 = smul.addr %s366, 80
      %s371 = sadd.s32 %s369, %s370
      %s372 = smul.addr %s371, 4
      %s373 = scalar_lea.vmem %s1, %s372
      %s374 = sadd.s32 %s22, 1
      %p375 = scmp.lt.s32.totalorder %s374, 3
      %s376 = scalar_select %p375, %s374, 3
      %p377 = scmp.lt.s32.totalorder %s21, 1
      %s378 = scalar_select %p377, %s21, 1
      %p379 = scmp.lt.s32.totalorder %s376, 3
      %s380 = scalar_select %p379, %s376, 3
      %s381 = smul.addr %s380, 20
      %s382 = smul.addr %s378, 80
      %s383 = sadd.s32 %s381, %s382
      %s384 = smul.addr %s383, 4
      %s385 = scalar_lea.vmem %s2, %s384
      %s386 = sadd.s32 %s22, 1
      %p387 = scmp.lt.s32.totalorder %s386, 3
      %s388 = scalar_select %p387, %s386, 3
      %p389 = scmp.lt.s32.totalorder %s21, 1
      %s390 = scalar_select %p389, %s21, 1
      %p391 = scmp.lt.s32.totalorder %s22, 3
      %s392 = scalar_select %p391, %s22, 3
      %s393 = smul.addr %s392, 8
      %s394 = smul.addr %s390, 32
      %s395 = sadd.s32 %s393, %s394
      %s396 = smul.addr %s395, 4
      %s397 = scalar_lea.vmem %s6, %s396
      %p399 = scmp.gt.s32.totalorder %s22, 0
      %s400 = scalar_select %p399, 1, 0
      %s401 = scvt.s32.f32 %s400
      %p403 = scmp.ne.f32.partialorder %s401, %s401
      %s404 = sshrl.u32 %s401, 16
      %s405 = sand.u32 %s404, 1
      %s406 = sadd.s32 32767, %s405
      %s407 = sadd.s32 %s401, %s406
      %s408 = sand.u32 %s407, 4294901760
      %s409 = scalar_select %p403, 2143289344, %s408
      %s411 = sshrl.u32 %s409, 16
      %p412 = scmp.lt.s32.totalorder %s22, 3
      %s413 = scalar_select %p412, 1, 0
      %s414 = scvt.s32.f32 %s413
      %p416 = scmp.ne.f32.partialorder %s414, %s414
      %s417 = sshrl.u32 %s414, 16
      %s418 = sand.u32 %s417, 1
      %s419 = sadd.s32 32767, %s418
      %s420 = sadd.s32 %s414, %s419
      %s421 = sand.u32 %s420, 4294901760
      %s422 = scalar_select %p416, 2143289344, %s421
      %s424 = sshrl.u32 %s422, 16
      %v425 = vld [vmem:[%s361] sm:$0xf]
      %v426 = vld [vmem:[%s361 + $0x4] sm:$0x1]
      %v427 = vld [vmem:[%s361 + $0x8] sm:$0xf]
      %v428 = vld [vmem:[%s361 + $0xc] sm:$0x1]
      %v429 = vld [vmem:[%s361 + $0x10] sm:$0xf]
      %v430 = vld [vmem:[%s361 + $0x14] sm:$0x1]
      %v431 = vld [vmem:[%s361 + $0x18] sm:$0xf]
      %v432 = vld [vmem:[%s361 + $0x1c] sm:$0x1]
      %v433 = vld [vmem:[%s361 + $0x20] sm:$0xf]
      %v434 = vld [vmem:[%s361 + $0x24] sm:$0x1]
      %v435 = vld [vmem:[%s361 + $0x28] sm:$0xf]
      %v436 = vld [vmem:[%s361 + $0x2c] sm:$0x1]
      %v437 = vld [vmem:[%s361 + $0x30] sm:$0xf]
      %v438 = vld [vmem:[%s361 + $0x34] sm:$0x1]
      %v439 = vld [vmem:[%s361 + $0x38] sm:$0xf]
      %v440 = vld [vmem:[%s361 + $0x3c] sm:$0x1]
      %v441 = vld [vmem:[%s361 + $0x40] sm:$0xf]
      %v442 = vld [vmem:[%s361 + $0x44] sm:$0x1]
      %v443 = vld [vmem:[%s361 + $0x48] sm:$0xf]
      %v444 = vld [vmem:[%s361 + $0x4c] sm:$0x1]
      %s445 = sshll.u32 %s411, 16
      %s446 = sor.u32 %s411, %s445
      %v447 = vstv %s446
      %v449 = vmul.bf16 %v425, %v447
      %v450 = vmul.bf16 %v426, %v447
      %v451 = vmul.bf16 %v427, %v447
      %v452 = vmul.bf16 %v428, %v447
      %v453 = vmul.bf16 %v429, %v447
      %v454 = vmul.bf16 %v430, %v447
      %v455 = vmul.bf16 %v431, %v447
      %v456 = vmul.bf16 %v432, %v447
      %v457 = vmul.bf16 %v433, %v447
      %v458 = vmul.bf16 %v434, %v447
      %v459 = vmul.bf16 %v435, %v447
      %v460 = vmul.bf16 %v436, %v447
      %v461 = vmul.bf16 %v437, %v447
      %v462 = vmul.bf16 %v438, %v447
      %v463 = vmul.bf16 %v439, %v447
      %v464 = vmul.bf16 %v440, %v447
      %v465 = vmul.bf16 %v441, %v447
      %v466 = vmul.bf16 %v442, %v447
      %v467 = vmul.bf16 %v443, %v447
      %v468 = vmul.bf16 %v444, %v447
      %v469 = vld [vmem:[%s373] sm:$0xf]
      %v470 = vld [vmem:[%s373 + $0x4] sm:$0x1]
      %v471 = vld [vmem:[%s373 + $0x8] sm:$0xf]
      %v472 = vld [vmem:[%s373 + $0xc] sm:$0x1]
      %v473 = vld [vmem:[%s373 + $0x10] sm:$0xf]
      %v474 = vld [vmem:[%s373 + $0x14] sm:$0x1]
      %v475 = vld [vmem:[%s373 + $0x18] sm:$0xf]
      %v476 = vld [vmem:[%s373 + $0x1c] sm:$0x1]
      %v477 = vld [vmem:[%s373 + $0x20] sm:$0xf]
      %v478 = vld [vmem:[%s373 + $0x24] sm:$0x1]
      %v479 = vld [vmem:[%s373 + $0x28] sm:$0xf]
      %v480 = vld [vmem:[%s373 + $0x2c] sm:$0x1]
      %v481 = vld [vmem:[%s373 + $0x30] sm:$0xf]
      %v482 = vld [vmem:[%s373 + $0x34] sm:$0x1]
      %v483 = vld [vmem:[%s373 + $0x38] sm:$0xf]
      %v484 = vld [vmem:[%s373 + $0x3c] sm:$0x1]
      %v485 = vld [vmem:[%s373 + $0x40] sm:$0xf]
      %v486 = vld [vmem:[%s373 + $0x44] sm:$0x1]
      %v487 = vld [vmem:[%s373 + $0x48] sm:$0xf]
      %v488 = vld [vmem:[%s373 + $0x4c] sm:$0x1]
      %v489 = vld [vmem:[%s385] sm:$0xf]
      %v490 = vld [vmem:[%s385 + $0x4] sm:$0x1]
      %v491 = vld [vmem:[%s385 + $0x8] sm:$0xf]
      %v492 = vld [vmem:[%s385 + $0xc] sm:$0x1]
      %v493 = vld [vmem:[%s385 + $0x10] sm:$0xf]
      %v494 = vld [vmem:[%s385 + $0x14] sm:$0x1]
      %v495 = vld [vmem:[%s385 + $0x18] sm:$0xf]
      %v496 = vld [vmem:[%s385 + $0x1c] sm:$0x1]
      %v497 = vld [vmem:[%s385 + $0x20] sm:$0xf]
      %v498 = vld [vmem:[%s385 + $0x24] sm:$0x1]
      %v499 = vld [vmem:[%s385 + $0x28] sm:$0xf]
      %v500 = vld [vmem:[%s385 + $0x2c] sm:$0x1]
      %v501 = vld [vmem:[%s385 + $0x30] sm:$0xf]
      %v502 = vld [vmem:[%s385 + $0x34] sm:$0x1]
      %v503 = vld [vmem:[%s385 + $0x38] sm:$0xf]
      %v504 = vld [vmem:[%s385 + $0x3c] sm:$0x1]
      %v505 = vld [vmem:[%s385 + $0x40] sm:$0xf]
      %v506 = vld [vmem:[%s385 + $0x44] sm:$0x1]
      %v507 = vld [vmem:[%s385 + $0x48] sm:$0xf]
      %v508 = vld [vmem:[%s385 + $0x4c] sm:$0x1]
      %s509 = sshll.u32 %s424, 16
      %s510 = sor.u32 %s424, %s509
      %v511 = vstv %s510
      %v513 = vmul.bf16 %v489, %v511
      %v514 = vmul.bf16 %v490, %v511
      %v515 = vmul.bf16 %v491, %v511
      %v516 = vmul.bf16 %v492, %v511
      %v517 = vmul.bf16 %v493, %v511
      %v518 = vmul.bf16 %v494, %v511
      %v519 = vmul.bf16 %v495, %v511
      %v520 = vmul.bf16 %v496, %v511
      %v521 = vmul.bf16 %v497, %v511
      %v522 = vmul.bf16 %v498, %v511
      %v523 = vmul.bf16 %v499, %v511
      %v524 = vmul.bf16 %v500, %v511
      %v525 = vmul.bf16 %v501, %v511
      %v526 = vmul.bf16 %v502, %v511
      %v527 = vmul.bf16 %v503, %v511
      %v528 = vmul.bf16 %v504, %v511
      %v529 = vmul.bf16 %v505, %v511
      %v530 = vmul.bf16 %v506, %v511
      %v531 = vmul.bf16 %v507, %v511
      %v532 = vmul.bf16 %v508, %v511
      %v553 = vunpack.c.l.b16 %v449
      %v554 = vunpack.c.l.b16 %v450
      %v555 = vunpack.c.l.b16 %v451
      %v556 = vunpack.c.l.b16 %v452
      %v557 = vunpack.c.l.b16 %v453
      %v558 = vunpack.c.l.b16 %v454
      %v559 = vunpack.c.l.b16 %v455
      %v560 = vunpack.c.l.b16 %v456
      %v561 = vunpack.c.l.b16 %v457
      %v562 = vunpack.c.l.b16 %v458
      %v563 = vunpack.c.l.b16 %v459
      %v564 = vunpack.c.l.b16 %v460
      %v565 = vunpack.c.l.b16 %v461
      %v566 = vunpack.c.l.b16 %v462
      %v567 = vunpack.c.l.b16 %v463
      %v568 = vunpack.c.l.b16 %v464
      %v569 = vunpack.c.l.b16 %v465
      %v570 = vunpack.c.l.b16 %v466
      %v571 = vunpack.c.l.b16 %v467
      %v572 = vunpack.c.l.b16 %v468
      %v573 = vpack.c.b16 %v554, %v553
      %v574 = vpack.c.b16 %v556, %v555
      %v575 = vpack.c.b16 %v558, %v557
      %v576 = vpack.c.b16 %v560, %v559
      %v577 = vpack.c.b16 %v562, %v561
      %v578 = vpack.c.b16 %v564, %v563
      %v579 = vpack.c.b16 %v566, %v565
      %v580 = vpack.c.b16 %v568, %v567
      %v581 = vpack.c.b16 %v570, %v569
      %v582 = vpack.c.b16 %v572, %v571
      %v603 = vunpack.c.l.b16 %v469
      %v604 = vunpack.c.l.b16 %v470
      %v605 = vunpack.c.l.b16 %v471
      %v606 = vunpack.c.l.b16 %v472
      %v607 = vunpack.c.l.b16 %v473
      %v608 = vunpack.c.l.b16 %v474
      %v609 = vunpack.c.l.b16 %v475
      %v610 = vunpack.c.l.b16 %v476
      %v611 = vunpack.c.l.b16 %v477
      %v612 = vunpack.c.l.b16 %v478
      %v613 = vunpack.c.l.b16 %v479
      %v614 = vunpack.c.l.b16 %v480
      %v615 = vunpack.c.l.b16 %v481
      %v616 = vunpack.c.l.b16 %v482
      %v617 = vunpack.c.l.b16 %v483
      %v618 = vunpack.c.l.b16 %v484
      %v619 = vunpack.c.l.b16 %v485
      %v620 = vunpack.c.l.b16 %v486
      %v621 = vunpack.c.l.b16 %v487
      %v622 = vunpack.c.l.b16 %v488
      %v623 = vpack.c.b16 %v604, %v603
      %v624 = vpack.c.b16 %v606, %v605
      %v625 = vpack.c.b16 %v608, %v607
      %v626 = vpack.c.b16 %v610, %v609
      %v627 = vpack.c.b16 %v612, %v611
      %v628 = vpack.c.b16 %v614, %v613
      %v629 = vpack.c.b16 %v616, %v615
      %v630 = vpack.c.b16 %v618, %v617
      %v631 = vpack.c.b16 %v620, %v619
      %v632 = vpack.c.b16 %v622, %v621
      %633 = vrot.lane.b32.xlu0 %v623, 4
      %v634 = vpop.permute.xlu0 %633
      %635 = vrot.lane.b32.xlu0 %v624, 4
      %v636 = vpop.permute.xlu0 %635
      %637 = vrot.lane.b32.xlu0 %v625, 4
      %v638 = vpop.permute.xlu0 %637
      %639 = vrot.lane.b32.xlu0 %v626, 4
      %v640 = vpop.permute.xlu0 %639
      %641 = vrot.lane.b32.xlu0 %v627, 4
      %v642 = vpop.permute.xlu0 %641
      %643 = vrot.lane.b32.xlu0 %v628, 4
      %v644 = vpop.permute.xlu0 %643
      %645 = vrot.lane.b32.xlu0 %v629, 4
      %v646 = vpop.permute.xlu0 %645
      %647 = vrot.lane.b32.xlu0 %v630, 4
      %v648 = vpop.permute.xlu0 %647
      %649 = vrot.lane.b32.xlu0 %v631, 4
      %v650 = vpop.permute.xlu0 %649
      %651 = vrot.lane.b32.xlu0 %v632, 4
      %v652 = vpop.permute.xlu0 %651
      %v673 = vunpack.c.l.b16 %v513
      %v674 = vunpack.c.l.b16 %v514
      %v675 = vunpack.c.l.b16 %v515
      %v676 = vunpack.c.l.b16 %v516
      %v677 = vunpack.c.l.b16 %v517
      %v678 = vunpack.c.l.b16 %v518
      %v679 = vunpack.c.l.b16 %v519
      %v680 = vunpack.c.l.b16 %v520
      %v681 = vunpack.c.l.b16 %v521
      %v682 = vunpack.c.l.b16 %v522
      %v683 = vunpack.c.l.b16 %v523
      %v684 = vunpack.c.l.b16 %v524
      %v685 = vunpack.c.l.b16 %v525
      %v686 = vunpack.c.l.b16 %v526
      %v687 = vunpack.c.l.b16 %v527
      %v688 = vunpack.c.l.b16 %v528
      %v689 = vunpack.c.l.b16 %v529
      %v690 = vunpack.c.l.b16 %v530
      %v691 = vunpack.c.l.b16 %v531
      %v692 = vunpack.c.l.b16 %v532
      %v693 = vpack.c.b16 %v674, %v673
      %v694 = vpack.c.b16 %v676, %v675
      %v695 = vpack.c.b16 %v678, %v677
      %v696 = vpack.c.b16 %v680, %v679
      %v697 = vpack.c.b16 %v682, %v681
      %v698 = vpack.c.b16 %v684, %v683
      %v699 = vpack.c.b16 %v686, %v685
      %v700 = vpack.c.b16 %v688, %v687
      %v701 = vpack.c.b16 %v690, %v689
      %v702 = vpack.c.b16 %v692, %v691
      %703 = vrot.lane.b32.xlu0 %v693, 8
      %v704 = vpop.permute.xlu0 %703
      %705 = vrot.lane.b32.xlu0 %v694, 8
      %v706 = vpop.permute.xlu0 %705
      %707 = vrot.lane.b32.xlu0 %v695, 8
      %v708 = vpop.permute.xlu0 %707
      %709 = vrot.lane.b32.xlu0 %v696, 8
      %v710 = vpop.permute.xlu0 %709
      %711 = vrot.lane.b32.xlu0 %v697, 8
      %v712 = vpop.permute.xlu0 %711
      %713 = vrot.lane.b32.xlu0 %v698, 8
      %v714 = vpop.permute.xlu0 %713
      %715 = vrot.lane.b32.xlu0 %v699, 8
      %v716 = vpop.permute.xlu0 %715
      %717 = vrot.lane.b32.xlu0 %v700, 8
      %v718 = vpop.permute.xlu0 %717
      %719 = vrot.lane.b32.xlu0 %v701, 8
      %v720 = vpop.permute.xlu0 %719
      %721 = vrot.lane.b32.xlu0 %v702, 8
      %v722 = vpop.permute.xlu0 %721
      %vm723 = vcmask 31744
      %v726 = vsel %vm723, %v573, %v634
      %v729 = vsel %vm723, %v574, %v636
      %v732 = vsel %vm723, %v575, %v638
      %v735 = vsel %vm723, %v576, %v640
      %v738 = vsel %vm723, %v577, %v642
      %v741 = vsel %vm723, %v578, %v644
      %v744 = vsel %vm723, %v579, %v646
      %v747 = vsel %vm723, %v580, %v648
      %v750 = vsel %vm723, %v581, %v650
      %v753 = vsel %vm723, %v582, %v652
      %vm754 = vcmask 64512
      %v756 = vsel %vm754, %v726, %v704
      %v758 = vsel %vm754, %v729, %v706
      %v760 = vsel %vm754, %v732, %v708
      %v762 = vsel %vm754, %v735, %v710
      %v764 = vsel %vm754, %v738, %v712
      %v766 = vsel %vm754, %v741, %v714
      %v768 = vsel %vm754, %v744, %v716
      %v770 = vsel %vm754, %v747, %v718
      %v772 = vsel %vm754, %v750, %v720
      %v774 = vsel %vm754, %v753, %v722
      %v775 = vld [vmem:[%s3] sm:$0xf]
      %v776 = vld [vmem:[%s3 + $0x4] sm:$0x3]
      %v785 = vunpack.c.l.b16 %v756
      %v786 = vunpack.c.h.b16 %v756
      %v787 = vunpack.c.l.b16 %v758
      %v788 = vunpack.c.h.b16 %v758
      %v789 = vunpack.c.l.b16 %v760
      %v790 = vunpack.c.h.b16 %v760
      %v791 = vunpack.c.l.b16 %v762
      %v792 = vunpack.c.h.b16 %v762
      %v793 = vunpack.c.l.b16 %v764
      %v794 = vunpack.c.h.b16 %v764
      %v795 = vunpack.c.l.b16 %v766
      %v796 = vunpack.c.h.b16 %v766
      %v797 = vunpack.c.l.b16 %v768
      %v798 = vunpack.c.h.b16 %v768
      %v799 = vunpack.c.l.b16 %v770
      %v800 = vunpack.c.h.b16 %v770
      %v801 = vpack.c.b16 %v785, %v785
      %v802 = vpack.c.b16 %v786, %v786
      %v803 = vpack.c.b16 %v787, %v787
      %v804 = vpack.c.b16 %v788, %v788
      %v805 = vpack.c.b16 %v789, %v789
      %v806 = vpack.c.b16 %v790, %v790
      %v807 = vpack.c.b16 %v791, %v791
      %v808 = vpack.c.b16 %v792, %v792
      %v809 = vpack.c.b16 %v793, %v793
      %v810 = vpack.c.b16 %v794, %v794
      %v811 = vpack.c.b16 %v795, %v795
      %v812 = vpack.c.b16 %v796, %v796
      %v813 = vpack.c.b16 %v797, %v797
      %v814 = vpack.c.b16 %v798, %v798
      %v815 = vpack.c.b16 %v799, %v799
      %v816 = vpack.c.b16 %v800, %v800
      %vm817 = vsmask.f32 3328
      %vm818 = vsmask.f32 7440
      %vm819 = vmor %vm817, %vm818
      %v821 = vshrl.u32 %v801, 16
      %v823 = vrot.slane %v821, 4
      %v824 = vshll.u32 %v801, 16
      %v826 = vrot.slane %v824, 5
      %v827 = vor.u32 %v823, %v826
      %v828 = vrot.slane %v827, 4
      %v830 = vshll.u32 %v802, 16
      %v832 = vrot.slane %v830, 5
      %v833 = vsel %vm819, %v828, %v832
      %v835 = vshrl.u32 %v803, 16
      %v837 = vrot.slane %v835, 4
      %v838 = vshll.u32 %v803, 16
      %v840 = vrot.slane %v838, 5
      %v841 = vor.u32 %v837, %v840
      %v842 = vrot.slane %v841, 4
      %v844 = vshll.u32 %v804, 16
      %v846 = vrot.slane %v844, 5
      %v847 = vsel %vm819, %v842, %v846
      %v849 = vshrl.u32 %v805, 16
      %v851 = vrot.slane %v849, 4
      %v852 = vshll.u32 %v805, 16
      %v854 = vrot.slane %v852, 5
      %v855 = vor.u32 %v851, %v854
      %v856 = vrot.slane %v855, 4
      %v858 = vshll.u32 %v806, 16
      %v860 = vrot.slane %v858, 5
      %v861 = vsel %vm819, %v856, %v860
      %v863 = vshrl.u32 %v807, 16
      %v865 = vrot.slane %v863, 4
      %v866 = vshll.u32 %v807, 16
      %v868 = vrot.slane %v866, 5
      %v869 = vor.u32 %v865, %v868
      %v870 = vrot.slane %v869, 4
      %v872 = vshll.u32 %v808, 16
      %v874 = vrot.slane %v872, 5
      %v875 = vsel %vm819, %v870, %v874
      %v877 = vshrl.u32 %v809, 16
      %v879 = vrot.slane %v877, 4
      %v880 = vshll.u32 %v809, 16
      %v882 = vrot.slane %v880, 5
      %v883 = vor.u32 %v879, %v882
      %v884 = vrot.slane %v883, 4
      %v886 = vshll.u32 %v810, 16
      %v888 = vrot.slane %v886, 5
      %v889 = vsel %vm819, %v884, %v888
      %v891 = vshrl.u32 %v811, 16
      %v893 = vrot.slane %v891, 4
      %v894 = vshll.u32 %v811, 16
      %v896 = vrot.slane %v894, 5
      %v897 = vor.u32 %v893, %v896
      %v898 = vrot.slane %v897, 4
      %v900 = vshll.u32 %v812, 16
      %v902 = vrot.slane %v900, 5
      %v903 = vsel %vm819, %v898, %v902
      %v905 = vshrl.u32 %v813, 16
      %v907 = vrot.slane %v905, 4
      %v908 = vshll.u32 %v813, 16
      %v910 = vrot.slane %v908, 5
      %v911 = vor.u32 %v907, %v910
      %v912 = vrot.slane %v911, 4
      %v914 = vshll.u32 %v814, 16
      %v916 = vrot.slane %v914, 5
      %v917 = vsel %vm819, %v912, %v916
      %v919 = vshrl.u32 %v815, 16
      %v921 = vrot.slane %v919, 4
      %v922 = vshll.u32 %v815, 16
      %v924 = vrot.slane %v922, 5
      %v925 = vor.u32 %v921, %v924
      %v926 = vrot.slane %v925, 4
      %v928 = vshll.u32 %v816, 16
      %v930 = vrot.slane %v928, 5
      %v931 = vsel %vm819, %v926, %v930
      %s932 = scalar_lea.vmem %s3, 8
      %v933 = vld [vmem:[%s932] sm:$0xf]
      %v934 = vld [vmem:[%s932 + $0x4] sm:$0x3]
      %v935 = vunpack.c.l.b16 %v833
      %v936 = vunpack.c.l.b16 %v847
      %v937 = vunpack.c.l.b16 %v861
      %v938 = vunpack.c.l.b16 %v875
      %v939 = vunpack.c.l.b16 %v889
      %v940 = vunpack.c.l.b16 %v903
      %v941 = vunpack.c.l.b16 %v917
      %v942 = vunpack.c.l.b16 %v931
      %v943 = vpack.c.b16 %v936, %v935
      %v944 = vpack.c.b16 %v938, %v937
      %v945 = vpack.c.b16 %v940, %v939
      %v946 = vpack.c.b16 %v942, %v941
      %v949 = vunpack.c.l.b16 %v933
      %v950 = vunpack.c.l.b16 %v934
      %v951 = vpack.c.b16 %v950, %v949
      %vm952 = vcmask 97280
      %v954 = vsel %vm952, %v943, 0
      %v957 = vsel %vm952, %v944, 0
      %v960 = vsel %vm952, %v945, 0
      %v963 = vsel %vm952, %v946, 0
      %vm965 = vcmask 1045504
      %v967 = vsel %vm965, %v951, 0
      %969 = vmatprep.subr.bf16.mxu0 0
      %970 = vmatpush1.bf16.msra.mxu0 %v967
      %971 = vmatprep.subr.bf16.mxu0 0
      %972 = vmatpush1.bf16.msra.mxu0 0
      %973 = vmatprep.subr.bf16.mxu0 0
      %974 = vmatpush1.bf16.msra.mxu0 0
      %975 = vmatprep.subr.bf16.mxu0 0
      %976 = vmatpush1.bf16.msra.mxu0 0
      %977 = vmatprep.subr.bf16.mxu0 0
      %978 = vmatpush1.bf16.msra.mxu0 0
      %979 = vmatprep.subr.bf16.mxu0 0
      %980 = vmatpush1.bf16.msra.mxu0 0
      %981 = vmatprep.subr.bf16.mxu0 0
      %982 = vmatpush1.bf16.msra.mxu0 0
      %983 = vmatprep.subr.bf16.mxu0 0
      %984 = vmatpush1.bf16.msra.mxu0 0
      %985 = vmatprep.subr.bf16.mxu0 0
      %986 = vmatpush1.bf16.msra.mxu0 0
      %987 = vmatprep.subr.bf16.mxu0 0
      %988 = vmatpush1.bf16.msra.mxu0 0
      %989 = vmatprep.subr.bf16.mxu0 0
      %990 = vmatpush1.bf16.msra.mxu0 0
      %991 = vmatprep.subr.bf16.mxu0 0
      %992 = vmatpush1.bf16.msra.mxu0 0
      %993 = vmatprep.subr.bf16.mxu0 0
      %994 = vmatpush1.bf16.msra.mxu0 0
      %995 = vmatprep.subr.bf16.mxu0 0
      %996 = vmatpush1.bf16.msra.mxu0 0
      %997 = vmatprep.subr.bf16.mxu0 0
      %998 = vmatpush1.bf16.msra.mxu0 0
      %999 = vmatprep.subr.bf16.mxu0 0
      %1000 = vmatpush1.bf16.msra.mxu0 0
      %1001 = vmatprep.mubr.bf16.mxu0 0
      %1002 = vmatmul.mubr.bf16.gmra.mrb[0].mxu0 %v954
      %v1003 = vpop.f32.mrb[0].mxu0
      %v1004 = vadd.f32 0.0, %v1003
      %v1005 = vpop.f32.mrb[0].mxu0
      %v1006 = vpop.f32.mrb[0].mxu0
      %v1007 = vadd.f32 0.0, %v1006
      %v1008 = vpop.f32.mrb[0].mxu0
      %1009 = vmatprep.mubr.bf16.mxu0 0
      %1010 = vmatmul.mubr.bf16.gmra.mrb[0].mxu0 %v957
      %v1011 = vpop.f32.mrb[0].mxu0
      %v1012 = vadd.f32 0.0, %v1011
      %v1013 = vpop.f32.mrb[0].mxu0
      %v1014 = vpop.f32.mrb[0].mxu0
      %v1015 = vadd.f32 0.0, %v1014
      %v1016 = vpop.f32.mrb[0].mxu0
      %1017 = vmatprep.mubr.bf16.mxu0 0
      %1018 = vmatmul.mubr.bf16.gmra.mrb[0].mxu0 %v960
      %v1019 = vpop.f32.mrb[0].mxu0
      %v1020 = vadd.f32 0.0, %v1019
      %v1021 = vpop.f32.mrb[0].mxu0
      %v1022 = vpop.f32.mrb[0].mxu0
      %v1023 = vadd.f32 0.0, %v1022
      %v1024 = vpop.f32.mrb[0].mxu0
      %1025 = vmatprep.mubr.bf16.mxu0 0
      %1026 = vmatmul.mubr.bf16.gmra.mrb[0].mxu0 %v963
      %v1027 = vpop.f32.mrb[0].mxu0
      %v1028 = vadd.f32 0.0, %v1027
      %v1029 = vpop.f32.mrb[0].mxu0
      %v1030 = vpop.f32.mrb[0].mxu0
      %v1031 = vadd.f32 0.0, %v1030
      %v1032 = vpop.f32.mrb[0].mxu0
      %1033 = vdwg.mxu0
      %v1034 = vpack.c.b16 %v787, %v785
      %v1035 = vpack.c.b16 %v791, %v789
      %v1036 = vpack.c.b16 %v795, %v793
      %v1037 = vpack.c.b16 %v799, %v797
      %v1040 = vunpack.c.l.b16 %v775
      %v1041 = vunpack.c.l.b16 %v776
      %v1042 = vpack.c.b16 %v1041, %v1040
      %v1044 = vsel %vm952, %v1034, 0
      %v1047 = vsel %vm952, %v1035, 0
      %v1050 = vsel %vm952, %v1036, 0
      %v1053 = vsel %vm952, %v1037, 0
      %v1056 = vsel %vm965, %v1042, 0
      %1058 = vmatprep.subr.bf16.mxu0 0
      %1059 = vmatpush1.bf16.msra.mxu0 %v1056
      %1060 = vmatprep.subr.bf16.mxu0 0
      %1061 = vmatpush1.bf16.msra.mxu0 0
      %1062 = vmatprep.subr.bf16.mxu0 0
      %1063 = vmatpush1.bf16.msra.mxu0 0
      %1064 = vmatprep.subr.bf16.mxu0 0
      %1065 = vmatpush1.bf16.msra.mxu0 0
      %1066 = vmatprep.subr.bf16.mxu0 0
      %1067 = vmatpush1.bf16.msra.mxu0 0
      %1068 = vmatprep.subr.bf16.mxu0 0
      %1069 = vmatpush1.bf16.msra.mxu0 0
      %1070 = vmatprep.subr.bf16.mxu0 0
      %1071 = vmatpush1.bf16.msra.mxu0 0
      %1072 = vmatprep.subr.bf16.mxu0 0
      %1073 = vmatpush1.bf16.msra.mxu0 0
      %1074 = vmatprep.subr.bf16.mxu0 0
      %1075 = vmatpush1.bf16.msra.mxu0 0
      %1076 = vmatprep.subr.bf16.mxu0 0
      %1077 = vmatpush1.bf16.msra.mxu0 0
      %1078 = vmatprep.subr.bf16.mxu0 0
      %1079 = vmatpush1.bf16.msra.mxu0 0
      %1080 = vmatprep.subr.bf16.mxu0 0
      %1081 = vmatpush1.bf16.msra.mxu0 0
      %1082 = vmatprep.subr.bf16.mxu0 0
      %1083 = vmatpush1.bf16.msra.mxu0 0
      %1084 = vmatprep.subr.bf16.mxu0 0
      %1085 = vmatpush1.bf16.msra.mxu0 0
      %1086 = vmatprep.subr.bf16.mxu0 0
      %1087 = vmatpush1.bf16.msra.mxu0 0
      %1088 = vmatprep.subr.bf16.mxu0 0
      %1089 = vmatpush1.bf16.msra.mxu0 0
      %1090 = vmatprep.mubr.bf16.mxu0 0
      %1091 = vmatmul.mubr.bf16.gmra.mrb[0].mxu0 %v1044
      %v1092 = vpop.f32.mrb[0].mxu0
      %v1093 = vadd.f32 %v1004, %v1092
      %v1094 = vpop.f32.mrb[0].mxu0
      %v1095 = vpop.f32.mrb[0].mxu0
      %v1096 = vadd.f32 %v1007, %v1095
      %v1097 = vpop.f32.mrb[0].mxu0
      %1098 = vmatprep.mubr.bf16.mxu0 0
      %1099 = vmatmul.mubr.bf16.gmra.mrb[0].mxu0 %v1047
      %v1100 = vpop.f32.mrb[0].mxu0
      %v1101 = vadd.f32 %v1012, %v1100
      %v1102 = vpop.f32.mrb[0].mxu0
      %v1103 = vpop.f32.mrb[0].mxu0
      %v1104 = vadd.f32 %v1015, %v1103
      %v1105 = vpop.f32.mrb[0].mxu0
      %1106 = vmatprep.mubr.bf16.mxu0 0
      %1107 = vmatmul.mubr.bf16.gmra.mrb[0].mxu0 %v1050
      %v1108 = vpop.f32.mrb[0].mxu0
      %v1109 = vadd.f32 %v1020, %v1108
      %v1110 = vpop.f32.mrb[0].mxu0
      %v1111 = vpop.f32.mrb[0].mxu0
      %v1112 = vadd.f32 %v1023, %v1111
      %v1113 = vpop.f32.mrb[0].mxu0
      %1114 = vmatprep.mubr.bf16.mxu0 0
      %1115 = vmatmul.mubr.bf16.gmra.mrb[0].mxu0 %v1053
      %v1116 = vpop.f32.mrb[0].mxu0
      %v1117 = vadd.f32 %v1028, %v1116
      %v1118 = vpop.f32.mrb[0].mxu0
      %v1119 = vpop.f32.mrb[0].mxu0
      %v1120 = vadd.f32 %v1031, %v1119
      %v1121 = vpop.f32.mrb[0].mxu0
      %1122 = vdwg.mxu0
      %vm1123 = vcmask 1042432
      %vm1124 = vcmask 1046532
      %vm1125 = vmor %vm1123, %vm1124
      %v1126 = vrot.slane %v801, 5
      %v1127 = vrot.slane %v1126, 4
      %v1128 = vrot.slane %v802, 5
      %v1129 = vsel %vm1125, %v1127, %v1128
      %v1130 = vrot.slane %v803, 5
      %v1131 = vrot.slane %v1130, 4
      %v1132 = vrot.slane %v804, 5
      %v1133 = vsel %vm1125, %v1131, %v1132
      %v1134 = vrot.slane %v805, 5
      %v1135 = vrot.slane %v1134, 4
      %v1136 = vrot.slane %v806, 5
      %v1137 = vsel %vm1125, %v1135, %v1136
      %v1138 = vrot.slane %v807, 5
      %v1139 = vrot.slane %v1138, 4
      %v1140 = vrot.slane %v808, 5
      %v1141 = vsel %vm1125, %v1139, %v1140
      %v1142 = vrot.slane %v809, 5
      %v1143 = vrot.slane %v1142, 4
      %v1144 = vrot.slane %v810, 5
      %v1145 = vsel %vm1125, %v1143, %v1144
      %v1146 = vrot.slane %v811, 5
      %v1147 = vrot.slane %v1146, 4
      %v1148 = vrot.slane %v812, 5
      %v1149 = vsel %vm1125, %v1147, %v1148
      %v1150 = vrot.slane %v813, 5
      %v1151 = vrot.slane %v1150, 4
      %v1152 = vrot.slane %v814, 5
      %v1153 = vsel %vm1125, %v1151, %v1152
      %v1154 = vrot.slane %v815, 5
      %v1155 = vrot.slane %v1154, 4
      %v1156 = vrot.slane %v816, 5
      %v1157 = vsel %vm1125, %v1155, %v1156
      %s1158 = scalar_lea.vmem %s3, 16
      %v1159 = vld [vmem:[%s1158] sm:$0xf]
      %v1160 = vld [vmem:[%s1158 + $0x4] sm:$0x3]
      %v1161 = vunpack.c.l.b16 %v1129
      %v1162 = vunpack.c.l.b16 %v1133
      %v1163 = vunpack.c.l.b16 %v1137
      %v1164 = vunpack.c.l.b16 %v1141
      %v1165 = vunpack.c.l.b16 %v1145
      %v1166 = vunpack.c.l.b16 %v1149
      %v1167 = vunpack.c.l.b16 %v1153
      %v1168 = vunpack.c.l.b16 %v1157
      %v1169 = vpack.c.b16 %v1162, %v1161
      %v1170 = vpack.c.b16 %v1164, %v1163
      %v1171 = vpack.c.b16 %v1166, %v1165
      %v1172 = vpack.c.b16 %v1168, %v1167
      %v1175 = vunpack.c.l.b16 %v1159
      %v1176 = vunpack.c.l.b16 %v1160
      %v1177 = vpack.c.b16 %v1176, %v1175
      %v1179 = vsel %vm952, %v1169, 0
      %v1182 = vsel %vm952, %v1170, 0
      %v1185 = vsel %vm952, %v1171, 0
      %v1188 = vsel %vm952, %v1172, 0
      %v1191 = vsel %vm965, %v1177, 0
      %1193 = vmatprep.subr.bf16.mxu0 0
      %1194 = vmatpush1.bf16.msra.mxu0 %v1191
      %1195 = vmatprep.subr.bf16.mxu0 0
      %1196 = vmatpush1.bf16.msra.mxu0 0
      %1197 = vmatprep.subr.bf16.mxu0 0
      %1198 = vmatpush1.bf16.msra.mxu0 0
      %1199 = vmatprep.subr.bf16.mxu0 0
      %1200 = vmatpush1.bf16.msra.mxu0 0
      %1201 = vmatprep.subr.bf16.mxu0 0
      %1202 = vmatpush1.bf16.msra.mxu0 0
      %1203 = vmatprep.subr.bf16.mxu0 0
      %1204 = vmatpush1.bf16.msra.mxu0 0
      %1205 = vmatprep.subr.bf16.mxu0 0
      %1206 = vmatpush1.bf16.msra.mxu0 0
      %1207 = vmatprep.subr.bf16.mxu0 0
      %1208 = vmatpush1.bf16.msra.mxu0 0
      %1209 = vmatprep.subr.bf16.mxu0 0
      %1210 = vmatpush1.bf16.msra.mxu0 0
      %1211 = vmatprep.subr.bf16.mxu0 0
      %1212 = vmatpush1.bf16.msra.mxu0 0
      %1213 = vmatprep.subr.bf16.mxu0 0
      %1214 = vmatpush1.bf16.msra.mxu0 0
      %1215 = vmatprep.subr.bf16.mxu0 0
      %1216 = vmatpush1.bf16.msra.mxu0 0
      %1217 = vmatprep.subr.bf16.mxu0 0
      %1218 = vmatpush1.bf16.msra.mxu0 0
      %1219 = vmatprep.subr.bf16.mxu0 0
      %1220 = vmatpush1.bf16.msra.mxu0 0
      %1221 = vmatprep.subr.bf16.mxu0 0
      %1222 = vmatpush1.bf16.msra.mxu0 0
      %1223 = vmatprep.subr.bf16.mxu0 0
      %1224 = vmatpush1.bf16.msra.mxu0 0
      %1225 = vmatprep.mubr.bf16.mxu0 0
      %1226 = vmatmul.mubr.bf16.gmra.mrb[0].mxu0 %v1179
      %v1227 = vpop.f32.mrb[0].mxu0
      %v1228 = vadd.f32 0.0, %v1227
      %v1229 = vpop.f32.mrb[0].mxu0
      %v1230 = vpop.f32.mrb[0].mxu0
      %v1231 = vadd.f32 0.0, %v1230
      %v1232 = vpop.f32.mrb[0].mxu0
      %1233 = vmatprep.mubr.bf16.mxu0 0
      %1234 = vmatmul.mubr.bf16.gmra.mrb[0].mxu0 %v1182
      %v1235 = vpop.f32.mrb[0].mxu0
      %v1236 = vadd.f32 0.0, %v1235
      %v1237 = vpop.f32.mrb[0].mxu0
      %v1238 = vpop.f32.mrb[0].mxu0
      %v1239 = vadd.f32 0.0, %v1238
      %v1240 = vpop.f32.mrb[0].mxu0
      %1241 = vmatprep.mubr.bf16.mxu0 0
      %1242 = vmatmul.mubr.bf16.gmra.mrb[0].mxu0 %v1185
      %v1243 = vpop.f32.mrb[0].mxu0
      %v1244 = vadd.f32 0.0, %v1243
      %v1245 = vpop.f32.mrb[0].mxu0
      %v1246 = vpop.f32.mrb[0].mxu0
      %v1247 = vadd.f32 0.0, %v1246
      %v1248 = vpop.f32.mrb[0].mxu0
      %1249 = vmatprep.mubr.bf16.mxu0 0
      %1250 = vmatmul.mubr.bf16.gmra.mrb[0].mxu0 %v1188
      %v1251 = vpop.f32.mrb[0].mxu0
      %v1252 = vadd.f32 0.0, %v1251
      %v1253 = vpop.f32.mrb[0].mxu0
      %v1254 = vpop.f32.mrb[0].mxu0
      %v1255 = vadd.f32 0.0, %v1254
      %v1256 = vpop.f32.mrb[0].mxu0
      %1257 = vdwg.mxu0
      %v1258 = vadd.f32 %v1093, %v1228
      %v1259 = vadd.f32 %v1096, %v1231
      %v1260 = vadd.f32 %v1101, %v1236
      %v1261 = vadd.f32 %v1104, %v1239
      %v1262 = vadd.f32 %v1109, %v1244
      %v1263 = vadd.f32 %v1112, %v1247
      %v1264 = vadd.f32 %v1117, %v1252
      %v1265 = vadd.f32 %v1120, %v1255
      %s1266 = scalar_lea.vmem %s3, 24
      %v1267 = vld [vmem:[%s1266] sm:$0xf]
      %v1268 = vld [vmem:[%s1266 + $0x4] sm:$0x3]
      %v1270 = vunpack.c.l.b16 %v772
      %v1271 = vpack.c.b16 %v789, %v787
      %v1272 = vpack.c.b16 %v793, %v791
      %v1273 = vpack.c.b16 %v797, %v795
      %v1274 = vpack.c.b16 %v1270, %v799
      %v1277 = vunpack.c.l.b16 %v1267
      %v1278 = vunpack.c.l.b16 %v1268
      %v1279 = vpack.c.b16 %v1278, %v1277
      %v1281 = vsel %vm952, %v1271, 0
      %v1284 = vsel %vm952, %v1272, 0
      %v1287 = vsel %vm952, %v1273, 0
      %v1290 = vsel %vm952, %v1274, 0
      %v1293 = vsel %vm965, %v1279, 0
      %1295 = vmatprep.subr.bf16.mxu0 0
      %1296 = vmatpush1.bf16.msra.mxu0 %v1293
      %1297 = vmatprep.subr.bf16.mxu0 0
      %1298 = vmatpush1.bf16.msra.mxu0 0
      %1299 = vmatprep.subr.bf16.mxu0 0
      %1300 = vmatpush1.bf16.msra.mxu0 0
      %1301 = vmatprep.subr.bf16.mxu0 0
      %1302 = vmatpush1.bf16.msra.mxu0 0
      %1303 = vmatprep.subr.bf16.mxu0 0
      %1304 = vmatpush1.bf16.msra.mxu0 0
      %1305 = vmatprep.subr.bf16.mxu0 0
      %1306 = vmatpush1.bf16.msra.mxu0 0
      %1307 = vmatprep.subr.bf16.mxu0 0
      %1308 = vmatpush1.bf16.msra.mxu0 0
      %1309 = vmatprep.subr.bf16.mxu0 0
      %1310 = vmatpush1.bf16.msra.mxu0 0
      %1311 = vmatprep.subr.bf16.mxu0 0
      %1312 = vmatpush1.bf16.msra.mxu0 0
      %1313 = vmatprep.subr.bf16.mxu0 0
      %1314 = vmatpush1.bf16.msra.mxu0 0
      %1315 = vmatprep.subr.bf16.mxu0 0
      %1316 = vmatpush1.bf16.msra.mxu0 0
      %1317 = vmatprep.subr.bf16.mxu0 0
      %1318 = vmatpush1.bf16.msra.mxu0 0
      %1319 = vmatprep.subr.bf16.mxu0 0
      %1320 = vmatpush1.bf16.msra.mxu0 0
      %1321 = vmatprep.subr.bf16.mxu0 0
      %1322 = vmatpush1.bf16.msra.mxu0 0
      %1323 = vmatprep.subr.bf16.mxu0 0
      %1324 = vmatpush1.bf16.msra.mxu0 0
      %1325 = vmatprep.subr.bf16.mxu0 0
      %1326 = vmatpush1.bf16.msra.mxu0 0
      %1327 = vmatprep.mubr.bf16.mxu0 0
      %1328 = vmatmul.mubr.bf16.gmra.mrb[0].mxu0 %v1281
      %v1329 = vpop.f32.mrb[0].mxu0
      %v1330 = vadd.f32 0.0, %v1329
      %v1331 = vpop.f32.mrb[0].mxu0
      %v1332 = vpop.f32.mrb[0].mxu0
      %v1333 = vadd.f32 0.0, %v1332
      %v1334 = vpop.f32.mrb[0].mxu0
      %1335 = vmatprep.mubr.bf16.mxu0 0
      %1336 = vmatmul.mubr.bf16.gmra.mrb[0].mxu0 %v1284
      %v1337 = vpop.f32.mrb[0].mxu0
      %v1338 = vadd.f32 0.0, %v1337
      %v1339 = vpop.f32.mrb[0].mxu0
      %v1340 = vpop.f32.mrb[0].mxu0
      %v1341 = vadd.f32 0.0, %v1340
      %v1342 = vpop.f32.mrb[0].mxu0
      %1343 = vmatprep.mubr.bf16.mxu0 0
      %1344 = vmatmul.mubr.bf16.gmra.mrb[0].mxu0 %v1287
      %v1345 = vpop.f32.mrb[0].mxu0
      %v1346 = vadd.f32 0.0, %v1345
      %v1347 = vpop.f32.mrb[0].mxu0
      %v1348 = vpop.f32.mrb[0].mxu0
      %v1349 = vadd.f32 0.0, %v1348
      %v1350 = vpop.f32.mrb[0].mxu0
      %1351 = vmatprep.mubr.bf16.mxu0 0
      %1352 = vmatmul.mubr.bf16.gmra.mrb[0].mxu0 %v1290
      %v1353 = vpop.f32.mrb[0].mxu0
      %v1354 = vadd.f32 0.0, %v1353
      %v1355 = vpop.f32.mrb[0].mxu0
      %v1356 = vpop.f32.mrb[0].mxu0
      %v1357 = vadd.f32 0.0, %v1356
      %v1358 = vpop.f32.mrb[0].mxu0
      %1359 = vdwg.mxu0
      %v1360 = vadd.f32 %v1258, %v1330
      %v1361 = vadd.f32 %v1259, %v1333
      %v1362 = vadd.f32 %v1260, %v1338
      %v1363 = vadd.f32 %v1261, %v1341
      %v1364 = vadd.f32 %v1262, %v1346
      %v1365 = vadd.f32 %v1263, %v1349
      %v1366 = vadd.f32 %v1264, %v1354
      %v1367 = vadd.f32 %v1265, %v1357
      %v1368 = vunpack.c.h.b16 %v772
      %v1369 = vpack.c.b16 %v1270, %v1270
      %v1370 = vpack.c.b16 %v1368, %v1368
      %v1372 = vshrl.u32 %v1369, 16
      %v1374 = vrot.slane %v1372, 4
      %v1375 = vshll.u32 %v1369, 16
      %v1377 = vrot.slane %v1375, 5
      %v1378 = vor.u32 %v1374, %v1377
      %v1379 = vrot.slane %v1378, 4
      %v1381 = vshll.u32 %v1370, 16
      %v1383 = vrot.slane %v1381, 5
      %v1384 = vsel %vm819, %v1379, %v1383
      %s1385 = scalar_lea.vmem %s3, 32
      %v1386 = vld [vmem:[%s1385] sm:$0xf]
      %v1387 = vld [vmem:[%s1385 + $0x4] sm:$0x3]
      %v1388 = vunpack.c.l.b16 %v1384
      %v1389 = vpack.c.b16 %v937, %v936
      %v1390 = vpack.c.b16 %v939, %v938
      %v1391 = vpack.c.b16 %v941, %v940
      %v1392 = vpack.c.b16 %v1388, %v942
      %v1395 = vunpack.c.l.b16 %v1386
      %v1396 = vunpack.c.l.b16 %v1387
      %v1397 = vpack.c.b16 %v1396, %v1395
      %v1399 = vsel %vm952, %v1389, 0
      %v1402 = vsel %vm952, %v1390, 0
      %v1405 = vsel %vm952, %v1391, 0
      %v1408 = vsel %vm952, %v1392, 0
      %v1411 = vsel %vm965, %v1397, 0
      %1413 = vmatprep.subr.bf16.mxu0 0
      %1414 = vmatpush1.bf16.msra.mxu0 %v1411
      %1415 = vmatprep.subr.bf16.mxu0 0
      %1416 = vmatpush1.bf16.msra.mxu0 0
      %1417 = vmatprep.subr.bf16.mxu0 0
      %1418 = vmatpush1.bf16.msra.mxu0 0
      %1419 = vmatprep.subr.bf16.mxu0 0
      %1420 = vmatpush1.bf16.msra.mxu0 0
      %1421 = vmatprep.subr.bf16.mxu0 0
      %1422 = vmatpush1.bf16.msra.mxu0 0
      %1423 = vmatprep.subr.bf16.mxu0 0
      %1424 = vmatpush1.bf16.msra.mxu0 0
      %1425 = vmatprep.subr.bf16.mxu0 0
      %1426 = vmatpush1.bf16.msra.mxu0 0
      %1427 = vmatprep.subr.bf16.mxu0 0
      %1428 = vmatpush1.bf16.msra.mxu0 0
      %1429 = vmatprep.subr.bf16.mxu0 0
      %1430 = vmatpush1.bf16.msra.mxu0 0
      %1431 = vmatprep.subr.bf16.mxu0 0
      %1432 = vmatpush1.bf16.msra.mxu0 0
      %1433 = vmatprep.subr.bf16.mxu0 0
      %1434 = vmatpush1.bf16.msra.mxu0 0
      %1435 = vmatprep.subr.bf16.mxu0 0
      %1436 = vmatpush1.bf16.msra.mxu0 0
      %1437 = vmatprep.subr.bf16.mxu0 0
      %1438 = vmatpush1.bf16.msra.mxu0 0
      %1439 = vmatprep.subr.bf16.mxu0 0
      %1440 = vmatpush1.bf16.msra.mxu0 0
      %1441 = vmatprep.subr.bf16.mxu0 0
      %1442 = vmatpush1.bf16.msra.mxu0 0
      %1443 = vmatprep.subr.bf16.mxu0 0
      %1444 = vmatpush1.bf16.msra.mxu0 0
      %1445 = vmatprep.mubr.bf16.mxu0 0
      %1446 = vmatmul.mubr.bf16.gmra.mrb[0].mxu0 %v1399
      %v1447 = vpop.f32.mrb[0].mxu0
      %v1448 = vadd.f32 0.0, %v1447
      %v1449 = vpop.f32.mrb[0].mxu0
      %v1450 = vpop.f32.mrb[0].mxu0
      %v1451 = vadd.f32 0.0, %v1450
      %v1452 = vpop.f32.mrb[0].mxu0
      %1453 = vmatprep.mubr.bf16.mxu0 0
      %1454 = vmatmul.mubr.bf16.gmra.mrb[0].mxu0 %v1402
      %v1455 = vpop.f32.mrb[0].mxu0
      %v1456 = vadd.f32 0.0, %v1455
      %v1457 = vpop.f32.mrb[0].mxu0
      %v1458 = vpop.f32.mrb[0].mxu0
      %v1459 = vadd.f32 0.0, %v1458
      %v1460 = vpop.f32.mrb[0].mxu0
      %1461 = vmatprep.mubr.bf16.mxu0 0
      %1462 = vmatmul.mubr.bf16.gmra.mrb[0].mxu0 %v1405
      %v1463 = vpop.f32.mrb[0].mxu0
      %v1464 = vadd.f32 0.0, %v1463
      %v1465 = vpop.f32.mrb[0].mxu0
      %v1466 = vpop.f32.mrb[0].mxu0
      %v1467 = vadd.f32 0.0, %v1466
      %v1468 = vpop.f32.mrb[0].mxu0
      %1469 = vmatprep.mubr.bf16.mxu0 0
      %1470 = vmatmul.mubr.bf16.gmra.mrb[0].mxu0 %v1408
      %v1471 = vpop.f32.mrb[0].mxu0
      %v1472 = vadd.f32 0.0, %v1471
      %v1473 = vpop.f32.mrb[0].mxu0
      %v1474 = vpop.f32.mrb[0].mxu0
      %v1475 = vadd.f32 0.0, %v1474
      %v1476 = vpop.f32.mrb[0].mxu0
      %1477 = vdwg.mxu0
      %v1478 = vadd.f32 %v1360, %v1448
      %v1479 = vadd.f32 %v1361, %v1451
      %v1480 = vadd.f32 %v1362, %v1456
      %v1481 = vadd.f32 %v1363, %v1459
      %v1482 = vadd.f32 %v1364, %v1464
      %v1483 = vadd.f32 %v1365, %v1467
      %v1484 = vadd.f32 %v1366, %v1472
      %v1485 = vadd.f32 %v1367, %v1475
      %v1486 = vrot.slane %v1369, 5
      %v1487 = vrot.slane %v1486, 4
      %v1488 = vrot.slane %v1370, 5
      %v1489 = vsel %vm1125, %v1487, %v1488
      %s1490 = scalar_lea.vmem %s3, 40
      %v1491 = vld [vmem:[%s1490] sm:$0xf]
      %v1492 = vld [vmem:[%s1490 + $0x4] sm:$0x3]
      %v1493 = vunpack.c.l.b16 %v1489
      %v1494 = vpack.c.b16 %v1163, %v1162
      %v1495 = vpack.c.b16 %v1165, %v1164
      %v1496 = vpack.c.b16 %v1167, %v1166
      %v1497 = vpack.c.b16 %v1493, %v1168
      %v1500 = vunpack.c.l.b16 %v1491
      %v1501 = vunpack.c.l.b16 %v1492
      %v1502 = vpack.c.b16 %v1501, %v1500
      %v1504 = vsel %vm952, %v1494, 0
      %v1507 = vsel %vm952, %v1495, 0
      %v1510 = vsel %vm952, %v1496, 0
      %v1513 = vsel %vm952, %v1497, 0
      %v1516 = vsel %vm965, %v1502, 0
      %1518 = vmatprep.subr.bf16.mxu0 0
      %1519 = vmatpush1.bf16.msra.mxu0 %v1516
      %1520 = vmatprep.subr.bf16.mxu0 0
      %1521 = vmatpush1.bf16.msra.mxu0 0
      %1522 = vmatprep.subr.bf16.mxu0 0
      %1523 = vmatpush1.bf16.msra.mxu0 0
      %1524 = vmatprep.subr.bf16.mxu0 0
      %1525 = vmatpush1.bf16.msra.mxu0 0
      %1526 = vmatprep.subr.bf16.mxu0 0
      %1527 = vmatpush1.bf16.msra.mxu0 0
      %1528 = vmatprep.subr.bf16.mxu0 0
      %1529 = vmatpush1.bf16.msra.mxu0 0
      %1530 = vmatprep.subr.bf16.mxu0 0
      %1531 = vmatpush1.bf16.msra.mxu0 0
      %1532 = vmatprep.subr.bf16.mxu0 0
      %1533 = vmatpush1.bf16.msra.mxu0 0
      %1534 = vmatprep.subr.bf16.mxu0 0
      %1535 = vmatpush1.bf16.msra.mxu0 0
      %1536 = vmatprep.subr.bf16.mxu0 0
      %1537 = vmatpush1.bf16.msra.mxu0 0
      %1538 = vmatprep.subr.bf16.mxu0 0
      %1539 = vmatpush1.bf16.msra.mxu0 0
      %1540 = vmatprep.subr.bf16.mxu0 0
      %1541 = vmatpush1.bf16.msra.mxu0 0
      %1542 = vmatprep.subr.bf16.mxu0 0
      %1543 = vmatpush1.bf16.msra.mxu0 0
      %1544 = vmatprep.subr.bf16.mxu0 0
      %1545 = vmatpush1.bf16.msra.mxu0 0
      %1546 = vmatprep.subr.bf16.mxu0 0
      %1547 = vmatpush1.bf16.msra.mxu0 0
      %1548 = vmatprep.subr.bf16.mxu0 0
      %1549 = vmatpush1.bf16.msra.mxu0 0
      %1550 = vmatprep.mubr.bf16.mxu0 0
      %1551 = vmatmul.mubr.bf16.gmra.mrb[0].mxu0 %v1504
      %v1552 = vpop.f32.mrb[0].mxu0
      %v1553 = vadd.f32 0.0, %v1552
      %v1554 = vpop.f32.mrb[0].mxu0
      %v1555 = vpop.f32.mrb[0].mxu0
      %v1556 = vadd.f32 0.0, %v1555
      %v1557 = vpop.f32.mrb[0].mxu0
      %1558 = vmatprep.mubr.bf16.mxu0 0
      %1559 = vmatmul.mubr.bf16.gmra.mrb[0].mxu0 %v1507
      %v1560 = vpop.f32.mrb[0].mxu0
      %v1561 = vadd.f32 0.0, %v1560
      %v1562 = vpop.f32.mrb[0].mxu0
      %v1563 = vpop.f32.mrb[0].mxu0
      %v1564 = vadd.f32 0.0, %v1563
      %v1565 = vpop.f32.mrb[0].mxu0
      %1566 = vmatprep.mubr.bf16.mxu0 0
      %1567 = vmatmul.mubr.bf16.gmra.mrb[0].mxu0 %v1510
      %v1568 = vpop.f32.mrb[0].mxu0
      %v1569 = vadd.f32 0.0, %v1568
      %v1570 = vpop.f32.mrb[0].mxu0
      %v1571 = vpop.f32.mrb[0].mxu0
      %v1572 = vadd.f32 0.0, %v1571
      %v1573 = vpop.f32.mrb[0].mxu0
      %1574 = vmatprep.mubr.bf16.mxu0 0
      %1575 = vmatmul.mubr.bf16.gmra.mrb[0].mxu0 %v1513
      %v1576 = vpop.f32.mrb[0].mxu0
      %v1577 = vadd.f32 0.0, %v1576
      %v1578 = vpop.f32.mrb[0].mxu0
      %v1579 = vpop.f32.mrb[0].mxu0
      %v1580 = vadd.f32 0.0, %v1579
      %v1581 = vpop.f32.mrb[0].mxu0
      %1582 = vdwg.mxu0
      %v1583 = vadd.f32 %v1478, %v1553
      %v1584 = vadd.f32 %v1479, %v1556
      %v1585 = vadd.f32 %v1480, %v1561
      %v1586 = vadd.f32 %v1481, %v1564
      %v1587 = vadd.f32 %v1482, %v1569
      %v1588 = vadd.f32 %v1483, %v1572
      %v1589 = vadd.f32 %v1484, %v1577
      %v1590 = vadd.f32 %v1485, %v1580
      %s1591 = scalar_lea.vmem %s3, 48
      %v1592 = vld [vmem:[%s1591] sm:$0xf]
      %v1593 = vld [vmem:[%s1591 + $0x4] sm:$0x3]
      %v1595 = vunpack.c.l.b16 %v774
      %v1596 = vpack.c.b16 %v1595, %v1270
      %v1599 = vunpack.c.l.b16 %v1592
      %v1600 = vunpack.c.l.b16 %v1593
      %v1601 = vpack.c.b16 %v1600, %v1599
      %v1603 = vsel %vm952, %v1596, 0
      %v1606 = vsel %vm965, %v1601, 0
      %1608 = vmatprep.subr.bf16.mxu0 0
      %1609 = vmatpush1.bf16.msra.mxu0 %v1606
      %1610 = vmatprep.subr.bf16.mxu0 0
      %1611 = vmatpush1.bf16.msra.mxu0 0
      %1612 = vmatprep.subr.bf16.mxu0 0
      %1613 = vmatpush1.bf16.msra.mxu0 0
      %1614 = vmatprep.subr.bf16.mxu0 0
      %1615 = vmatpush1.bf16.msra.mxu0 0
      %1616 = vmatprep.subr.bf16.mxu0 0
      %1617 = vmatpush1.bf16.msra.mxu0 0
      %1618 = vmatprep.subr.bf16.mxu0 0
      %1619 = vmatpush1.bf16.msra.mxu0 0
      %1620 = vmatprep.subr.bf16.mxu0 0
      %1621 = vmatpush1.bf16.msra.mxu0 0
      %1622 = vmatprep.subr.bf16.mxu0 0
      %1623 = vmatpush1.bf16.msra.mxu0 0
      %1624 = vmatprep.subr.bf16.mxu0 0
      %1625 = vmatpush1.bf16.msra.mxu0 0
      %1626 = vmatprep.subr.bf16.mxu0 0
      %1627 = vmatpush1.bf16.msra.mxu0 0
      %1628 = vmatprep.subr.bf16.mxu0 0
      %1629 = vmatpush1.bf16.msra.mxu0 0
      %1630 = vmatprep.subr.bf16.mxu0 0
      %1631 = vmatpush1.bf16.msra.mxu0 0
      %1632 = vmatprep.subr.bf16.mxu0 0
      %1633 = vmatpush1.bf16.msra.mxu0 0
      %1634 = vmatprep.subr.bf16.mxu0 0
      %1635 = vmatpush1.bf16.msra.mxu0 0
      %1636 = vmatprep.subr.bf16.mxu0 0
      %1637 = vmatpush1.bf16.msra.mxu0 0
      %1638 = vmatprep.subr.bf16.mxu0 0
      %1639 = vmatpush1.bf16.msra.mxu0 0
      %1640 = vmatprep.mubr.bf16.mxu0 0
      %1641 = vmatmul.mubr.bf16.gmra.mrb[0].mxu0 %v1047
      %v1642 = vpop.f32.mrb[0].mxu0
      %v1643 = vadd.f32 0.0, %v1642
      %v1644 = vpop.f32.mrb[0].mxu0
      %v1645 = vpop.f32.mrb[0].mxu0
      %v1646 = vadd.f32 0.0, %v1645
      %v1647 = vpop.f32.mrb[0].mxu0
      %1648 = vmatprep.mubr.bf16.mxu0 0
      %1649 = vmatmul.mubr.bf16.gmra.mrb[0].mxu0 %v1050
      %v1650 = vpop.f32.mrb[0].mxu0
      %v1651 = vadd.f32 0.0, %v1650
      %v1652 = vpop.f32.mrb[0].mxu0
      %v1653 = vpop.f32.mrb[0].mxu0
      %v1654 = vadd.f32 0.0, %v1653
      %v1655 = vpop.f32.mrb[0].mxu0
      %1656 = vmatprep.mubr.bf16.mxu0 0
      %1657 = vmatmul.mubr.bf16.gmra.mrb[0].mxu0 %v1053
      %v1658 = vpop.f32.mrb[0].mxu0
      %v1659 = vadd.f32 0.0, %v1658
      %v1660 = vpop.f32.mrb[0].mxu0
      %v1661 = vpop.f32.mrb[0].mxu0
      %v1662 = vadd.f32 0.0, %v1661
      %v1663 = vpop.f32.mrb[0].mxu0
      %1664 = vmatprep.mubr.bf16.mxu0 0
      %1665 = vmatmul.mubr.bf16.gmra.mrb[0].mxu0 %v1603
      %v1666 = vpop.f32.mrb[0].mxu0
      %v1667 = vadd.f32 0.0, %v1666
      %v1668 = vpop.f32.mrb[0].mxu0
      %v1669 = vpop.f32.mrb[0].mxu0
      %v1670 = vadd.f32 0.0, %v1669
      %v1671 = vpop.f32.mrb[0].mxu0
      %1672 = vdwg.mxu0
      %v1673 = vadd.f32 %v1583, %v1643
      %v1674 = vadd.f32 %v1584, %v1646
      %v1675 = vadd.f32 %v1585, %v1651
      %v1676 = vadd.f32 %v1586, %v1654
      %v1677 = vadd.f32 %v1587, %v1659
      %v1678 = vadd.f32 %v1588, %v1662
      %v1679 = vadd.f32 %v1589, %v1667
      %v1680 = vadd.f32 %v1590, %v1670
      %v1681 = vunpack.c.h.b16 %v774
      %v1682 = vpack.c.b16 %v1595, %v1595
      %v1683 = vpack.c.b16 %v1681, %v1681
      %v1685 = vshrl.u32 %v1682, 16
      %v1687 = vrot.slane %v1685, 4
      %v1688 = vshll.u32 %v1682, 16
      %v1690 = vrot.slane %v1688, 5
      %v1691 = vor.u32 %v1687, %v1690
      %v1692 = vrot.slane %v1691, 4
      %v1694 = vshll.u32 %v1683, 16
      %v1696 = vrot.slane %v1694, 5
      %v1697 = vsel %vm819, %v1692, %v1696
      %s1698 = scalar_lea.vmem %s3, 56
      %v1699 = vld [vmem:[%s1698] sm:$0xf]
      %v1700 = vld [vmem:[%s1698 + $0x4] sm:$0x3]
      %v1701 = vunpack.c.l.b16 %v1697
      %v1702 = vpack.c.b16 %v1701, %v1388
      %v1705 = vunpack.c.l.b16 %v1699
      %v1706 = vunpack.c.l.b16 %v1700
      %v1707 = vpack.c.b16 %v1706, %v1705
      %v1709 = vsel %vm952, %v1702, 0
      %v1712 = vsel %vm965, %v1707, 0
      %1714 = vmatprep.subr.bf16.mxu0 0
      %1715 = vmatpush1.bf16.msra.mxu0 %v1712
      %1716 = vmatprep.subr.bf16.mxu0 0
      %1717 = vmatpush1.bf16.msra.mxu0 0
      %1718 = vmatprep.subr.bf16.mxu0 0
      %1719 = vmatpush1.bf16.msra.mxu0 0
      %1720 = vmatprep.subr.bf16.mxu0 0
      %1721 = vmatpush1.bf16.msra.mxu0 0
      %1722 = vmatprep.subr.bf16.mxu0 0
      %1723 = vmatpush1.bf16.msra.mxu0 0
      %1724 = vmatprep.subr.bf16.mxu0 0
      %1725 = vmatpush1.bf16.msra.mxu0 0
      %1726 = vmatprep.subr.bf16.mxu0 0
      %1727 = vmatpush1.bf16.msra.mxu0 0
      %1728 = vmatprep.subr.bf16.mxu0 0
      %1729 = vmatpush1.bf16.msra.mxu0 0
      %1730 = vmatprep.subr.bf16.mxu0 0
      %1731 = vmatpush1.bf16.msra.mxu0 0
      %1732 = vmatprep.subr.bf16.mxu0 0
      %1733 = vmatpush1.bf16.msra.mxu0 0
      %1734 = vmatprep.subr.bf16.mxu0 0
      %1735 = vmatpush1.bf16.msra.mxu0 0
      %1736 = vmatprep.subr.bf16.mxu0 0
      %1737 = vmatpush1.bf16.msra.mxu0 0
      %1738 = vmatprep.subr.bf16.mxu0 0
      %1739 = vmatpush1.bf16.msra.mxu0 0
      %1740 = vmatprep.subr.bf16.mxu0 0
      %1741 = vmatpush1.bf16.msra.mxu0 0
      %1742 = vmatprep.subr.bf16.mxu0 0
      %1743 = vmatpush1.bf16.msra.mxu0 0
      %1744 = vmatprep.subr.bf16.mxu0 0
      %1745 = vmatpush1.bf16.msra.mxu0 0
      %1746 = vmatprep.mubr.bf16.mxu0 0
      %1747 = vmatmul.mubr.bf16.gmra.mrb[0].mxu0 %v957
      %v1748 = vpop.f32.mrb[0].mxu0
      %v1749 = vadd.f32 0.0, %v1748
      %v1750 = vpop.f32.mrb[0].mxu0
      %v1751 = vpop.f32.mrb[0].mxu0
      %v1752 = vadd.f32 0.0, %v1751
      %v1753 = vpop.f32.mrb[0].mxu0
      %1754 = vmatprep.mubr.bf16.mxu0 0
      %1755 = vmatmul.mubr.bf16.gmra.mrb[0].mxu0 %v960
      %v1756 = vpop.f32.mrb[0].mxu0
      %v1757 = vadd.f32 0.0, %v1756
      %v1758 = vpop.f32.mrb[0].mxu0
      %v1759 = vpop.f32.mrb[0].mxu0
      %v1760 = vadd.f32 0.0, %v1759
      %v1761 = vpop.f32.mrb[0].mxu0
      %1762 = vmatprep.mubr.bf16.mxu0 0
      %1763 = vmatmul.mubr.bf16.gmra.mrb[0].mxu0 %v963
      %v1764 = vpop.f32.mrb[0].mxu0
      %v1765 = vadd.f32 0.0, %v1764
      %v1766 = vpop.f32.mrb[0].mxu0
      %v1767 = vpop.f32.mrb[0].mxu0
      %v1768 = vadd.f32 0.0, %v1767
      %v1769 = vpop.f32.mrb[0].mxu0
      %1770 = vmatprep.mubr.bf16.mxu0 0
      %1771 = vmatmul.mubr.bf16.gmra.mrb[0].mxu0 %v1709
      %v1772 = vpop.f32.mrb[0].mxu0
      %v1773 = vadd.f32 0.0, %v1772
      %v1774 = vpop.f32.mrb[0].mxu0
      %v1775 = vpop.f32.mrb[0].mxu0
      %v1776 = vadd.f32 0.0, %v1775
      %v1777 = vpop.f32.mrb[0].mxu0
      %1778 = vdwg.mxu0
      %v1779 = vadd.f32 %v1673, %v1749
      %v1780 = vadd.f32 %v1674, %v1752
      %v1781 = vadd.f32 %v1675, %v1757
      %v1782 = vadd.f32 %v1676, %v1760
      %v1783 = vadd.f32 %v1677, %v1765
      %v1784 = vadd.f32 %v1678, %v1768
      %v1785 = vadd.f32 %v1679, %v1773
      %v1786 = vadd.f32 %v1680, %v1776
      %v1787 = vrot.slane %v1682, 5
      %v1788 = vrot.slane %v1787, 4
      %v1789 = vrot.slane %v1683, 5
      %v1790 = vsel %vm1125, %v1788, %v1789
      %s1791 = scalar_lea.vmem %s3, 64
      %v1792 = vld [vmem:[%s1791] sm:$0xf]
      %v1793 = vld [vmem:[%s1791 + $0x4] sm:$0x3]
      %v1794 = vunpack.c.l.b16 %v1790
      %v1795 = vpack.c.b16 %v1794, %v1493
      %v1798 = vunpack.c.l.b16 %v1792
      %v1799 = vunpack.c.l.b16 %v1793
      %v1800 = vpack.c.b16 %v1799, %v1798
      %v1802 = vsel %vm952, %v1795, 0
      %v1805 = vsel %vm965, %v1800, 0
      %1807 = vmatprep.subr.bf16.mxu0 0
      %1808 = vmatpush1.bf16.msra.mxu0 %v1805
      %1809 = vmatprep.subr.bf16.mxu0 0
      %1810 = vmatpush1.bf16.msra.mxu0 0
      %1811 = vmatprep.subr.bf16.mxu0 0
      %1812 = vmatpush1.bf16.msra.mxu0 0
      %1813 = vmatprep.subr.bf16.mxu0 0
      %1814 = vmatpush1.bf16.msra.mxu0 0
      %1815 = vmatprep.subr.bf16.mxu0 0
      %1816 = vmatpush1.bf16.msra.mxu0 0
      %1817 = vmatprep.subr.bf16.mxu0 0
      %1818 = vmatpush1.bf16.msra.mxu0 0
      %1819 = vmatprep.subr.bf16.mxu0 0
      %1820 = vmatpush1.bf16.msra.mxu0 0
      %1821 = vmatprep.subr.bf16.mxu0 0
      %1822 = vmatpush1.bf16.msra.mxu0 0
      %1823 = vmatprep.subr.bf16.mxu0 0
      %1824 = vmatpush1.bf16.msra.mxu0 0
      %1825 = vmatprep.subr.bf16.mxu0 0
      %1826 = vmatpush1.bf16.msra.mxu0 0
      %1827 = vmatprep.subr.bf16.mxu0 0
      %1828 = vmatpush1.bf16.msra.mxu0 0
      %1829 = vmatprep.subr.bf16.mxu0 0
      %1830 = vmatpush1.bf16.msra.mxu0 0
      %1831 = vmatprep.subr.bf16.mxu0 0
      %1832 = vmatpush1.bf16.msra.mxu0 0
      %1833 = vmatprep.subr.bf16.mxu0 0
      %1834 = vmatpush1.bf16.msra.mxu0 0
      %1835 = vmatprep.subr.bf16.mxu0 0
      %1836 = vmatpush1.bf16.msra.mxu0 0
      %1837 = vmatprep.subr.bf16.mxu0 0
      %1838 = vmatpush1.bf16.msra.mxu0 0
      %1839 = vmatprep.mubr.bf16.mxu0 0
      %1840 = vmatmul.mubr.bf16.gmra.mrb[0].mxu0 %v1182
      %v1841 = vpop.f32.mrb[0].mxu0
      %v1842 = vadd.f32 0.0, %v1841
      %v1843 = vpop.f32.mrb[0].mxu0
      %v1844 = vpop.f32.mrb[0].mxu0
      %v1845 = vadd.f32 0.0, %v1844
      %v1846 = vpop.f32.mrb[0].mxu0
      %1847 = vmatprep.mubr.bf16.mxu0 0
      %1848 = vmatmul.mubr.bf16.gmra.mrb[0].mxu0 %v1185
      %v1849 = vpop.f32.mrb[0].mxu0
      %v1850 = vadd.f32 0.0, %v1849
      %v1851 = vpop.f32.mrb[0].mxu0
      %v1852 = vpop.f32.mrb[0].mxu0
      %v1853 = vadd.f32 0.0, %v1852
      %v1854 = vpop.f32.mrb[0].mxu0
      %1855 = vmatprep.mubr.bf16.mxu0 0
      %1856 = vmatmul.mubr.bf16.gmra.mrb[0].mxu0 %v1188
      %v1857 = vpop.f32.mrb[0].mxu0
      %v1858 = vadd.f32 0.0, %v1857
      %v1859 = vpop.f32.mrb[0].mxu0
      %v1860 = vpop.f32.mrb[0].mxu0
      %v1861 = vadd.f32 0.0, %v1860
      %v1862 = vpop.f32.mrb[0].mxu0
      %1863 = vmatprep.mubr.bf16.mxu0 0
      %1864 = vmatmul.mubr.bf16.gmra.mrb[0].mxu0 %v1802
      %v1865 = vpop.f32.mrb[0].mxu0
      %v1866 = vadd.f32 0.0, %v1865
      %v1867 = vpop.f32.mrb[0].mxu0
      %v1868 = vpop.f32.mrb[0].mxu0
      %v1869 = vadd.f32 0.0, %v1868
      %v1870 = vpop.f32.mrb[0].mxu0
      %1871 = vdwg.mxu0
      %v1872 = vadd.f32 %v1779, %v1842
      %v1873 = vadd.f32 %v1780, %v1845
      %v1874 = vadd.f32 %v1781, %v1850
      %v1875 = vadd.f32 %v1782, %v1853
      %v1876 = vadd.f32 %v1783, %v1858
      %v1877 = vadd.f32 %v1784, %v1861
      %v1878 = vadd.f32 %v1785, %v1866
      %v1879 = vadd.f32 %v1786, %v1869
      %v1880 = vld [vmem:[%s4] sm:$0x1]
      %v1882 = vlaneseq
      %v1883 = vshrl.u32 %v1882, 7
      %v1884 = vsub.s32 0, %v1883
      %v1885 = vrot.slane %v1880, %v1884
      %v1887 = vmul.f32 %v1872, %v1885
      %v1888 = vmul.f32 %v1873, %v1885
      %v1889 = vmul.f32 %v1874, %v1885
      %v1890 = vmul.f32 %v1875, %v1885
      %v1891 = vmul.f32 %v1876, %v1885
      %v1892 = vmul.f32 %v1877, %v1885
      %v1893 = vmul.f32 %v1878, %v1885
      %v1894 = vmul.f32 %v1879, %v1885
      %v1895 = vld [vmem:[%s5] sm:$0x1]
      %v1897 = vlaneseq
      %v1898 = vshrl.u32 %v1897, 7
      %v1899 = vsub.s32 0, %v1898
      %v1900 = vrot.slane %v1895, %v1899
      %v1902 = vadd.f32 %v1887, %v1900
      %v1903 = vadd.f32 %v1888, %v1900
      %v1904 = vadd.f32 %v1889, %v1900
      %v1905 = vadd.f32 %v1890, %v1900
      %v1906 = vadd.f32 %v1891, %v1900
      %v1907 = vadd.f32 %v1892, %v1900
      %v1908 = vadd.f32 %v1893, %v1900
      %v1909 = vadd.f32 %v1894, %v1900
      %v1910 = vmax.f32 %v1902, 0.0
      %v1911 = vmax.f32 %v1903, 0.0
      %v1912 = vmax.f32 %v1904, 0.0
      %v1913 = vmax.f32 %v1905, 0.0
      %v1914 = vmax.f32 %v1906, 0.0
      %v1915 = vmax.f32 %v1907, 0.0
      %v1916 = vmax.f32 %v1908, 0.0
      %v1917 = vmax.f32 %v1909, 0.0
      %v1918 = vpack.c.bf16 %v1910, %v1910
      %v1919 = vpack.c.bf16 %v1911, %v1911
      %v1920 = vpack.c.bf16 %v1912, %v1912
      %v1921 = vpack.c.bf16 %v1913, %v1913
      %v1922 = vpack.c.bf16 %v1914, %v1914
      %v1923 = vpack.c.bf16 %v1915, %v1915
      %v1924 = vpack.c.bf16 %v1916, %v1916
      %v1925 = vpack.c.bf16 %v1917, %v1917
      %vm1926 = vcmask 27648
      %1927 = vst.msk [vmem:[%s397] sm:$0xf] %vm1926, %v1918
      %1928 = vst.msk [vmem:[%s397 + $0x4] sm:$0xf] %vm1926, %v1919
      %1929 = vst.msk [vmem:[%s397 + $0x8] sm:$0xf] %vm1926, %v1920
      %1930 = vst.msk [vmem:[%s397 + $0xc] sm:$0xf] %vm1926, %v1921
      %1931 = vst.msk [vmem:[%s397 + $0x10] sm:$0xf] %vm1926, %v1922
      %1932 = vst.msk [vmem:[%s397 + $0x14] sm:$0xf] %vm1926, %v1923
      %1933 = vst.msk [vmem:[%s397 + $0x18] sm:$0xf] %vm1926, %v1924
      %1934 = vst.msk [vmem:[%s397 + $0x1c] sm:$0xf] %vm1926, %v1925
      %p1935 = scmp.lt.s32.totalorder %s21, 1
      %s1936 = scalar_select %p1935, %s21, 1
      %p1937 = scmp.lt.s32.totalorder %s22, 3
      %s1938 = scalar_select %p1937, %s22, 3
      %s1939 = smul.addr %s1938, 8
      %s1940 = smul.addr %s1936, 32
      %s1941 = sadd.s32 %s1939, %s1940
      %s1942 = smul.addr %s1941, 4
      %s1943 = scalar_lea.vmem %s6, %s1942
      // Predicated region
      $region45: #{bottleneck_3d_forward.4} parent=43 // pred_check
        %p1944 = pneg %p208
      $region46: #{bottleneck_3d_forward.4} parent=43 // pred_check_branch
        %1946 = sbr.rel (%p1944) target = $region48
      $region47: #{bottleneck_3d_forward.4} parent=43 // pred_region
        _
      $region48: #{bottleneck_3d_forward.4} parent=43 // pred_fallthru
        _
    $region44: #{bottleneck_3d_forward.4} parent=5 // pred_fallthru
      _
    %p1947 = scmp.le.s32.totalorder 2, %s12
    // Predicated region
    $region49: #{bottleneck_3d_forward.4} parent=5 // pred_check
      %p1948 = pneg %p1947
    $region50: #{bottleneck_3d_forward.4} parent=5 // pred_check_branch
      %1950 = sbr.rel (%p1948) target = $region52
    $region51: #{bottleneck_3d_forward.4} parent=5 // pred_region
      %s1951 = ssub.s32 %s12, 2
      // Predicated region
      $region53: #{bottleneck_3d_forward.4} parent=51 // pred_check
        %p1952 = pneg %p214
      $region54: #{bottleneck_3d_forward.4} parent=51 // pred_check_branch
        %1954 = sbr.rel (%p1952) target = $region56
      $region55: #{bottleneck_3d_forward.4} parent=51 // pred_region
        %p1955 = scmp.lt.s32.totalorder %s23, 1
        %s1956 = scalar_select %p1955, %s23, 1
        %p1957 = scmp.lt.s32.totalorder %s24, 3
        %s1958 = scalar_select %p1957, %s24, 3
        %s1959 = smul.addr %s1958, 8
        %s1960 = smul.addr %s1956, 32
        %s1961 = sadd.s32 %s1959, %s1960
        %s1962 = smul.addr %s1961, 4
        %s1963 = scalar_lea.vmem %s6, %s1962
      $region56: #{bottleneck_3d_forward.4} parent=51 // pred_fallthru
        _
    $region52: #{bottleneck_3d_forward.4} parent=5 // pred_fallthru
      _
  $region6: #{bottleneck_3d_forward.4} parent=0 // loop_footer
    %s16 = sadd.s32 1, %s12
  $region7: #{bottleneck_3d_forward.4} parent=0 // loop_footer_branch
    %11 = sbr.rel target = $region3
  $region8: #{bottleneck_3d_forward.4} parent=0 // loop_exit
    _

</llo_original>
